<compile_context>
chip_gen: v7x
topology: tpu7x:2x2x1
jax: 0.10.0
libtpu: 0.0.40
codegen_flags: <defaults>
</compile_context>

<pallas_src>
import functools
import math

import jax
import jax.numpy as jnp
from jax import lax
from jax.experimental import pallas as pl
from jax.experimental.pallas import tpu as pltpu

# ----------------------------- architecture -------------------------------
H0, W0, C0 = 32, 32, 3                 # input (NCHW in, converted to (H, W*C))
KS = 5                                 # conv kernel size
C1, C2 = 6, 16                         # conv output channels
H1, W1 = H0 - KS + 1, W0 - KS + 1      # 28, 28   conv1 out
P1 = H1 // 2                           # 14       pool1 out
H2, W2 = P1 - KS + 1, P1 - KS + 1      # 10, 10   conv2 out
P2 = H2 // 2                           # 5        pool2 out
F1, F2, F3 = 120, 84, 10
NPAD = 128                             # lane-dense padded width of final out
TB_MAX = 64                            # images per grid step (multiple of 8)


# ------------------------------ fused kernel ------------------------------
def _lenet_kernel(x_ref, t1_ref, b1_ref, l1_ref, r1_ref,
                  t2_ref, b2_ref, l2_ref, r2_ref,
                  wf1_ref, bf1_ref, wf2_ref, bf2_ref, wf3_ref, bf3_ref,
                  o_ref, feat_ref):
    bf16 = jnp.bfloat16
    dot = functools.partial(jnp.dot, preferred_element_type=jnp.float32)
    tb = x_ref.shape[0]

    def conv_pool_one(i):
        # Per-image conv/pool pipeline; everything stays in vregs/VMEM.
        x = x_ref[i]                                              # (32, 96) bf16
        # conv1: in-kernel "im2col" over height taps -> one big-K matmul.
        xc = jnp.concatenate([x[j:j + H1, :] for j in range(KS)], axis=1)   # (28, 480)
        y1 = jnp.maximum(dot(xc, t1_ref[...]) + b1_ref[...], 0.0)           # (28, 168) f32
        y1 = y1.astype(bf16)
        # pool1: row-parity select + max, then lane (width) select + max.
        rm1 = jnp.maximum(dot(l1_ref[0], y1), dot(l1_ref[1], y1)).astype(bf16)  # (14, 168)
        p1 = jnp.maximum(dot(rm1, r1_ref[0]), dot(rm1, r1_ref[1]))          # (14, 84) f32
        p1 = p1.astype(bf16)
        # conv2 (same merged-K trick).
        pc = jnp.concatenate([p1[j:j + H2, :] for j in range(KS)], axis=1)  # (10, 420)
        y2 = jnp.maximum(dot(pc, t2_ref[...]) + b2_ref[...], 0.0)           # (10, 160) f32
        y2 = y2.astype(bf16)
        # pool2.
        rm2 = jnp.maximum(dot(l2_ref[0], y2), dot(l2_ref[1], y2)).astype(bf16)  # (5, 160)
        p2 = jnp.maximum(dot(rm2, r2_ref[0]), dot(rm2, r2_ref[1]))          # (5, 80) f32
        feat_ref[i] = p2.astype(bf16)

    if tb <= 8:
        for i in range(tb):            # small static unroll
            conv_pool_one(i)
    else:
        def body(i, carry):
            conv_pool_one(i)
            return carry
        lax.fori_loop(0, tb, body, 0)

    # fc stage, batched over the TB images in this block.
    # fc1: PyTorch NCHW-flatten permutation is folded into wf1 per pooled row.
    h = dot(feat_ref[:, 0, :], wf1_ref[0])
    for r in range(1, P2):
        h += dot(feat_ref[:, r, :], wf1_ref[r])                             # (tb, 120) f32
    h = jnp.maximum(h + bf1_ref[...], 0.0).astype(bf16)
    h = jnp.maximum(dot(h, wf2_ref[...]) + bf2_ref[...], 0.0).astype(bf16)  # (tb, 84)
    o_ref[...] = dot(h, wf3_ref[...]) + bf3_ref[...]                        # (tb, 128) f32


# ------------------------- one-time weight packing -------------------------
def _toeplitz(w, w_in, w_out):
    """(O, Cin, kh, kw) conv weight -> (kh, w_in*Cin, w_out*O) block-Toeplitz."""
    o, cin, kh, kw = w.shape
    j = jnp.arange(kw)[:, None, None]
    a = jnp.arange(w_in)[None, :, None]
    q = jnp.arange(w_out)[None, None, :]
    m = (a == q + j).astype(jnp.float32)                     # (kw, w_in, w_out)
    t = jnp.einsum("jaq,ocij->iacqo", m, w.astype(jnp.float32))
    return t.reshape(kh, w_in * cin, w_out * o)


def _pool_mats(n, c):
    """Parity-selection matrices for a 2x2 / stride-2 max pool on (n, n*c)."""
    half = n // 2
    rows = jnp.arange(n)
    outs = jnp.arange(half)
    left = jnp.stack([(rows[None, :] == 2 * outs[:, None] + d) for d in (0, 1)]
                     ).astype(jnp.float32)                   # (2, n/2, n)
    sel = jnp.stack([(rows[:, None] == 2 * outs[None, :] + d) for d in (0, 1)]
                    ).astype(jnp.float32)                    # (2, n, n/2)
    eye = jnp.eye(c, dtype=jnp.float32)
    right = jnp.stack([jnp.kron(sel[d], eye) for d in (0, 1)])  # (2, n*c, n*c/2)
    return left, right


def pack_params(params):
    """Pre-pack weights once: merged-K Toeplitz slabs, pool selectors, fc
    transposes, flatten permutation, output padding. Matmul operands in bf16
    (0/1 selection matrices are exact in bf16), biases kept f32."""
    f32, bf16 = jnp.float32, jnp.bfloat16
    # conv Toeplitz slabs, 5 height taps concatenated along K.
    t1 = _toeplitz(params["conv1_w"], W0, W1).reshape(KS * W0 * C0, W1 * C1)   # (480, 168)
    t2 = _toeplitz(params["conv2_w"], P1, W2).reshape(KS * P1 * C1, W2 * C2)   # (420, 160)
    t1, t2 = t1.astype(bf16), t2.astype(bf16)
    b1 = jnp.tile(params["conv1_b"].astype(f32), W1).reshape(1, W1 * C1)
    b2 = jnp.tile(params["conv2_b"].astype(f32), W2).reshape(1, W2 * C2)
    l1, r1 = _pool_mats(W1, C1)                              # (2,14,28), (2,168,84)
    l2, r2 = _pool_mats(W2, C2)                              # (2,5,10),  (2,160,80)
    l1, r1, l2, r2 = (m.astype(bf16) for m in (l1, r1, l2, r2))
    # fc1: fold PyTorch's NCHW flatten index (co*25 + h*5 + w) into the weight.
    wf1 = params["fc1_w"].astype(f32).reshape(F1, C2, P2, P2)
    wf1 = wf1.transpose(2, 3, 1, 0).reshape(P2, P2 * C2, F1).astype(bf16)      # (5, 80, 120)
    bf1 = params["fc1_b"].astype(f32).reshape(1, F1)
    wf2 = params["fc2_w"].astype(f32).T.astype(bf16)                           # (120, 84)
    bf2 = params["fc2_b"].astype(f32).reshape(1, F2)
    wf3 = jnp.zeros((F2, NPAD), bf16).at[:, :F3].set(params["fc3_w"].astype(bf16).T)
    bf3 = jnp.zeros((1, NPAD), f32).at[0, :F3].set(params["fc3_b"].astype(f32))
    return (t1, b1, l1, r1, t2, b2, l2, r2, wf1, bf1, wf2, bf2, wf3, bf3)


# -------------------------------- forward ---------------------------------
def net_forward(x_nchw, packed, *, tb_max=TB_MAX):
    B = x_nchw.shape[0]
    tb = tb_max if B >= tb_max else B          # tb_max is a multiple of 8
    b_pad = ((B + tb - 1) // tb) * tb
    # One-time input layout change, done directly in bf16: NCHW -> (B, H, W*Cin).
    x2 = jnp.transpose(x_nchw, (0, 2, 3, 1)).reshape(B, H0, W0 * C0)
    x2 = x2.astype(jnp.bfloat16)
    if b_pad != B:
        x2 = jnp.pad(x2, ((0, b_pad - B), (0, 0), (0, 0)))

    def const_spec(arr):                       # grid-invariant weight blocks
        return pl.BlockSpec(arr.shape, lambda b, _nd=arr.ndim: (0,) * _nd)

    in_specs = [pl.BlockSpec((tb, H0, W0 * C0), lambda b: (b, 0, 0))]
    in_specs += [const_spec(w) for w in packed]

    weight_bytes = sum(int(w.size) * w.dtype.itemsize for w in packed)
    cost = pl.CostEstimate(
        flops=7_400_000 * b_pad,               # ~7.4 MFLOP per image (Toeplitz + pools + fc)
        transcendentals=0,
        bytes_accessed=int(x2.size) * 2 + weight_bytes + b_pad * NPAD * 4,
    )

    out = pl.pallas_call(
        _lenet_kernel,
        out_shape=jax.ShapeDtypeStruct((b_pad, NPAD), jnp.float32),
        grid=(b_pad // tb,),
        in_specs=in_specs,
        out_specs=pl.BlockSpec((tb, NPAD), lambda b: (b, 0)),
        scratch_shapes=[pltpu.VMEM((tb, P2, P2 * C2), jnp.bfloat16)],
        compiler_params=pltpu.CompilerParams(
            dimension_semantics=("parallel",),   # v7x: batch blocks shard across TCs
            vmem_limit_bytes=32 * 1024 * 1024,
        ),
        cost_estimate=cost,
    )(x2, *packed)
    return out[:B, :F3]


# ----------------------- pure-JAX reference (checking) ---------------------
def net_forward_reference(x, params):
    dn = ("NCHW", "OIHW", "NCHW")
    hp = lax.Precision.HIGHEST
    y = lax.conv_general_dilated(x, params["conv1_w"], (1, 1), "VALID",
                                 dimension_numbers=dn, precision=hp)
    y = jax.nn.relu(y + params["conv1_b"][None, :, None, None])
    y = lax.reduce_window(y, -jnp.inf, lax.max, (1, 1, 2, 2), (1, 1, 2, 2), "VALID")
    y = lax.conv_general_dilated(y, params["conv2_w"], (1, 1), "VALID",
                                 dimension_numbers=dn, precision=hp)
    y = jax.nn.relu(y + params["conv2_b"][None, :, None, None])
    y = lax.reduce_window(y, -jnp.inf, lax.max, (1, 1, 2, 2), (1, 1, 2, 2), "VALID")
    y = y.reshape(y.shape[0], -1)
    y = jax.nn.relu(jnp.dot(y, params["fc1_w"].T, precision=hp) + params["fc1_b"])
    y = jax.nn.relu(jnp.dot(y, params["fc2_w"].T, precision=hp) + params["fc2_b"])
    return jnp.dot(y, params["fc3_w"].T, precision=hp) + params["fc3_b"]


# ---------------- deterministic PyTorch-like parameter init ----------------
def init_params(key):
    def uni(k, shape, fan_in):
        bound = 1.0 / math.sqrt(fan_in)
        return jax.random.uniform(k, shape, jnp.float32, -bound, bound)

    ks = jax.random.split(key, 10)
    return {
        "conv1_w": uni(ks[0], (6, 3, 5, 5), 3 * 5 * 5),
        "conv1_b": uni(ks[1], (6,), 3 * 5 * 5),
        "conv2_w": uni(ks[2], (16, 6, 5, 5), 6 * 5 * 5),
        "conv2_b": uni(ks[3], (16,), 6 * 5 * 5),
        "fc1_w": uni(ks[4], (120, 400), 400),
        "fc1_b": uni(ks[5], (120,), 400),
        "fc2_w": uni(ks[6], (84, 120), 120),
        "fc2_b": uni(ks[7], (84,), 120),
        "fc3_w": uni(ks[8], (10, 84), 84),
        "fc3_b": uni(ks[9], (10,), 84),
    }


if __name__ == "__main__":
    key = jax.random.PRNGKey(0)
    pkey, xkey = jax.random.split(key)
    params = init_params(pkey)
    packed = pack_params(params)                 # one-time weight packing
    # Forward implies 32x32 inputs (32 -conv5-> 28 -pool-> 14 -conv5-> 10 -pool-> 5).
    x = jax.random.normal(xkey, (2, 3, 32, 32), jnp.float32)

    out = jax.jit(net_forward)(x, packed)
    out = jax.block_until_ready(out)
    assert out.shape == (2, 10)
    assert bool(jnp.all(jnp.isfinite(out)))

    ref = net_forward_reference(x, params)
    assert bool(jnp.allclose(out, ref, rtol=2e-2, atol=2e-2)), (
        "mismatch vs reference: max abs err "
        f"{float(jnp.max(jnp.abs(out - ref)))}")
    print("KERNEL_OK")
</pallas_src>

<mosaic_0001>
module attributes {stable_mosaic.version = 11 : i64} {
  func.func @_lenet_kernel(%arg0: i32, %arg1: memref<2x32x96xbf16, #tpu.memory_space<vmem>>, %arg2: memref<480x168xbf16, #tpu.memory_space<vmem>>, %arg3: memref<1x168xf32, #tpu.memory_space<vmem>>, %arg4: memref<2x14x28xbf16, #tpu.memory_space<vmem>>, %arg5: memref<2x168x84xbf16, #tpu.memory_space<vmem>>, %arg6: memref<420x160xbf16, #tpu.memory_space<vmem>>, %arg7: memref<1x160xf32, #tpu.memory_space<vmem>>, %arg8: memref<2x5x10xbf16, #tpu.memory_space<vmem>>, %arg9: memref<2x160x80xbf16, #tpu.memory_space<vmem>>, %arg10: memref<5x80x120xbf16, #tpu.memory_space<vmem>>, %arg11: memref<1x120xf32, #tpu.memory_space<vmem>>, %arg12: memref<120x84xbf16, #tpu.memory_space<vmem>>, %arg13: memref<1x84xf32, #tpu.memory_space<vmem>>, %arg14: memref<84x128xbf16, #tpu.memory_space<vmem>>, %arg15: memref<1x128xf32, #tpu.memory_space<vmem>>, %arg16: memref<2x128xf32, #tpu.memory_space<vmem>>, %arg17: memref<2x5x80xbf16, #tpu.memory_space<vmem>>) attributes {dimension_semantics = [#tpu.dimension_semantics<parallel>], iteration_bounds = array<i64: 1>, scalar_prefetch = 0 : i64, scratch_operands = 1 : i64, tpu.core_type = #tpu.core_type<tc>, window_params = [{transform_indices = @transform_0, window_bounds = array<i64: 2, 32, 96>}, {pipeline_mode = #tpu.pipeline_mode<synchronous>, transform_indices = @transform_1, window_bounds = array<i64: 480, 168>}, {pipeline_mode = #tpu.pipeline_mode<synchronous>, transform_indices = @transform_2, window_bounds = array<i64: 1, 168>}, {pipeline_mode = #tpu.pipeline_mode<synchronous>, transform_indices = @transform_3, window_bounds = array<i64: 2, 14, 28>}, {pipeline_mode = #tpu.pipeline_mode<synchronous>, transform_indices = @transform_4, window_bounds = array<i64: 2, 168, 84>}, {pipeline_mode = #tpu.pipeline_mode<synchronous>, transform_indices = @transform_5, window_bounds = array<i64: 420, 160>}, {pipeline_mode = #tpu.pipeline_mode<synchronous>, transform_indices = @transform_6, window_bounds = array<i64: 1, 160>}, {pipeline_mode = #tpu.pipeline_mode<synchronous>, transform_indices = @transform_7, window_bounds = array<i64: 2, 5, 10>}, {pipeline_mode = #tpu.pipeline_mode<synchronous>, transform_indices = @transform_8, window_bounds = array<i64: 2, 160, 80>}, {pipeline_mode = #tpu.pipeline_mode<synchronous>, transform_indices = @transform_9, window_bounds = array<i64: 5, 80, 120>}, {pipeline_mode = #tpu.pipeline_mode<synchronous>, transform_indices = @transform_10, window_bounds = array<i64: 1, 120>}, {pipeline_mode = #tpu.pipeline_mode<synchronous>, transform_indices = @transform_11, window_bounds = array<i64: 120, 84>}, {pipeline_mode = #tpu.pipeline_mode<synchronous>, transform_indices = @transform_12, window_bounds = array<i64: 1, 84>}, {pipeline_mode = #tpu.pipeline_mode<synchronous>, transform_indices = @transform_13, window_bounds = array<i64: 84, 128>}, {pipeline_mode = #tpu.pipeline_mode<synchronous>, transform_indices = @transform_14, window_bounds = array<i64: 1, 128>}, {transform_indices = @transform_15, window_bounds = array<i64: 2, 128>}]} {
    %c0 = arith.constant 0 : index
    %c0_0 = arith.constant 0 : index
    %c0_1 = arith.constant 0 : index
    %0 = vector.load %arg1[%c0, %c0_0, %c0_1] : memref<2x32x96xbf16, #tpu.memory_space<vmem>>, vector<1x32x96xbf16>
    %1 = vector.shape_cast %0 : vector<1x32x96xbf16> to vector<32x96xbf16>
    %2 = vector.extract_strided_slice %1 {offsets = [0, 0], sizes = [28, 96], strides = [1, 1]} : vector<32x96xbf16> to vector<28x96xbf16>
    %3 = vector.extract_strided_slice %1 {offsets = [1, 0], sizes = [28, 96], strides = [1, 1]} : vector<32x96xbf16> to vector<28x96xbf16>
    %4 = vector.extract_strided_slice %1 {offsets = [2, 0], sizes = [28, 96], strides = [1, 1]} : vector<32x96xbf16> to vector<28x96xbf16>
    %5 = vector.extract_strided_slice %1 {offsets = [3, 0], sizes = [28, 96], strides = [1, 1]} : vector<32x96xbf16> to vector<28x96xbf16>
    %6 = vector.extract_strided_slice %1 {offsets = [4, 0], sizes = [28, 96], strides = [1, 1]} : vector<32x96xbf16> to vector<28x96xbf16>
    %7 = tpu.concatenate %2, %3, %4, %5, %6 in 1 : vector<28x96xbf16>, vector<28x96xbf16>, vector<28x96xbf16>, vector<28x96xbf16>, vector<28x96xbf16> -> vector<28x480xbf16>
    %c0_2 = arith.constant 0 : index
    %c0_3 = arith.constant 0 : index
    %8 = vector.load %arg2[%c0_2, %c0_3] : memref<480x168xbf16, #tpu.memory_space<vmem>>, vector<480x168xbf16>
    %cst = arith.constant dense<0.000000e+00> : vector<28x168xf32>
    %9 = tpu.matmul %7, %8, %cst {dimension_numbers = #tpu.dot_dimension_numbers<[1], [0], [0], [1], [0, 0, 1, 1], [], []>} : vector<28x480xbf16>, vector<480x168xbf16>, vector<28x168xf32> -> vector<28x168xf32>
    %c0_4 = arith.constant 0 : index
    %c0_5 = arith.constant 0 : index
    %10 = vector.load %arg3[%c0_4, %c0_5] : memref<1x168xf32, #tpu.memory_space<vmem>>, vector<1x168xf32>
    %11 = vector.broadcast %10 : vector<1x168xf32> to vector<28x168xf32>
    %12 = arith.addf %9, %11 : vector<28x168xf32>
    %cst_6 = arith.constant 0.000000e+00 : f32
    %13 = vector.broadcast %cst_6 : f32 to vector<28x168xf32>
    %14 = arith.maximumf %12, %13 : vector<28x168xf32>
    %15 = arith.truncf %14 : vector<28x168xf32> to vector<28x168xbf16>
    %c0_7 = arith.constant 0 : index
    %c0_8 = arith.constant 0 : index
    %c0_9 = arith.constant 0 : index
    %16 = vector.load %arg4[%c0_7, %c0_8, %c0_9] : memref<2x14x28xbf16, #tpu.memory_space<vmem>>, vector<1x14x28xbf16>
    %17 = vector.shape_cast %16 : vector<1x14x28xbf16> to vector<14x28xbf16>
    %cst_10 = arith.constant dense<0.000000e+00> : vector<14x168xf32>
    %18 = tpu.matmul %17, %15, %cst_10 {dimension_numbers = #tpu.dot_dimension_numbers<[1], [0], [0], [1], [0, 0, 1, 1], [], []>} : vector<14x28xbf16>, vector<28x168xbf16>, vector<14x168xf32> -> vector<14x168xf32>
    %c1 = arith.constant 1 : index
    %c0_11 = arith.constant 0 : index
    %c0_12 = arith.constant 0 : index
    %19 = vector.load %arg4[%c1, %c0_11, %c0_12] : memref<2x14x28xbf16, #tpu.memory_space<vmem>>, vector<1x14x28xbf16>
    %20 = vector.shape_cast %19 : vector<1x14x28xbf16> to vector<14x28xbf16>
    %cst_13 = arith.constant dense<0.000000e+00> : vector<14x168xf32>
    %21 = tpu.matmul %20, %15, %cst_13 {dimension_numbers = #tpu.dot_dimension_numbers<[1], [0], [0], [1], [0, 0, 1, 1], [], []>} : vector<14x28xbf16>, vector<28x168xbf16>, vector<14x168xf32> -> vector<14x168xf32>
    %22 = arith.maximumf %18, %21 : vector<14x168xf32>
    %23 = arith.truncf %22 : vector<14x168xf32> to vector<14x168xbf16>
    %c0_14 = arith.constant 0 : index
    %c0_15 = arith.constant 0 : index
    %c0_16 = arith.constant 0 : index
    %24 = vector.load %arg5[%c0_14, %c0_15, %c0_16] : memref<2x168x84xbf16, #tpu.memory_space<vmem>>, vector<1x168x84xbf16>
    %25 = vector.shape_cast %24 : vector<1x168x84xbf16> to vector<168x84xbf16>
    %cst_17 = arith.constant dense<0.000000e+00> : vector<14x84xf32>
    %26 = tpu.matmul %23, %25, %cst_17 {dimension_numbers = #tpu.dot_dimension_numbers<[1], [0], [0], [1], [0, 0, 1, 1], [], []>} : vector<14x168xbf16>, vector<168x84xbf16>, vector<14x84xf32> -> vector<14x84xf32>
    %c1_18 = arith.constant 1 : index
    %c0_19 = arith.constant 0 : index
    %c0_20 = arith.constant 0 : index
    %27 = vector.load %arg5[%c1_18, %c0_19, %c0_20] : memref<2x168x84xbf16, #tpu.memory_space<vmem>>, vector<1x168x84xbf16>
    %28 = vector.shape_cast %27 : vector<1x168x84xbf16> to vector<168x84xbf16>
    %cst_21 = arith.constant dense<0.000000e+00> : vector<14x84xf32>
    %29 = tpu.matmul %23, %28, %cst_21 {dimension_numbers = #tpu.dot_dimension_numbers<[1], [0], [0], [1], [0, 0, 1, 1], [], []>} : vector<14x168xbf16>, vector<168x84xbf16>, vector<14x84xf32> -> vector<14x84xf32>
    %30 = arith.maximumf %26, %29 : vector<14x84xf32>
    %31 = arith.truncf %30 : vector<14x84xf32> to vector<14x84xbf16>
    %32 = vector.extract_strided_slice %31 {offsets = [0, 0], sizes = [10, 84], strides = [1, 1]} : vector<14x84xbf16> to vector<10x84xbf16>
    %33 = vector.extract_strided_slice %31 {offsets = [1, 0], sizes = [10, 84], strides = [1, 1]} : vector<14x84xbf16> to vector<10x84xbf16>
    %34 = vector.extract_strided_slice %31 {offsets = [2, 0], sizes = [10, 84], strides = [1, 1]} : vector<14x84xbf16> to vector<10x84xbf16>
    %35 = vector.extract_strided_slice %31 {offsets = [3, 0], sizes = [10, 84], strides = [1, 1]} : vector<14x84xbf16> to vector<10x84xbf16>
    %36 = vector.extract_strided_slice %31 {offsets = [4, 0], sizes = [10, 84], strides = [1, 1]} : vector<14x84xbf16> to vector<10x84xbf16>
    %37 = tpu.concatenate %32, %33, %34, %35, %36 in 1 : vector<10x84xbf16>, vector<10x84xbf16>, vector<10x84xbf16>, vector<10x84xbf16>, vector<10x84xbf16> -> vector<10x420xbf16>
    %c0_22 = arith.constant 0 : index
    %c0_23 = arith.constant 0 : index
    %38 = vector.load %arg6[%c0_22, %c0_23] : memref<420x160xbf16, #tpu.memory_space<vmem>>, vector<420x160xbf16>
    %cst_24 = arith.constant dense<0.000000e+00> : vector<10x160xf32>
    %39 = tpu.matmul %37, %38, %cst_24 {dimension_numbers = #tpu.dot_dimension_numbers<[1], [0], [0], [1], [0, 0, 1, 1], [], []>} : vector<10x420xbf16>, vector<420x160xbf16>, vector<10x160xf32> -> vector<10x160xf32>
    %c0_25 = arith.constant 0 : index
    %c0_26 = arith.constant 0 : index
    %40 = vector.load %arg7[%c0_25, %c0_26] : memref<1x160xf32, #tpu.memory_space<vmem>>, vector<1x160xf32>
    %41 = vector.broadcast %40 : vector<1x160xf32> to vector<10x160xf32>
    %42 = arith.addf %39, %41 : vector<10x160xf32>
    %cst_27 = arith.constant 0.000000e+00 : f32
    %43 = vector.broadcast %cst_27 : f32 to vector<10x160xf32>
    %44 = arith.maximumf %42, %43 : vector<10x160xf32>
    %45 = arith.truncf %44 : vector<10x160xf32> to vector<10x160xbf16>
    %c0_28 = arith.constant 0 : index
    %c0_29 = arith.constant 0 : index
    %c0_30 = arith.constant 0 : index
    %46 = vector.load %arg8[%c0_28, %c0_29, %c0_30] : memref<2x5x10xbf16, #tpu.memory_space<vmem>>, vector<1x5x10xbf16>
    %47 = vector.shape_cast %46 : vector<1x5x10xbf16> to vector<5x10xbf16>
    %cst_31 = arith.constant dense<0.000000e+00> : vector<5x160xf32>
    %48 = tpu.matmul %47, %45, %cst_31 {dimension_numbers = #tpu.dot_dimension_numbers<[1], [0], [0], [1], [0, 0, 1, 1], [], []>} : vector<5x10xbf16>, vector<10x160xbf16>, vector<5x160xf32> -> vector<5x160xf32>
    %c1_32 = arith.constant 1 : index
    %c0_33 = arith.constant 0 : index
    %c0_34 = arith.constant 0 : index
    %49 = vector.load %arg8[%c1_32, %c0_33, %c0_34] : memref<2x5x10xbf16, #tpu.memory_space<vmem>>, vector<1x5x10xbf16>
    %50 = vector.shape_cast %49 : vector<1x5x10xbf16> to vector<5x10xbf16>
    %cst_35 = arith.constant dense<0.000000e+00> : vector<5x160xf32>
    %51 = tpu.matmul %50, %45, %cst_35 {dimension_numbers = #tpu.dot_dimension_numbers<[1], [0], [0], [1], [0, 0, 1, 1], [], []>} : vector<5x10xbf16>, vector<10x160xbf16>, vector<5x160xf32> -> vector<5x160xf32>
    %52 = arith.maximumf %48, %51 : vector<5x160xf32>
    %53 = arith.truncf %52 : vector<5x160xf32> to vector<5x160xbf16>
    %c0_36 = arith.constant 0 : index
    %c0_37 = arith.constant 0 : index
    %c0_38 = arith.constant 0 : index
    %54 = vector.load %arg9[%c0_36, %c0_37, %c0_38] : memref<2x160x80xbf16, #tpu.memory_space<vmem>>, vector<1x160x80xbf16>
    %55 = vector.shape_cast %54 : vector<1x160x80xbf16> to vector<160x80xbf16>
    %cst_39 = arith.constant dense<0.000000e+00> : vector<5x80xf32>
    %56 = tpu.matmul %53, %55, %cst_39 {dimension_numbers = #tpu.dot_dimension_numbers<[1], [0], [0], [1], [0, 0, 1, 1], [], []>} : vector<5x160xbf16>, vector<160x80xbf16>, vector<5x80xf32> -> vector<5x80xf32>
    %c1_40 = arith.constant 1 : index
    %c0_41 = arith.constant 0 : index
    %c0_42 = arith.constant 0 : index
    %57 = vector.load %arg9[%c1_40, %c0_41, %c0_42] : memref<2x160x80xbf16, #tpu.memory_space<vmem>>, vector<1x160x80xbf16>
    %58 = vector.shape_cast %57 : vector<1x160x80xbf16> to vector<160x80xbf16>
    %cst_43 = arith.constant dense<0.000000e+00> : vector<5x80xf32>
    %59 = tpu.matmul %53, %58, %cst_43 {dimension_numbers = #tpu.dot_dimension_numbers<[1], [0], [0], [1], [0, 0, 1, 1], [], []>} : vector<5x160xbf16>, vector<160x80xbf16>, vector<5x80xf32> -> vector<5x80xf32>
    %60 = arith.maximumf %56, %59 : vector<5x80xf32>
    %61 = arith.truncf %60 : vector<5x80xf32> to vector<5x80xbf16>
    %c0_44 = arith.constant 0 : index
    %c0_45 = arith.constant 0 : index
    %c0_46 = arith.constant 0 : index
    %62 = vector.load %arg17[%c0_44, %c0_45, %c0_46] : memref<2x5x80xbf16, #tpu.memory_space<vmem>>, vector<1x5x80xbf16>
    %63 = vector.shape_cast %62 : vector<1x5x80xbf16> to vector<5x80xbf16>
    %64 = vector.shape_cast %61 : vector<5x80xbf16> to vector<1x5x80xbf16>
    tpu.vector_store %arg17[%c0_44, %c0_45, %c0_46], %64 {strides = array<i32>} : memref<2x5x80xbf16, #tpu.memory_space<vmem>>, vector<1x5x80xbf16>,
    %c1_47 = arith.constant 1 : index
    %c0_48 = arith.constant 0 : index
    %c0_49 = arith.constant 0 : index
    %65 = vector.load %arg1[%c1_47, %c0_48, %c0_49] : memref<2x32x96xbf16, #tpu.memory_space<vmem>>, vector<1x32x96xbf16>
    %66 = vector.shape_cast %65 : vector<1x32x96xbf16> to vector<32x96xbf16>
    %67 = vector.extract_strided_slice %66 {offsets = [0, 0], sizes = [28, 96], strides = [1, 1]} : vector<32x96xbf16> to vector<28x96xbf16>
    %68 = vector.extract_strided_slice %66 {offsets = [1, 0], sizes = [28, 96], strides = [1, 1]} : vector<32x96xbf16> to vector<28x96xbf16>
    %69 = vector.extract_strided_slice %66 {offsets = [2, 0], sizes = [28, 96], strides = [1, 1]} : vector<32x96xbf16> to vector<28x96xbf16>
    %70 = vector.extract_strided_slice %66 {offsets = [3, 0], sizes = [28, 96], strides = [1, 1]} : vector<32x96xbf16> to vector<28x96xbf16>
    %71 = vector.extract_strided_slice %66 {offsets = [4, 0], sizes = [28, 96], strides = [1, 1]} : vector<32x96xbf16> to vector<28x96xbf16>
    %72 = tpu.concatenate %67, %68, %69, %70, %71 in 1 : vector<28x96xbf16>, vector<28x96xbf16>, vector<28x96xbf16>, vector<28x96xbf16>, vector<28x96xbf16> -> vector<28x480xbf16>
    %c0_50 = arith.constant 0 : index
    %c0_51 = arith.constant 0 : index
    %73 = vector.load %arg2[%c0_50, %c0_51] : memref<480x168xbf16, #tpu.memory_space<vmem>>, vector<480x168xbf16>
    %cst_52 = arith.constant dense<0.000000e+00> : vector<28x168xf32>
    %74 = tpu.matmul %72, %73, %cst_52 {dimension_numbers = #tpu.dot_dimension_numbers<[1], [0], [0], [1], [0, 0, 1, 1], [], []>} : vector<28x480xbf16>, vector<480x168xbf16>, vector<28x168xf32> -> vector<28x168xf32>
    %c0_53 = arith.constant 0 : index
    %c0_54 = arith.constant 0 : index
    %75 = vector.load %arg3[%c0_53, %c0_54] : memref<1x168xf32, #tpu.memory_space<vmem>>, vector<1x168xf32>
    %76 = vector.broadcast %75 : vector<1x168xf32> to vector<28x168xf32>
    %77 = arith.addf %74, %76 : vector<28x168xf32>
    %cst_55 = arith.constant 0.000000e+00 : f32
    %78 = vector.broadcast %cst_55 : f32 to vector<28x168xf32>
    %79 = arith.maximumf %77, %78 : vector<28x168xf32>
    %80 = arith.truncf %79 : vector<28x168xf32> to vector<28x168xbf16>
    %c0_56 = arith.constant 0 : index
    %c0_57 = arith.constant 0 : index
    %c0_58 = arith.constant 0 : index
    %81 = vector.load %arg4[%c0_56, %c0_57, %c0_58] : memref<2x14x28xbf16, #tpu.memory_space<vmem>>, vector<1x14x28xbf16>
    %82 = vector.shape_cast %81 : vector<1x14x28xbf16> to vector<14x28xbf16>
    %cst_59 = arith.constant dense<0.000000e+00> : vector<14x168xf32>
    %83 = tpu.matmul %82, %80, %cst_59 {dimension_numbers = #tpu.dot_dimension_numbers<[1], [0], [0], [1], [0, 0, 1, 1], [], []>} : vector<14x28xbf16>, vector<28x168xbf16>, vector<14x168xf32> -> vector<14x168xf32>
    %c1_60 = arith.constant 1 : index
    %c0_61 = arith.constant 0 : index
    %c0_62 = arith.constant 0 : index
    %84 = vector.load %arg4[%c1_60, %c0_61, %c0_62] : memref<2x14x28xbf16, #tpu.memory_space<vmem>>, vector<1x14x28xbf16>
    %85 = vector.shape_cast %84 : vector<1x14x28xbf16> to vector<14x28xbf16>
    %cst_63 = arith.constant dense<0.000000e+00> : vector<14x168xf32>
    %86 = tpu.matmul %85, %80, %cst_63 {dimension_numbers = #tpu.dot_dimension_numbers<[1], [0], [0], [1], [0, 0, 1, 1], [], []>} : vector<14x28xbf16>, vector<28x168xbf16>, vector<14x168xf32> -> vector<14x168xf32>
    %87 = arith.maximumf %83, %86 : vector<14x168xf32>
    %88 = arith.truncf %87 : vector<14x168xf32> to vector<14x168xbf16>
    %c0_64 = arith.constant 0 : index
    %c0_65 = arith.constant 0 : index
    %c0_66 = arith.constant 0 : index
    %89 = vector.load %arg5[%c0_64, %c0_65, %c0_66] : memref<2x168x84xbf16, #tpu.memory_space<vmem>>, vector<1x168x84xbf16>
    %90 = vector.shape_cast %89 : vector<1x168x84xbf16> to vector<168x84xbf16>
    %cst_67 = arith.constant dense<0.000000e+00> : vector<14x84xf32>
    %91 = tpu.matmul %88, %90, %cst_67 {dimension_numbers = #tpu.dot_dimension_numbers<[1], [0], [0], [1], [0, 0, 1, 1], [], []>} : vector<14x168xbf16>, vector<168x84xbf16>, vector<14x84xf32> -> vector<14x84xf32>
    %c1_68 = arith.constant 1 : index
    %c0_69 = arith.constant 0 : index
    %c0_70 = arith.constant 0 : index
    %92 = vector.load %arg5[%c1_68, %c0_69, %c0_70] : memref<2x168x84xbf16, #tpu.memory_space<vmem>>, vector<1x168x84xbf16>
    %93 = vector.shape_cast %92 : vector<1x168x84xbf16> to vector<168x84xbf16>
    %cst_71 = arith.constant dense<0.000000e+00> : vector<14x84xf32>
    %94 = tpu.matmul %88, %93, %cst_71 {dimension_numbers = #tpu.dot_dimension_numbers<[1], [0], [0], [1], [0, 0, 1, 1], [], []>} : vector<14x168xbf16>, vector<168x84xbf16>, vector<14x84xf32> -> vector<14x84xf32>
    %95 = arith.maximumf %91, %94 : vector<14x84xf32>
    %96 = arith.truncf %95 : vector<14x84xf32> to vector<14x84xbf16>
    %97 = vector.extract_strided_slice %96 {offsets = [0, 0], sizes = [10, 84], strides = [1, 1]} : vector<14x84xbf16> to vector<10x84xbf16>
    %98 = vector.extract_strided_slice %96 {offsets = [1, 0], sizes = [10, 84], strides = [1, 1]} : vector<14x84xbf16> to vector<10x84xbf16>
    %99 = vector.extract_strided_slice %96 {offsets = [2, 0], sizes = [10, 84], strides = [1, 1]} : vector<14x84xbf16> to vector<10x84xbf16>
    %100 = vector.extract_strided_slice %96 {offsets = [3, 0], sizes = [10, 84], strides = [1, 1]} : vector<14x84xbf16> to vector<10x84xbf16>
    %101 = vector.extract_strided_slice %96 {offsets = [4, 0], sizes = [10, 84], strides = [1, 1]} : vector<14x84xbf16> to vector<10x84xbf16>
    %102 = tpu.concatenate %97, %98, %99, %100, %101 in 1 : vector<10x84xbf16>, vector<10x84xbf16>, vector<10x84xbf16>, vector<10x84xbf16>, vector<10x84xbf16> -> vector<10x420xbf16>
    %c0_72 = arith.constant 0 : index
    %c0_73 = arith.constant 0 : index
    %103 = vector.load %arg6[%c0_72, %c0_73] : memref<420x160xbf16, #tpu.memory_space<vmem>>, vector<420x160xbf16>
    %cst_74 = arith.constant dense<0.000000e+00> : vector<10x160xf32>
    %104 = tpu.matmul %102, %103, %cst_74 {dimension_numbers = #tpu.dot_dimension_numbers<[1], [0], [0], [1], [0, 0, 1, 1], [], []>} : vector<10x420xbf16>, vector<420x160xbf16>, vector<10x160xf32> -> vector<10x160xf32>
    %c0_75 = arith.constant 0 : index
    %c0_76 = arith.constant 0 : index
    %105 = vector.load %arg7[%c0_75, %c0_76] : memref<1x160xf32, #tpu.memory_space<vmem>>, vector<1x160xf32>
    %106 = vector.broadcast %105 : vector<1x160xf32> to vector<10x160xf32>
    %107 = arith.addf %104, %106 : vector<10x160xf32>
    %cst_77 = arith.constant 0.000000e+00 : f32
    %108 = vector.broadcast %cst_77 : f32 to vector<10x160xf32>
    %109 = arith.maximumf %107, %108 : vector<10x160xf32>
    %110 = arith.truncf %109 : vector<10x160xf32> to vector<10x160xbf16>
    %c0_78 = arith.constant 0 : index
    %c0_79 = arith.constant 0 : index
    %c0_80 = arith.constant 0 : index
    %111 = vector.load %arg8[%c0_78, %c0_79, %c0_80] : memref<2x5x10xbf16, #tpu.memory_space<vmem>>, vector<1x5x10xbf16>
    %112 = vector.shape_cast %111 : vector<1x5x10xbf16> to vector<5x10xbf16>
    %cst_81 = arith.constant dense<0.000000e+00> : vector<5x160xf32>
    %113 = tpu.matmul %112, %110, %cst_81 {dimension_numbers = #tpu.dot_dimension_numbers<[1], [0], [0], [1], [0, 0, 1, 1], [], []>} : vector<5x10xbf16>, vector<10x160xbf16>, vector<5x160xf32> -> vector<5x160xf32>
    %c1_82 = arith.constant 1 : index
    %c0_83 = arith.constant 0 : index
    %c0_84 = arith.constant 0 : index
    %114 = vector.load %arg8[%c1_82, %c0_83, %c0_84] : memref<2x5x10xbf16, #tpu.memory_space<vmem>>, vector<1x5x10xbf16>
    %115 = vector.shape_cast %114 : vector<1x5x10xbf16> to vector<5x10xbf16>
    %cst_85 = arith.constant dense<0.000000e+00> : vector<5x160xf32>
    %116 = tpu.matmul %115, %110, %cst_85 {dimension_numbers = #tpu.dot_dimension_numbers<[1], [0], [0], [1], [0, 0, 1, 1], [], []>} : vector<5x10xbf16>, vector<10x160xbf16>, vector<5x160xf32> -> vector<5x160xf32>
    %117 = arith.maximumf %113, %116 : vector<5x160xf32>
    %118 = arith.truncf %117 : vector<5x160xf32> to vector<5x160xbf16>
    %c0_86 = arith.constant 0 : index
    %c0_87 = arith.constant 0 : index
    %c0_88 = arith.constant 0 : index
    %119 = vector.load %arg9[%c0_86, %c0_87, %c0_88] : memref<2x160x80xbf16, #tpu.memory_space<vmem>>, vector<1x160x80xbf16>
    %120 = vector.shape_cast %119 : vector<1x160x80xbf16> to vector<160x80xbf16>
    %cst_89 = arith.constant dense<0.000000e+00> : vector<5x80xf32>
    %121 = tpu.matmul %118, %120, %cst_89 {dimension_numbers = #tpu.dot_dimension_numbers<[1], [0], [0], [1], [0, 0, 1, 1], [], []>} : vector<5x160xbf16>, vector<160x80xbf16>, vector<5x80xf32> -> vector<5x80xf32>
    %c1_90 = arith.constant 1 : index
    %c0_91 = arith.constant 0 : index
    %c0_92 = arith.constant 0 : index
    %122 = vector.load %arg9[%c1_90, %c0_91, %c0_92] : memref<2x160x80xbf16, #tpu.memory_space<vmem>>, vector<1x160x80xbf16>
    %123 = vector.shape_cast %122 : vector<1x160x80xbf16> to vector<160x80xbf16>
    %cst_93 = arith.constant dense<0.000000e+00> : vector<5x80xf32>
    %124 = tpu.matmul %118, %123, %cst_93 {dimension_numbers = #tpu.dot_dimension_numbers<[1], [0], [0], [1], [0, 0, 1, 1], [], []>} : vector<5x160xbf16>, vector<160x80xbf16>, vector<5x80xf32> -> vector<5x80xf32>
    %125 = arith.maximumf %121, %124 : vector<5x80xf32>
    %126 = arith.truncf %125 : vector<5x80xf32> to vector<5x80xbf16>
    %c1_94 = arith.constant 1 : index
    %c0_95 = arith.constant 0 : index
    %c0_96 = arith.constant 0 : index
    %127 = vector.load %arg17[%c1_94, %c0_95, %c0_96] : memref<2x5x80xbf16, #tpu.memory_space<vmem>>, vector<1x5x80xbf16>
    %128 = vector.shape_cast %127 : vector<1x5x80xbf16> to vector<5x80xbf16>
    %129 = vector.shape_cast %126 : vector<5x80xbf16> to vector<1x5x80xbf16>
    tpu.vector_store %arg17[%c1_94, %c0_95, %c0_96], %129 {strides = array<i32>} : memref<2x5x80xbf16, #tpu.memory_space<vmem>>, vector<1x5x80xbf16>,
    %c0_97 = arith.constant 0 : index
    %c0_98 = arith.constant 0 : index
    %c0_99 = arith.constant 0 : index
    %130 = vector.load %arg17[%c0_97, %c0_98, %c0_99] : memref<2x5x80xbf16, #tpu.memory_space<vmem>>, vector<2x1x80xbf16>
    %131 = vector.shape_cast %130 : vector<2x1x80xbf16> to vector<2x80xbf16>
    %c0_100 = arith.constant 0 : index
    %c0_101 = arith.constant 0 : index
    %c0_102 = arith.constant 0 : index
    %132 = vector.load %arg10[%c0_100, %c0_101, %c0_102] : memref<5x80x120xbf16, #tpu.memory_space<vmem>>, vector<1x80x120xbf16>
    %133 = vector.shape_cast %132 : vector<1x80x120xbf16> to vector<80x120xbf16>
    %cst_103 = arith.constant dense<0.000000e+00> : vector<2x120xf32>
    %134 = tpu.matmul %131, %133, %cst_103 {dimension_numbers = #tpu.dot_dimension_numbers<[1], [0], [0], [1], [0, 0, 1, 1], [], []>} : vector<2x80xbf16>, vector<80x120xbf16>, vector<2x120xf32> -> vector<2x120xf32>
    %c0_104 = arith.constant 0 : index
    %c1_105 = arith.constant 1 : index
    %c0_106 = arith.constant 0 : index
    %135 = vector.load %arg17[%c0_104, %c1_105, %c0_106] : memref<2x5x80xbf16, #tpu.memory_space<vmem>>, vector<2x1x80xbf16>
    %136 = vector.shape_cast %135 : vector<2x1x80xbf16> to vector<2x80xbf16>
    %c1_107 = arith.constant 1 : index
    %c0_108 = arith.constant 0 : index
    %c0_109 = arith.constant 0 : index
    %137 = vector.load %arg10[%c1_107, %c0_108, %c0_109] : memref<5x80x120xbf16, #tpu.memory_space<vmem>>, vector<1x80x120xbf16>
    %138 = vector.shape_cast %137 : vector<1x80x120xbf16> to vector<80x120xbf16>
    %cst_110 = arith.constant dense<0.000000e+00> : vector<2x120xf32>
    %139 = tpu.matmul %136, %138, %cst_110 {dimension_numbers = #tpu.dot_dimension_numbers<[1], [0], [0], [1], [0, 0, 1, 1], [], []>} : vector<2x80xbf16>, vector<80x120xbf16>, vector<2x120xf32> -> vector<2x120xf32>
    %140 = arith.addf %134, %139 : vector<2x120xf32>
    %c0_111 = arith.constant 0 : index
    %c2 = arith.constant 2 : index
    %c0_112 = arith.constant 0 : index
    %141 = vector.load %arg17[%c0_111, %c2, %c0_112] : memref<2x5x80xbf16, #tpu.memory_space<vmem>>, vector<2x1x80xbf16>
    %142 = vector.shape_cast %141 : vector<2x1x80xbf16> to vector<2x80xbf16>
    %c2_113 = arith.constant 2 : index
    %c0_114 = arith.constant 0 : index
    %c0_115 = arith.constant 0 : index
    %143 = vector.load %arg10[%c2_113, %c0_114, %c0_115] : memref<5x80x120xbf16, #tpu.memory_space<vmem>>, vector<1x80x120xbf16>
    %144 = vector.shape_cast %143 : vector<1x80x120xbf16> to vector<80x120xbf16>
    %cst_116 = arith.constant dense<0.000000e+00> : vector<2x120xf32>
    %145 = tpu.matmul %142, %144, %cst_116 {dimension_numbers = #tpu.dot_dimension_numbers<[1], [0], [0], [1], [0, 0, 1, 1], [], []>} : vector<2x80xbf16>, vector<80x120xbf16>, vector<2x120xf32> -> vector<2x120xf32>
    %146 = arith.addf %140, %145 : vector<2x120xf32>
    %c0_117 = arith.constant 0 : index
    %c3 = arith.constant 3 : index
    %c0_118 = arith.constant 0 : index
    %147 = vector.load %arg17[%c0_117, %c3, %c0_118] : memref<2x5x80xbf16, #tpu.memory_space<vmem>>, vector<2x1x80xbf16>
    %148 = vector.shape_cast %147 : vector<2x1x80xbf16> to vector<2x80xbf16>
    %c3_119 = arith.constant 3 : index
    %c0_120 = arith.constant 0 : index
    %c0_121 = arith.constant 0 : index
    %149 = vector.load %arg10[%c3_119, %c0_120, %c0_121] : memref<5x80x120xbf16, #tpu.memory_space<vmem>>, vector<1x80x120xbf16>
    %150 = vector.shape_cast %149 : vector<1x80x120xbf16> to vector<80x120xbf16>
    %cst_122 = arith.constant dense<0.000000e+00> : vector<2x120xf32>
    %151 = tpu.matmul %148, %150, %cst_122 {dimension_numbers = #tpu.dot_dimension_numbers<[1], [0], [0], [1], [0, 0, 1, 1], [], []>} : vector<2x80xbf16>, vector<80x120xbf16>, vector<2x120xf32> -> vector<2x120xf32>
    %152 = arith.addf %146, %151 : vector<2x120xf32>
    %c0_123 = arith.constant 0 : index
    %c4 = arith.constant 4 : index
    %c0_124 = arith.constant 0 : index
    %153 = vector.load %arg17[%c0_123, %c4, %c0_124] : memref<2x5x80xbf16, #tpu.memory_space<vmem>>, vector<2x1x80xbf16>
    %154 = vector.shape_cast %153 : vector<2x1x80xbf16> to vector<2x80xbf16>
    %c4_125 = arith.constant 4 : index
    %c0_126 = arith.constant 0 : index
    %c0_127 = arith.constant 0 : index
    %155 = vector.load %arg10[%c4_125, %c0_126, %c0_127] : memref<5x80x120xbf16, #tpu.memory_space<vmem>>, vector<1x80x120xbf16>
    %156 = vector.shape_cast %155 : vector<1x80x120xbf16> to vector<80x120xbf16>
    %cst_128 = arith.constant dense<0.000000e+00> : vector<2x120xf32>
    %157 = tpu.matmul %154, %156, %cst_128 {dimension_numbers = #tpu.dot_dimension_numbers<[1], [0], [0], [1], [0, 0, 1, 1], [], []>} : vector<2x80xbf16>, vector<80x120xbf16>, vector<2x120xf32> -> vector<2x120xf32>
    %158 = arith.addf %152, %157 : vector<2x120xf32>
    %c0_129 = arith.constant 0 : index
    %c0_130 = arith.constant 0 : index
    %159 = vector.load %arg11[%c0_129, %c0_130] : memref<1x120xf32, #tpu.memory_space<vmem>>, vector<1x120xf32>
    %160 = vector.broadcast %159 : vector<1x120xf32> to vector<2x120xf32>
    %161 = arith.addf %158, %160 : vector<2x120xf32>
    %cst_131 = arith.constant 0.000000e+00 : f32
    %162 = vector.broadcast %cst_131 : f32 to vector<2x120xf32>
    %163 = arith.maximumf %161, %162 : vector<2x120xf32>
    %164 = arith.truncf %163 : vector<2x120xf32> to vector<2x120xbf16>
    %c0_132 = arith.constant 0 : index
    %c0_133 = arith.constant 0 : index
    %165 = vector.load %arg12[%c0_132, %c0_133] : memref<120x84xbf16, #tpu.memory_space<vmem>>, vector<120x84xbf16>
    %cst_134 = arith.constant dense<0.000000e+00> : vector<2x84xf32>
    %166 = tpu.matmul %164, %165, %cst_134 {dimension_numbers = #tpu.dot_dimension_numbers<[1], [0], [0], [1], [0, 0, 1, 1], [], []>} : vector<2x120xbf16>, vector<120x84xbf16>, vector<2x84xf32> -> vector<2x84xf32>
    %c0_135 = arith.constant 0 : index
    %c0_136 = arith.constant 0 : index
    %167 = vector.load %arg13[%c0_135, %c0_136] : memref<1x84xf32, #tpu.memory_space<vmem>>, vector<1x84xf32>
    %168 = vector.broadcast %167 : vector<1x84xf32> to vector<2x84xf32>
    %169 = arith.addf %166, %168 : vector<2x84xf32>
    %cst_137 = arith.constant 0.000000e+00 : f32
    %170 = vector.broadcast %cst_137 : f32 to vector<2x84xf32>
    %171 = arith.maximumf %169, %170 : vector<2x84xf32>
    %172 = arith.truncf %171 : vector<2x84xf32> to vector<2x84xbf16>
    %c0_138 = arith.constant 0 : index
    %c0_139 = arith.constant 0 : index
    %173 = vector.load %arg14[%c0_138, %c0_139] : memref<84x128xbf16, #tpu.memory_space<vmem>>, vector<84x128xbf16>
    %cst_140 = arith.constant dense<0.000000e+00> : vector<2x128xf32>
    %174 = tpu.matmul %172, %173, %cst_140 {dimension_numbers = #tpu.dot_dimension_numbers<[1], [0], [0], [1], [0, 0, 1, 1], [], []>} : vector<2x84xbf16>, vector<84x128xbf16>, vector<2x128xf32> -> vector<2x128xf32>
    %c0_141 = arith.constant 0 : index
    %c0_142 = arith.constant 0 : index
    %175 = vector.load %arg15[%c0_141, %c0_142] : memref<1x128xf32, #tpu.memory_space<vmem>>, vector<1x128xf32>
    %176 = vector.broadcast %175 : vector<1x128xf32> to vector<2x128xf32>
    %177 = arith.addf %174, %176 : vector<2x128xf32>
    %c0_143 = arith.constant 0 : index
    %c0_144 = arith.constant 0 : index
    %178 = vector.load %arg16[%c0_143, %c0_144] : memref<2x128xf32, #tpu.memory_space<vmem>>, vector<2x128xf32>
    tpu.vector_store %arg16[%c0_143, %c0_144], %177 {strides = array<i32>} : memref<2x128xf32, #tpu.memory_space<vmem>>, vector<2x128xf32>,
    return
  }
  func.func @transform_0(%arg0: i32) -> (i32, i32, i32) {
    %c0_i32 = arith.constant 0 : i32
    %c0_i32_0 = arith.constant 0 : i32
    %c0_i32_1 = arith.constant 0 : i32
    return %arg0, %c0_i32, %c0_i32_0 : i32, i32, i32
  }
  func.func @transform_1(%arg0: i32) -> (i32, i32) {
    %c0_i32 = arith.constant 0 : i32
    %c0_i32_0 = arith.constant 0 : i32
    %c0_i32_1 = arith.constant 0 : i32
    return %c0_i32, %c0_i32_0 : i32, i32
  }
  func.func @transform_2(%arg0: i32) -> (i32, i32) {
    %c0_i32 = arith.constant 0 : i32
    %c0_i32_0 = arith.constant 0 : i32
    %c0_i32_1 = arith.constant 0 : i32
    return %c0_i32, %c0_i32_0 : i32, i32
  }
  func.func @transform_3(%arg0: i32) -> (i32, i32, i32) {
    %c0_i32 = arith.constant 0 : i32
    %c0_i32_0 = arith.constant 0 : i32
    %c0_i32_1 = arith.constant 0 : i32
    %c0_i32_2 = arith.constant 0 : i32
    return %c0_i32, %c0_i32_0, %c0_i32_1 : i32, i32, i32
  }
  func.func @transform_4(%arg0: i32) -> (i32, i32, i32) {
    %c0_i32 = arith.constant 0 : i32
    %c0_i32_0 = arith.constant 0 : i32
    %c0_i32_1 = arith.constant 0 : i32
    %c0_i32_2 = arith.constant 0 : i32
    return %c0_i32, %c0_i32_0, %c0_i32_1 : i32, i32, i32
  }
  func.func @transform_5(%arg0: i32) -> (i32, i32) {
    %c0_i32 = arith.constant 0 : i32
    %c0_i32_0 = arith.constant 0 : i32
    %c0_i32_1 = arith.constant 0 : i32
    return %c0_i32, %c0_i32_0 : i32, i32
  }
  func.func @transform_6(%arg0: i32) -> (i32, i32) {
    %c0_i32 = arith.constant 0 : i32
    %c0_i32_0 = arith.constant 0 : i32
    %c0_i32_1 = arith.constant 0 : i32
    return %c0_i32, %c0_i32_0 : i32, i32
  }
  func.func @transform_7(%arg0: i32) -> (i32, i32, i32) {
    %c0_i32 = arith.constant 0 : i32
    %c0_i32_0 = arith.constant 0 : i32
    %c0_i32_1 = arith.constant 0 : i32
    %c0_i32_2 = arith.constant 0 : i32
    return %c0_i32, %c0_i32_0, %c0_i32_1 : i32, i32, i32
  }
  func.func @transform_8(%arg0: i32) -> (i32, i32, i32) {
    %c0_i32 = arith.constant 0 : i32
    %c0_i32_0 = arith.constant 0 : i32
    %c0_i32_1 = arith.constant 0 : i32
    %c0_i32_2 = arith.constant 0 : i32
    return %c0_i32, %c0_i32_0, %c0_i32_1 : i32, i32, i32
  }
  func.func @transform_9(%arg0: i32) -> (i32, i32, i32) {
    %c0_i32 = arith.constant 0 : i32
    %c0_i32_0 = arith.constant 0 : i32
    %c0_i32_1 = arith.constant 0 : i32
    %c0_i32_2 = arith.constant 0 : i32
    return %c0_i32, %c0_i32_0, %c0_i32_1 : i32, i32, i32
  }
  func.func @transform_10(%arg0: i32) -> (i32, i32) {
    %c0_i32 = arith.constant 0 : i32
    %c0_i32_0 = arith.constant 0 : i32
    %c0_i32_1 = arith.constant 0 : i32
    return %c0_i32, %c0_i32_0 : i32, i32
  }
  func.func @transform_11(%arg0: i32) -> (i32, i32) {
    %c0_i32 = arith.constant 0 : i32
    %c0_i32_0 = arith.constant 0 : i32
    %c0_i32_1 = arith.constant 0 : i32
    return %c0_i32, %c0_i32_0 : i32, i32
  }
  func.func @transform_12(%arg0: i32) -> (i32, i32) {
    %c0_i32 = arith.constant 0 : i32
    %c0_i32_0 = arith.constant 0 : i32
    %c0_i32_1 = arith.constant 0 : i32
    return %c0_i32, %c0_i32_0 : i32, i32
  }
  func.func @transform_13(%arg0: i32) -> (i32, i32) {
    %c0_i32 = arith.constant 0 : i32
    %c0_i32_0 = arith.constant 0 : i32
    %c0_i32_1 = arith.constant 0 : i32
    return %c0_i32, %c0_i32_0 : i32, i32
  }
  func.func @transform_14(%arg0: i32) -> (i32, i32) {
    %c0_i32 = arith.constant 0 : i32
    %c0_i32_0 = arith.constant 0 : i32
    %c0_i32_1 = arith.constant 0 : i32
    return %c0_i32, %c0_i32_0 : i32, i32
  }
  func.func @transform_15(%arg0: i32) -> (i32, i32) {
    %c0_i32 = arith.constant 0 : i32
    %c0_i32_0 = arith.constant 0 : i32
    return %arg0, %c0_i32 : i32, i32
  }
}

</mosaic_0001>

<llo_original>
// kernel: net_forward.1
$region0: #{net_forward.1}
  #allocation0 [shape = 'u32[]', space=smem, size = 0x4, offset = 0x4, fixed_abs, tag = 'smem constant byte address 0x4 - core index']
  #allocation1 [shape = 'u32[144,128]{1,0:T(1,128)}', space=vmem, size = 0x12000, scoped, tag = 'internal scratch']
  #allocation2 [shape = 'bf16[2,5,80]{2,1,0:T(8,128)(2,1)}', space=vmem, size = 0x1000, scoped, tag = 'scratch operand']
  %s0 = inlined_call_operand.vmem [shape: bf16[2,32,96], index: 0, kind: input, shape index: {}]
  %s1 = inlined_call_operand.vmem [shape: bf16[480,168], index: 1, kind: input, shape index: {}]
  %s2 = inlined_call_operand.vmem [shape: f32[1,168], index: 2, kind: input, shape index: {}]
  %s3 = inlined_call_operand.vmem [shape: bf16[2,14,28], index: 3, kind: input, shape index: {}]
  %s4 = inlined_call_operand.vmem [shape: bf16[2,168,84], index: 4, kind: input, shape index: {}]
  %s5 = inlined_call_operand.vmem [shape: bf16[420,160], index: 5, kind: input, shape index: {}]
  %s6 = inlined_call_operand.vmem [shape: f32[1,160], index: 6, kind: input, shape index: {}]
  %s7 = inlined_call_operand.vmem [shape: bf16[2,5,10], index: 7, kind: input, shape index: {}]
  %s8 = inlined_call_operand.vmem [shape: bf16[2,160,80], index: 8, kind: input, shape index: {}]
  %s9 = inlined_call_operand.vmem [shape: bf16[5,80,120], index: 9, kind: input, shape index: {}]
  %s10 = inlined_call_operand.vmem [shape: f32[1,120], index: 10, kind: input, shape index: {}]
  %s11 = inlined_call_operand.vmem [shape: bf16[120,84], index: 11, kind: input, shape index: {}]
  %s12 = inlined_call_operand.vmem [shape: f32[1,84], index: 12, kind: input, shape index: {}]
  %s13 = inlined_call_operand.vmem [shape: bf16[84,128], index: 13, kind: input, shape index: {}]
  %s14 = inlined_call_operand.vmem [shape: f32[1,128], index: 14, kind: input, shape index: {}]
  %s15 = inlined_call_operand.hbm [shape: f32[2,128], index: 15, kind: output, shape index: {}]
  %s16 = sld [smem:[#allocation0]]
  $region70: #{net_forward.1} parent=0
    _
  %s18 = ssub.s32 1, %s16
  %s19 = scalar_select 0, %s18, %s16
  $region1: #{net_forward.1} parent=0
    #allocation3 [shape = 'u8[1024]{0}', space=vmem, size = 0x400, scoped, tag = 'output window, operand 0, single buffered']
    #allocation4 [shape = 's32[1]{0}', space=sflag, size = 0x4, scoped, tag = 'scoped memory for net_forward.1']
    %20 = vsyncpa [#allocation4], 0
    // Predicated region
    $region2: #{net_forward.1} parent=1 // pred_check
      _
    $region3: #{net_forward.1} parent=1 // pred_check_branch
      %22 = sbr.rel (0) target = $region5
    $region4: #{net_forward.1} parent=1 // pred_region
      _
    $region5: #{net_forward.1} parent=1 // pred_fallthru
      _
    // Predicated region
    $region6: #{net_forward.1} parent=1 // pred_check
      _
    $region7: #{net_forward.1} parent=1 // pred_check_branch
      %24 = sbr.rel (0) target = $region9
    $region8: #{net_forward.1} parent=1 // pred_region
      _
    $region9: #{net_forward.1} parent=1 // pred_fallthru
      _
    // Predicated region
    $region10: #{net_forward.1} parent=1 // pred_check
      _
    $region11: #{net_forward.1} parent=1 // pred_check_branch
      %26 = sbr.rel (0) target = $region13
    $region12: #{net_forward.1} parent=1 // pred_region
      _
    $region13: #{net_forward.1} parent=1 // pred_fallthru
      _
    // Predicated region
    $region14: #{net_forward.1} parent=1 // pred_check
      _
    $region15: #{net_forward.1} parent=1 // pred_check_branch
      %28 = sbr.rel (0) target = $region17
    $region16: #{net_forward.1} parent=1 // pred_region
      _
    $region17: #{net_forward.1} parent=1 // pred_fallthru
      _
    // Predicated region
    $region18: #{net_forward.1} parent=1 // pred_check
      _
    $region19: #{net_forward.1} parent=1 // pred_check_branch
      %30 = sbr.rel (0) target = $region21
    $region20: #{net_forward.1} parent=1 // pred_region
      _
    $region21: #{net_forward.1} parent=1 // pred_fallthru
      _
    // Predicated region
    $region22: #{net_forward.1} parent=1 // pred_check
      _
    $region23: #{net_forward.1} parent=1 // pred_check_branch
      %32 = sbr.rel (0) target = $region25
    $region24: #{net_forward.1} parent=1 // pred_region
      _
    $region25: #{net_forward.1} parent=1 // pred_fallthru
      _
    // Predicated region
    $region26: #{net_forward.1} parent=1 // pred_check
      _
    $region27: #{net_forward.1} parent=1 // pred_check_branch
      %34 = sbr.rel (0) target = $region29
    $region28: #{net_forward.1} parent=1 // pred_region
      _
    $region29: #{net_forward.1} parent=1 // pred_fallthru
      _
    // Predicated region
    $region30: #{net_forward.1} parent=1 // pred_check
      _
    $region31: #{net_forward.1} parent=1 // pred_check_branch
      %36 = sbr.rel (0) target = $region33
    $region32: #{net_forward.1} parent=1 // pred_region
      _
    $region33: #{net_forward.1} parent=1 // pred_fallthru
      _
    // Predicated region
    $region34: #{net_forward.1} parent=1 // pred_check
      _
    $region35: #{net_forward.1} parent=1 // pred_check_branch
      %38 = sbr.rel (0) target = $region37
    $region36: #{net_forward.1} parent=1 // pred_region
      _
    $region37: #{net_forward.1} parent=1 // pred_fallthru
      _
    // Predicated region
    $region38: #{net_forward.1} parent=1 // pred_check
      _
    $region39: #{net_forward.1} parent=1 // pred_check_branch
      %40 = sbr.rel (0) target = $region41
    $region40: #{net_forward.1} parent=1 // pred_region
      _
    $region41: #{net_forward.1} parent=1 // pred_fallthru
      _
    // Predicated region
    $region42: #{net_forward.1} parent=1 // pred_check
      _
    $region43: #{net_forward.1} parent=1 // pred_check_branch
      %42 = sbr.rel (0) target = $region45
    $region44: #{net_forward.1} parent=1 // pred_region
      _
    $region45: #{net_forward.1} parent=1 // pred_fallthru
      _
    // Predicated region
    $region46: #{net_forward.1} parent=1 // pred_check
      _
    $region47: #{net_forward.1} parent=1 // pred_check_branch
      %44 = sbr.rel (0) target = $region49
    $region48: #{net_forward.1} parent=1 // pred_region
      _
    $region49: #{net_forward.1} parent=1 // pred_fallthru
      _
    // Predicated region
    $region50: #{net_forward.1} parent=1 // pred_check
      _
    $region51: #{net_forward.1} parent=1 // pred_check_branch
      %46 = sbr.rel (0) target = $region53
    $region52: #{net_forward.1} parent=1 // pred_region
      _
    $region53: #{net_forward.1} parent=1 // pred_fallthru
      _
    // Predicated region
    $region54: #{net_forward.1} parent=1 // pred_check
      _
    $region55: #{net_forward.1} parent=1 // pred_check_branch
      %48 = sbr.rel (0) target = $region57
    $region56: #{net_forward.1} parent=1 // pred_region
      _
    $region57: #{net_forward.1} parent=1 // pred_fallthru
      _
    // Predicated region
    $region58: #{net_forward.1} parent=1 // pred_check
      _
    $region59: #{net_forward.1} parent=1 // pred_check_branch
      %50 = sbr.rel (0) target = $region61
    $region60: #{net_forward.1} parent=1 // pred_region
      _
    $region61: #{net_forward.1} parent=1 // pred_fallthru
      _
    %v52 = vld [vmem:[%s0] sm:$0xf]
    %v53 = vld [vmem:[%s0 + $0x4] sm:$0xf]
    %v54 = vld [vmem:[%s0 + $0x8] sm:$0xf]
    %v55 = vld [vmem:[%s0 + $0xc] sm:$0xf]
    %v60 = vunpack.c.l.b16 %v52
    %v61 = vunpack.c.l.b16 %v53
    %v62 = vunpack.c.l.b16 %v54
    %v63 = vunpack.c.l.b16 %v55
    %v64 = vpack.c.b16 %v61, %v60
    %v65 = vpack.c.b16 %v63, %v62
    %vm66 = vsmask.f32 7424
    %v68 = vshrl.u32 %v64, 16
    %v70 = vshll.u32 %v64, 16
    %v72 = vrot.slane %v70, 1
    %v73 = vor.u32 %v68, %v72
    %v75 = vshll.u32 %v65, 16
    %v77 = vrot.slane %v75, 1
    %v78 = vsel %vm66, %v73, %v77
    %v79 = vshrl.u32 %v65, 16
    %v81 = vor.u32 %v79, %v77
    %82 = vrot.lane.b32.xlu0 %v78, 96
    %v83 = vpop.permute.xlu0 %82
    %84 = vrot.lane.b32.xlu0 %v81, 96
    %v85 = vpop.permute.xlu0 %84
    %vm86 = vcmask 1046528
    %v87 = vrot.slane %v64, 1
    %v88 = vrot.slane %v65, 1
    %v89 = vsel %vm86, %v87, %v88
    %90 = vrot.lane.b32.xlu0 %v89, 64
    %v91 = vpop.permute.xlu0 %90
    %92 = vrot.lane.b32.xlu0 %v88, 64
    %v93 = vpop.permute.xlu0 %92
    %vm94 = vsmask.f32 6400
    %v95 = vrot.slane %v68, 1
    %v96 = vrot.slane %v70, 2
    %v97 = vor.u32 %v95, %v96
    %v98 = vrot.slane %v79, 1
    %v99 = vrot.slane %v75, 2
    %v100 = vor.u32 %v98, %v99
    %v101 = vsel %vm94, %v97, %v100
    %102 = vrot.lane.b32.xlu0 %v101, 32
    %v103 = vpop.permute.xlu0 %102
    %104 = vrot.lane.b32.xlu0 %v100, 32
    %v105 = vpop.permute.xlu0 %104
    %vm106 = vcmask 1045504
    %v107 = vrot.slane %v64, 2
    %v108 = vrot.slane %v65, 2
    %v109 = vsel %vm106, %v107, %v108
    %vm110 = vcmask 785408
    %v112 = vsel %vm110, %v64, %v83
    %v115 = vsel %vm110, %v65, %v85
    %vm117 = vcmask 523264
    %v119 = vsel %vm117, %v83, %v91
    %v122 = vsel %vm117, %v85, %v93
    %vm124 = vcmask 261120
    %v126 = vsel %vm124, %v91, %v103
    %v129 = vsel %vm124, %v93, %v105
    %v131 = vld [vmem:[%s1] sm:$0xff]
    %v132 = vld [vmem:[%s1 + $0x8] sm:$0xff]
    %v133 = vld [vmem:[%s1 + $0x10] sm:$0xff]
    %v134 = vld [vmem:[%s1 + $0x18] sm:$0xff]
    %v135 = vld [vmem:[%s1 + $0x20] sm:$0xff]
    %v136 = vld [vmem:[%s1 + $0x28] sm:$0xff]
    %v137 = vld [vmem:[%s1 + $0x30] sm:$0xff]
    %v138 = vld [vmem:[%s1 + $0x38] sm:$0xff]
    %v139 = vld [vmem:[%s1 + $0x40] sm:$0xff]
    %v140 = vld [vmem:[%s1 + $0x48] sm:$0xff]
    %v141 = vld [vmem:[%s1 + $0x50] sm:$0xff]
    %v142 = vld [vmem:[%s1 + $0x58] sm:$0xff]
    %v143 = vld [vmem:[%s1 + $0x60] sm:$0xff]
    %v144 = vld [vmem:[%s1 + $0x68] sm:$0xff]
    %v145 = vld [vmem:[%s1 + $0x70] sm:$0xff]
    %v146 = vld [vmem:[%s1 + $0x78] sm:$0xff]
    %v147 = vld [vmem:[%s1 + $0x80] sm:$0xff]
    %v148 = vld [vmem:[%s1 + $0x88] sm:$0xff]
    %v149 = vld [vmem:[%s1 + $0x90] sm:$0xff]
    %v150 = vld [vmem:[%s1 + $0x98] sm:$0xff]
    %v151 = vld [vmem:[%s1 + $0xa0] sm:$0xff]
    %v152 = vld [vmem:[%s1 + $0xa8] sm:$0xff]
    %v153 = vld [vmem:[%s1 + $0xb0] sm:$0xff]
    %v154 = vld [vmem:[%s1 + $0xb8] sm:$0xff]
    %v155 = vld [vmem:[%s1 + $0xc0] sm:$0xff]
    %v156 = vld [vmem:[%s1 + $0xc8] sm:$0xff]
    %v157 = vld [vmem:[%s1 + $0xd0] sm:$0xff]
    %v158 = vld [vmem:[%s1 + $0xd8] sm:$0xff]
    %v159 = vld [vmem:[%s1 + $0xe0] sm:$0xff]
    %v160 = vld [vmem:[%s1 + $0xe8] sm:$0xff]
    %v161 = vld [vmem:[%s1 + $0xf0] sm:$0xff]
    %v162 = vld [vmem:[%s1 + $0xf8] sm:$0xff]
    %v163 = vld [vmem:[%s1 + $0x100] sm:$0xff]
    %v164 = vld [vmem:[%s1 + $0x108] sm:$0xff]
    %v165 = vld [vmem:[%s1 + $0x110] sm:$0xff]
    %v166 = vld [vmem:[%s1 + $0x118] sm:$0xff]
    %v167 = vld [vmem:[%s1 + $0x120] sm:$0xff]
    %v168 = vld [vmem:[%s1 + $0x128] sm:$0xff]
    %v169 = vld [vmem:[%s1 + $0x130] sm:$0xff]
    %v170 = vld [vmem:[%s1 + $0x138] sm:$0xff]
    %v171 = vld [vmem:[%s1 + $0x140] sm:$0xff]
    %v172 = vld [vmem:[%s1 + $0x148] sm:$0xff]
    %v173 = vld [vmem:[%s1 + $0x150] sm:$0xff]
    %v174 = vld [vmem:[%s1 + $0x158] sm:$0xff]
    %v175 = vld [vmem:[%s1 + $0x160] sm:$0xff]
    %v176 = vld [vmem:[%s1 + $0x168] sm:$0xff]
    %v177 = vld [vmem:[%s1 + $0x170] sm:$0xff]
    %v178 = vld [vmem:[%s1 + $0x178] sm:$0xff]
    %v179 = vld [vmem:[%s1 + $0x180] sm:$0xff]
    %v180 = vld [vmem:[%s1 + $0x188] sm:$0xff]
    %v181 = vld [vmem:[%s1 + $0x190] sm:$0xff]
    %v182 = vld [vmem:[%s1 + $0x198] sm:$0xff]
    %v183 = vld [vmem:[%s1 + $0x1a0] sm:$0xff]
    %v184 = vld [vmem:[%s1 + $0x1a8] sm:$0xff]
    %v185 = vld [vmem:[%s1 + $0x1b0] sm:$0xff]
    %v186 = vld [vmem:[%s1 + $0x1b8] sm:$0xff]
    %v187 = vld [vmem:[%s1 + $0x1c0] sm:$0xff]
    %v188 = vld [vmem:[%s1 + $0x1c8] sm:$0xff]
    %v189 = vld [vmem:[%s1 + $0x1d0] sm:$0xff]
    %v190 = vld [vmem:[%s1 + $0x1d8] sm:$0xff]
    %v191 = vld [vmem:[%s2] sm:$0x3]
    %v193 = vlaneseq
    %v194 = vshrl.u32 %v193, 7
    %v195 = vsub.s32 0, %v194
    %v196 = vrot.slane %v191, %v195
    %v197 = vlaneseq
    %v198 = vshrl.u32 %v197, 7
    %v199 = vsub.s32 1, %v198
    %v200 = vrot.slane %v191, %v199
    %v263 = vunpack.c.l.b16 %v131
    %v264 = vunpack.c.h.b16 %v131
    %v265 = vunpack.c.l.b16 %v132
    %v266 = vunpack.c.h.b16 %v132
    %v267 = vunpack.c.l.b16 %v133
    %v268 = vunpack.c.h.b16 %v133
    %v269 = vunpack.c.l.b16 %v134
    %v270 = vunpack.c.h.b16 %v134
    %v271 = vunpack.c.l.b16 %v135
    %v272 = vunpack.c.h.b16 %v135
    %v273 = vunpack.c.l.b16 %v136
    %v274 = vunpack.c.h.b16 %v136
    %v275 = vunpack.c.l.b16 %v137
    %v276 = vunpack.c.h.b16 %v137
    %v277 = vunpack.c.l.b16 %v138
    %v278 = vunpack.c.h.b16 %v138
    %v279 = vunpack.c.l.b16 %v139
    %v280 = vunpack.c.h.b16 %v139
    %v281 = vunpack.c.l.b16 %v140
    %v282 = vunpack.c.h.b16 %v140
    %v283 = vunpack.c.l.b16 %v141
    %v284 = vunpack.c.h.b16 %v141
    %v285 = vunpack.c.l.b16 %v142
    %v286 = vunpack.c.h.b16 %v142
    %v287 = vunpack.c.l.b16 %v143
    %v288 = vunpack.c.h.b16 %v143
    %v289 = vunpack.c.l.b16 %v144
    %v290 = vunpack.c.h.b16 %v144
    %v291 = vunpack.c.l.b16 %v145
    %v292 = vunpack.c.h.b16 %v145
    %v293 = vunpack.c.l.b16 %v146
    %v294 = vunpack.c.h.b16 %v146
    %v295 = vunpack.c.l.b16 %v147
    %v296 = vunpack.c.h.b16 %v147
    %v297 = vunpack.c.l.b16 %v148
    %v298 = vunpack.c.h.b16 %v148
    %v299 = vunpack.c.l.b16 %v149
    %v300 = vunpack.c.h.b16 %v149
    %v301 = vunpack.c.l.b16 %v150
    %v302 = vunpack.c.h.b16 %v150
    %v303 = vunpack.c.l.b16 %v151
    %v304 = vunpack.c.h.b16 %v151
    %v305 = vunpack.c.l.b16 %v152
    %v306 = vunpack.c.h.b16 %v152
    %v307 = vunpack.c.l.b16 %v153
    %v308 = vunpack.c.h.b16 %v153
    %v309 = vunpack.c.l.b16 %v154
    %v310 = vunpack.c.h.b16 %v154
    %v311 = vunpack.c.l.b16 %v155
    %v312 = vunpack.c.h.b16 %v155
    %v313 = vunpack.c.l.b16 %v156
    %v314 = vunpack.c.h.b16 %v156
    %v315 = vunpack.c.l.b16 %v157
    %v316 = vunpack.c.h.b16 %v157
    %v317 = vunpack.c.l.b16 %v158
    %v318 = vunpack.c.h.b16 %v158
    %v319 = vunpack.c.l.b16 %v159
    %v320 = vunpack.c.h.b16 %v159
    %v321 = vunpack.c.l.b16 %v160
    %v322 = vunpack.c.h.b16 %v160
    %v323 = vunpack.c.l.b16 %v161
    %v324 = vunpack.c.h.b16 %v161
    %v325 = vunpack.c.l.b16 %v162
    %v326 = vunpack.c.h.b16 %v162
    %v327 = vunpack.c.l.b16 %v163
    %v328 = vunpack.c.h.b16 %v163
    %v329 = vunpack.c.l.b16 %v164
    %v330 = vunpack.c.h.b16 %v164
    %v331 = vunpack.c.l.b16 %v165
    %v332 = vunpack.c.h.b16 %v165
    %v333 = vunpack.c.l.b16 %v166
    %v334 = vunpack.c.h.b16 %v166
    %v335 = vunpack.c.l.b16 %v167
    %v336 = vunpack.c.h.b16 %v167
    %v337 = vunpack.c.l.b16 %v168
    %v338 = vunpack.c.h.b16 %v168
    %v339 = vunpack.c.l.b16 %v169
    %v340 = vunpack.c.h.b16 %v169
    %v341 = vunpack.c.l.b16 %v170
    %v342 = vunpack.c.h.b16 %v170
    %v343 = vunpack.c.l.b16 %v171
    %v344 = vunpack.c.h.b16 %v171
    %v345 = vunpack.c.l.b16 %v172
    %v346 = vunpack.c.h.b16 %v172
    %v347 = vunpack.c.l.b16 %v173
    %v348 = vunpack.c.h.b16 %v173
    %v349 = vunpack.c.l.b16 %v174
    %v350 = vunpack.c.h.b16 %v174
    %v351 = vunpack.c.l.b16 %v175
    %v352 = vunpack.c.h.b16 %v175
    %v353 = vunpack.c.l.b16 %v176
    %v354 = vunpack.c.h.b16 %v176
    %v355 = vunpack.c.l.b16 %v177
    %v356 = vunpack.c.h.b16 %v177
    %v357 = vunpack.c.l.b16 %v178
    %v358 = vunpack.c.h.b16 %v178
    %v359 = vunpack.c.l.b16 %v179
    %v360 = vunpack.c.h.b16 %v179
    %v361 = vunpack.c.l.b16 %v180
    %v362 = vunpack.c.h.b16 %v180
    %v363 = vunpack.c.l.b16 %v181
    %v364 = vunpack.c.h.b16 %v181
    %v365 = vunpack.c.l.b16 %v182
    %v366 = vunpack.c.h.b16 %v182
    %v367 = vunpack.c.l.b16 %v183
    %v368 = vunpack.c.h.b16 %v183
    %v369 = vunpack.c.l.b16 %v184
    %v370 = vunpack.c.h.b16 %v184
    %v371 = vunpack.c.l.b16 %v185
    %v372 = vunpack.c.h.b16 %v185
    %v373 = vunpack.c.l.b16 %v186
    %v374 = vunpack.c.h.b16 %v186
    %v375 = vunpack.c.l.b16 %v187
    %v376 = vunpack.c.h.b16 %v187
    %v377 = vunpack.c.l.b16 %v188
    %v378 = vunpack.c.h.b16 %v188
    %v379 = vunpack.c.l.b16 %v189
    %v380 = vunpack.c.h.b16 %v189
    %v381 = vunpack.c.l.b16 %v190
    %v382 = vunpack.c.h.b16 %v190
    %v383 = vpack.c.b16 %v265, %v263
    %v384 = vpack.c.b16 %v266, %v264
    %v385 = vpack.c.b16 %v269, %v267
    %v386 = vpack.c.b16 %v270, %v268
    %v387 = vpack.c.b16 %v273, %v271
    %v388 = vpack.c.b16 %v274, %v272
    %v389 = vpack.c.b16 %v277, %v275
    %v390 = vpack.c.b16 %v278, %v276
    %v391 = vpack.c.b16 %v281, %v279
    %v392 = vpack.c.b16 %v282, %v280
    %v393 = vpack.c.b16 %v285, %v283
    %v394 = vpack.c.b16 %v286, %v284
    %v395 = vpack.c.b16 %v289, %v287
    %v396 = vpack.c.b16 %v290, %v288
    %v397 = vpack.c.b16 %v293, %v291
    %v398 = vpack.c.b16 %v294, %v292
    %v399 = vpack.c.b16 %v297, %v295
    %v400 = vpack.c.b16 %v298, %v296
    %v401 = vpack.c.b16 %v301, %v299
    %v402 = vpack.c.b16 %v302, %v300
    %v403 = vpack.c.b16 %v305, %v303
    %v404 = vpack.c.b16 %v306, %v304
    %v405 = vpack.c.b16 %v309, %v307
    %v406 = vpack.c.b16 %v310, %v308
    %v407 = vpack.c.b16 %v313, %v311
    %v408 = vpack.c.b16 %v314, %v312
    %v409 = vpack.c.b16 %v317, %v315
    %v410 = vpack.c.b16 %v318, %v316
    %v411 = vpack.c.b16 %v321, %v319
    %v412 = vpack.c.b16 %v322, %v320
    %v413 = vpack.c.b16 %v325, %v323
    %v414 = vpack.c.b16 %v326, %v324
    %v415 = vpack.c.b16 %v329, %v327
    %v416 = vpack.c.b16 %v330, %v328
    %v417 = vpack.c.b16 %v333, %v331
    %v418 = vpack.c.b16 %v334, %v332
    %v419 = vpack.c.b16 %v337, %v335
    %v420 = vpack.c.b16 %v338, %v336
    %v421 = vpack.c.b16 %v341, %v339
    %v422 = vpack.c.b16 %v342, %v340
    %v423 = vpack.c.b16 %v345, %v343
    %v424 = vpack.c.b16 %v346, %v344
    %v425 = vpack.c.b16 %v349, %v347
    %v426 = vpack.c.b16 %v350, %v348
    %v427 = vpack.c.b16 %v353, %v351
    %v428 = vpack.c.b16 %v354, %v352
    %v429 = vpack.c.b16 %v357, %v355
    %v430 = vpack.c.b16 %v358, %v356
    %v431 = vpack.c.b16 %v361, %v359
    %v432 = vpack.c.b16 %v362, %v360
    %v433 = vpack.c.b16 %v365, %v363
    %v434 = vpack.c.b16 %v366, %v364
    %v435 = vpack.c.b16 %v369, %v367
    %v436 = vpack.c.b16 %v370, %v368
    %v437 = vpack.c.b16 %v373, %v371
    %v438 = vpack.c.b16 %v374, %v372
    %v439 = vpack.c.b16 %v377, %v375
    %v440 = vpack.c.b16 %v378, %v376
    %v441 = vpack.c.b16 %v381, %v379
    %v442 = vpack.c.b16 %v382, %v380
    %v504 = vsel %vm110, %v109, 0
    %v507 = vsel %vm110, %v108, 0
    %509 = vmatprep.subr.bf16.mxu0 %v384
    %510 = vmatpush1.bf16.msra.mxu0 %v383
    %511 = vmatprep.subr.bf16.mxu0 %v386
    %512 = vmatpush1.bf16.msra.mxu0 %v385
    %513 = vmatprep.subr.bf16.mxu0 %v388
    %514 = vmatpush1.bf16.msra.mxu0 %v387
    %515 = vmatprep.subr.bf16.mxu0 %v390
    %516 = vmatpush1.bf16.msra.mxu0 %v389
    %517 = vmatprep.subr.bf16.mxu0 %v392
    %518 = vmatpush1.bf16.msra.mxu0 %v391
    %519 = vmatprep.subr.bf16.mxu0 %v394
    %520 = vmatpush1.bf16.msra.mxu0 %v393
    %521 = vmatprep.subr.bf16.mxu0 %v396
    %522 = vmatpush1.bf16.msra.mxu0 %v395
    %523 = vmatprep.subr.bf16.mxu0 %v398
    %524 = vmatpush1.bf16.msra.mxu0 %v397
    %525 = vmatprep.subr.bf16.mxu0 %v400
    %526 = vmatpush1.bf16.msra.mxu0 %v399
    %527 = vmatprep.subr.bf16.mxu0 %v402
    %528 = vmatpush1.bf16.msra.mxu0 %v401
    %529 = vmatprep.subr.bf16.mxu0 %v404
    %530 = vmatpush1.bf16.msra.mxu0 %v403
    %531 = vmatprep.subr.bf16.mxu0 %v406
    %532 = vmatpush1.bf16.msra.mxu0 %v405
    %533 = vmatprep.subr.bf16.mxu0 %v408
    %534 = vmatpush1.bf16.msra.mxu0 %v407
    %535 = vmatprep.subr.bf16.mxu0 %v410
    %536 = vmatpush1.bf16.msra.mxu0 %v409
    %537 = vmatprep.subr.bf16.mxu0 %v412
    %538 = vmatpush1.bf16.msra.mxu0 %v411
    %539 = vmatprep.subr.bf16.mxu0 %v414
    %540 = vmatpush1.bf16.msra.mxu0 %v413
    %541 = vmatprep.mubr.bf16.mxu0 %v119
    %542 = vmatmul.mubr.bf16.gmra.mrb[0].mxu0 %v112
    %v543 = vpop.f32.mrb[0].mxu0
    %v544 = vadd.f32 %v196, %v543
    %v545 = vpop.f32.mrb[0].mxu0
    %v546 = vadd.f32 %v200, %v545
    %v547 = vpop.f32.mrb[0].mxu0
    %v548 = vadd.f32 %v196, %v547
    %v549 = vpop.f32.mrb[0].mxu0
    %v550 = vadd.f32 %v200, %v549
    %551 = vmatprep.mubr.bf16.mxu0 %v122
    %552 = vmatmul.mubr.bf16.gmra.mrb[0].mxu0 %v115
    %v553 = vpop.f32.mrb[0].mxu0
    %v554 = vadd.f32 %v196, %v553
    %v555 = vpop.f32.mrb[0].mxu0
    %v556 = vadd.f32 %v200, %v555
    %v557 = vpop.f32.mrb[0].mxu0
    %v558 = vadd.f32 %v196, %v557
    %v559 = vpop.f32.mrb[0].mxu0
    %v560 = vadd.f32 %v200, %v559
    %561 = vdwg.mxu0
    %562 = vmatprep.subr.bf16.mxu0 %v416
    %563 = vmatpush1.bf16.msra.mxu0 %v415
    %564 = vmatprep.subr.bf16.mxu0 %v418
    %565 = vmatpush1.bf16.msra.mxu0 %v417
    %566 = vmatprep.subr.bf16.mxu0 %v420
    %567 = vmatpush1.bf16.msra.mxu0 %v419
    %568 = vmatprep.subr.bf16.mxu0 %v422
    %569 = vmatpush1.bf16.msra.mxu0 %v421
    %570 = vmatprep.subr.bf16.mxu0 %v424
    %571 = vmatpush1.bf16.msra.mxu0 %v423
    %572 = vmatprep.subr.bf16.mxu0 %v426
    %573 = vmatpush1.bf16.msra.mxu0 %v425
    %574 = vmatprep.subr.bf16.mxu0 %v428
    %575 = vmatpush1.bf16.msra.mxu0 %v427
    %576 = vmatprep.subr.bf16.mxu0 %v430
    %577 = vmatpush1.bf16.msra.mxu0 %v429
    %578 = vmatprep.subr.bf16.mxu0 %v432
    %579 = vmatpush1.bf16.msra.mxu0 %v431
    %580 = vmatprep.subr.bf16.mxu0 %v434
    %581 = vmatpush1.bf16.msra.mxu0 %v433
    %582 = vmatprep.subr.bf16.mxu0 %v436
    %583 = vmatpush1.bf16.msra.mxu0 %v435
    %584 = vmatprep.subr.bf16.mxu0 %v438
    %585 = vmatpush1.bf16.msra.mxu0 %v437
    %586 = vmatprep.subr.bf16.mxu0 %v440
    %587 = vmatpush1.bf16.msra.mxu0 %v439
    %588 = vmatprep.subr.bf16.mxu0 %v442
    %589 = vmatpush1.bf16.msra.mxu0 %v441
    %590 = vmatprep.subr.bf16.mxu0 0
    %591 = vmatpush1.bf16.msra.mxu0 0
    %592 = vmatprep.subr.bf16.mxu0 0
    %593 = vmatpush1.bf16.msra.mxu0 0
    %594 = vmatprep.mubr.bf16.mxu0 %v504
    %595 = vmatmul.mubr.bf16.gmra.mrb[0].mxu0 %v126
    %v596 = vpop.f32.mrb[0].mxu0
    %v597 = vadd.f32 %v544, %v596
    %v598 = vpop.f32.mrb[0].mxu0
    %v599 = vadd.f32 %v546, %v598
    %v600 = vpop.f32.mrb[0].mxu0
    %v601 = vadd.f32 %v548, %v600
    %v602 = vpop.f32.mrb[0].mxu0
    %v603 = vadd.f32 %v550, %v602
    %604 = vmatprep.mubr.bf16.mxu0 %v507
    %605 = vmatmul.mubr.bf16.gmra.mrb[0].mxu0 %v129
    %v606 = vpop.f32.mrb[0].mxu0
    %v607 = vadd.f32 %v554, %v606
    %v608 = vpop.f32.mrb[0].mxu0
    %v609 = vadd.f32 %v556, %v608
    %v610 = vpop.f32.mrb[0].mxu0
    %v611 = vadd.f32 %v558, %v610
    %v612 = vpop.f32.mrb[0].mxu0
    %v613 = vadd.f32 %v560, %v612
    %614 = vdwg.mxu0
    %v615 = vmax.f32 %v597, 0.0
    %v616 = vmax.f32 %v599, 0.0
    %v617 = vmax.f32 %v601, 0.0
    %v618 = vmax.f32 %v603, 0.0
    %v619 = vmax.f32 %v607, 0.0
    %v620 = vmax.f32 %v609, 0.0
    %v621 = vmax.f32 %v611, 0.0
    %v622 = vmax.f32 %v613, 0.0
    %v623 = vpack.c.bf16 %v617, %v615
    %v624 = vpack.c.bf16 %v618, %v616
    %v625 = vpack.c.bf16 %v621, %v619
    %v626 = vpack.c.bf16 %v622, %v620
    %v627 = vld [vmem:[%s3] sm:$0xf]
    %v628 = vld [vmem:[%s3 + $0x4] sm:$0x7]
    %v631 = vunpack.c.l.b16 %v627
    %v632 = vunpack.c.l.b16 %v628
    %v633 = vpack.c.b16 %v632, %v631
    %vm634 = vcmask 228352
    %v636 = vsel %vm634, %v633, 0
    %vm638 = vcmask 1045504
    %v640 = vsel %vm638, %v625, 0
    %v643 = vsel %vm638, %v626, 0
    %645 = vmatprep.subr.bf16.mxu0 %v624
    %646 = vmatpush1.bf16.msra.mxu0 %v623
    %647 = vmatprep.subr.bf16.mxu0 %v643
    %648 = vmatpush1.bf16.msra.mxu0 %v640
    %649 = vmatprep.subr.bf16.mxu0 0
    %650 = vmatpush1.bf16.msra.mxu0 0
    %651 = vmatprep.subr.bf16.mxu0 0
    %652 = vmatpush1.bf16.msra.mxu0 0
    %653 = vmatprep.subr.bf16.mxu0 0
    %654 = vmatpush1.bf16.msra.mxu0 0
    %655 = vmatprep.subr.bf16.mxu0 0
    %656 = vmatpush1.bf16.msra.mxu0 0
    %657 = vmatprep.subr.bf16.mxu0 0
    %658 = vmatpush1.bf16.msra.mxu0 0
    %659 = vmatprep.subr.bf16.mxu0 0
    %660 = vmatpush1.bf16.msra.mxu0 0
    %661 = vmatprep.subr.bf16.mxu0 0
    %662 = vmatpush1.bf16.msra.mxu0 0
    %663 = vmatprep.subr.bf16.mxu0 0
    %664 = vmatpush1.bf16.msra.mxu0 0
    %665 = vmatprep.subr.bf16.mxu0 0
    %666 = vmatpush1.bf16.msra.mxu0 0
    %667 = vmatprep.subr.bf16.mxu0 0
    %668 = vmatpush1.bf16.msra.mxu0 0
    %669 = vmatprep.subr.bf16.mxu0 0
    %670 = vmatpush1.bf16.msra.mxu0 0
    %671 = vmatprep.subr.bf16.mxu0 0
    %672 = vmatpush1.bf16.msra.mxu0 0
    %673 = vmatprep.subr.bf16.mxu0 0
    %674 = vmatpush1.bf16.msra.mxu0 0
    %675 = vmatprep.subr.bf16.mxu0 0
    %676 = vmatpush1.bf16.msra.mxu0 0
    %677 = vmatprep.mubr.bf16.mxu0 0
    %678 = vmatmul.mubr.bf16.gmra.mrb[0].mxu0 %v636
    %v679 = vpop.f32.mrb[0].mxu0
    %v680 = vadd.f32 0.0, %v679
    %v681 = vpop.f32.mrb[0].mxu0
    %v682 = vadd.f32 0.0, %v681
    %v683 = vpop.f32.mrb[0].mxu0
    %v684 = vadd.f32 0.0, %v683
    %v685 = vpop.f32.mrb[0].mxu0
    %v686 = vadd.f32 0.0, %v685
    %687 = vdwg.mxu0
    %s688 = scalar_lea.vmem %s3, 8
    %v689 = vld [vmem:[%s688] sm:$0xf]
    %v690 = vld [vmem:[%s688 + $0x4] sm:$0x7]
    %v693 = vunpack.c.l.b16 %v689
    %v694 = vunpack.c.l.b16 %v690
    %v695 = vpack.c.b16 %v694, %v693
    %v697 = vsel %vm634, %v695, 0
    %699 = vmatprep.subr.bf16.mxu0 %v624
    %700 = vmatpush1.bf16.msra.mxu0 %v623
    %701 = vmatprep.subr.bf16.mxu0 %v643
    %702 = vmatpush1.bf16.msra.mxu0 %v640
    %703 = vmatprep.subr.bf16.mxu0 0
    %704 = vmatpush1.bf16.msra.mxu0 0
    %705 = vmatprep.subr.bf16.mxu0 0
    %706 = vmatpush1.bf16.msra.mxu0 0
    %707 = vmatprep.subr.bf16.mxu0 0
    %708 = vmatpush1.bf16.msra.mxu0 0
    %709 = vmatprep.subr.bf16.mxu0 0
    %710 = vmatpush1.bf16.msra.mxu0 0
    %711 = vmatprep.subr.bf16.mxu0 0
    %712 = vmatpush1.bf16.msra.mxu0 0
    %713 = vmatprep.subr.bf16.mxu0 0
    %714 = vmatpush1.bf16.msra.mxu0 0
    %715 = vmatprep.subr.bf16.mxu0 0
    %716 = vmatpush1.bf16.msra.mxu0 0
    %717 = vmatprep.subr.bf16.mxu0 0
    %718 = vmatpush1.bf16.msra.mxu0 0
    %719 = vmatprep.subr.bf16.mxu0 0
    %720 = vmatpush1.bf16.msra.mxu0 0
    %721 = vmatprep.subr.bf16.mxu0 0
    %722 = vmatpush1.bf16.msra.mxu0 0
    %723 = vmatprep.subr.bf16.mxu0 0
    %724 = vmatpush1.bf16.msra.mxu0 0
    %725 = vmatprep.subr.bf16.mxu0 0
    %726 = vmatpush1.bf16.msra.mxu0 0
    %727 = vmatprep.subr.bf16.mxu0 0
    %728 = vmatpush1.bf16.msra.mxu0 0
    %729 = vmatprep.subr.bf16.mxu0 0
    %730 = vmatpush1.bf16.msra.mxu0 0
    %731 = vmatprep.mubr.bf16.mxu0 0
    %732 = vmatmul.mubr.bf16.gmra.mrb[0].mxu0 %v697
    %v733 = vpop.f32.mrb[0].mxu0
    %v734 = vadd.f32 0.0, %v733
    %v735 = vpop.f32.mrb[0].mxu0
    %v736 = vadd.f32 0.0, %v735
    %v737 = vpop.f32.mrb[0].mxu0
    %v738 = vadd.f32 0.0, %v737
    %v739 = vpop.f32.mrb[0].mxu0
    %v740 = vadd.f32 0.0, %v739
    %741 = vdwg.mxu0
    %v742 = vmax.f32 %v680, %v734
    %v743 = vmax.f32 %v682, %v736
    %v744 = vmax.f32 %v684, %v738
    %v745 = vmax.f32 %v686, %v740
    %v746 = vpack.c.bf16 %v744, %v742
    %v747 = vpack.c.bf16 %v745, %v743
    %v748 = vld [vmem:[%s4] sm:$0xf]
    %v749 = vld [vmem:[%s4 + $0x4] sm:$0xf]
    %v750 = vld [vmem:[%s4 + $0x8] sm:$0xf]
    %v751 = vld [vmem:[%s4 + $0xc] sm:$0xf]
    %v752 = vld [vmem:[%s4 + $0x10] sm:$0xf]
    %v753 = vld [vmem:[%s4 + $0x14] sm:$0xf]
    %v754 = vld [vmem:[%s4 + $0x18] sm:$0xf]
    %v755 = vld [vmem:[%s4 + $0x1c] sm:$0xf]
    %v756 = vld [vmem:[%s4 + $0x20] sm:$0xf]
    %v757 = vld [vmem:[%s4 + $0x24] sm:$0xf]
    %v758 = vld [vmem:[%s4 + $0x28] sm:$0xf]
    %v759 = vld [vmem:[%s4 + $0x2c] sm:$0xf]
    %v760 = vld [vmem:[%s4 + $0x30] sm:$0xf]
    %v761 = vld [vmem:[%s4 + $0x34] sm:$0xf]
    %v762 = vld [vmem:[%s4 + $0x38] sm:$0xf]
    %v763 = vld [vmem:[%s4 + $0x3c] sm:$0xf]
    %v764 = vld [vmem:[%s4 + $0x40] sm:$0xf]
    %v765 = vld [vmem:[%s4 + $0x44] sm:$0xf]
    %v766 = vld [vmem:[%s4 + $0x48] sm:$0xf]
    %v767 = vld [vmem:[%s4 + $0x4c] sm:$0xf]
    %v768 = vld [vmem:[%s4 + $0x50] sm:$0xf]
    %v790 = vunpack.c.l.b16 %v748
    %v791 = vunpack.c.l.b16 %v749
    %v792 = vunpack.c.l.b16 %v750
    %v793 = vunpack.c.l.b16 %v751
    %v794 = vunpack.c.l.b16 %v752
    %v795 = vunpack.c.l.b16 %v753
    %v796 = vunpack.c.l.b16 %v754
    %v797 = vunpack.c.l.b16 %v755
    %v798 = vunpack.c.l.b16 %v756
    %v799 = vunpack.c.l.b16 %v757
    %v800 = vunpack.c.l.b16 %v758
    %v801 = vunpack.c.l.b16 %v759
    %v802 = vunpack.c.l.b16 %v760
    %v803 = vunpack.c.l.b16 %v761
    %v804 = vunpack.c.l.b16 %v762
    %v805 = vunpack.c.l.b16 %v763
    %v806 = vunpack.c.l.b16 %v764
    %v807 = vunpack.c.l.b16 %v765
    %v808 = vunpack.c.l.b16 %v766
    %v809 = vunpack.c.l.b16 %v767
    %v810 = vunpack.c.l.b16 %v768
    %v811 = vpack.c.b16 %v791, %v790
    %v812 = vpack.c.b16 %v793, %v792
    %v813 = vpack.c.b16 %v795, %v794
    %v814 = vpack.c.b16 %v797, %v796
    %v815 = vpack.c.b16 %v799, %v798
    %v816 = vpack.c.b16 %v801, %v800
    %v817 = vpack.c.b16 %v803, %v802
    %v818 = vpack.c.b16 %v805, %v804
    %v819 = vpack.c.b16 %v807, %v806
    %v820 = vpack.c.b16 %v809, %v808
    %v821 = vpack.c.b16 %v810, %v810
    %vm832 = vcmask 326656
    %v834 = vsel %vm832, %v747, 0
    %vm836 = vcmask 1043456
    %v838 = vsel %vm836, %v821, 0
    %840 = vmatprep.subr.bf16.mxu0 0
    %841 = vmatpush1.bf16.msra.mxu0 %v811
    %842 = vmatprep.subr.bf16.mxu0 0
    %843 = vmatpush1.bf16.msra.mxu0 %v812
    %844 = vmatprep.subr.bf16.mxu0 0
    %845 = vmatpush1.bf16.msra.mxu0 %v813
    %846 = vmatprep.subr.bf16.mxu0 0
    %847 = vmatpush1.bf16.msra.mxu0 %v814
    %848 = vmatprep.subr.bf16.mxu0 0
    %849 = vmatpush1.bf16.msra.mxu0 %v815
    %850 = vmatprep.subr.bf16.mxu0 0
    %851 = vmatpush1.bf16.msra.mxu0 %v816
    %852 = vmatprep.subr.bf16.mxu0 0
    %853 = vmatpush1.bf16.msra.mxu0 %v817
    %854 = vmatprep.subr.bf16.mxu0 0
    %855 = vmatpush1.bf16.msra.mxu0 %v818
    %856 = vmatprep.subr.bf16.mxu0 0
    %857 = vmatpush1.bf16.msra.mxu0 %v819
    %858 = vmatprep.subr.bf16.mxu0 0
    %859 = vmatpush1.bf16.msra.mxu0 %v820
    %860 = vmatprep.subr.bf16.mxu0 0
    %861 = vmatpush1.bf16.msra.mxu0 %v838
    %862 = vmatprep.subr.bf16.mxu0 0
    %863 = vmatpush1.bf16.msra.mxu0 0
    %864 = vmatprep.subr.bf16.mxu0 0
    %865 = vmatpush1.bf16.msra.mxu0 0
    %866 = vmatprep.subr.bf16.mxu0 0
    %867 = vmatpush1.bf16.msra.mxu0 0
    %868 = vmatprep.subr.bf16.mxu0 0
    %869 = vmatpush1.bf16.msra.mxu0 0
    %870 = vmatprep.subr.bf16.mxu0 0
    %871 = vmatpush1.bf16.msra.mxu0 0
    %872 = vmatprep.mubr.bf16.mxu0 %v834
    %873 = vmatmul.mubr.bf16.gmra.mrb[0].mxu0 %v746
    %v874 = vpop.f32.mrb[0].mxu0
    %v875 = vadd.f32 0.0, %v874
    %v876 = vpop.f32.mrb[0].mxu0
    %v877 = vpop.f32.mrb[0].mxu0
    %v878 = vadd.f32 0.0, %v877
    %v879 = vpop.f32.mrb[0].mxu0
    %880 = vdwg.mxu0
    %s881 = scalar_lea.vmem %s4, 84
    %v882 = vld [vmem:[%s881] sm:$0xf]
    %v883 = vld [vmem:[%s881 + $0x4] sm:$0xf]
    %v884 = vld [vmem:[%s881 + $0x8] sm:$0xf]
    %v885 = vld [vmem:[%s881 + $0xc] sm:$0xf]
    %v886 = vld [vmem:[%s881 + $0x10] sm:$0xf]
    %v887 = vld [vmem:[%s881 + $0x14] sm:$0xf]
    %v888 = vld [vmem:[%s881 + $0x18] sm:$0xf]
    %v889 = vld [vmem:[%s881 + $0x1c] sm:$0xf]
    %v890 = vld [vmem:[%s881 + $0x20] sm:$0xf]
    %v891 = vld [vmem:[%s881 + $0x24] sm:$0xf]
    %v892 = vld [vmem:[%s881 + $0x28] sm:$0xf]
    %v893 = vld [vmem:[%s881 + $0x2c] sm:$0xf]
    %v894 = vld [vmem:[%s881 + $0x30] sm:$0xf]
    %v895 = vld [vmem:[%s881 + $0x34] sm:$0xf]
    %v896 = vld [vmem:[%s881 + $0x38] sm:$0xf]
    %v897 = vld [vmem:[%s881 + $0x3c] sm:$0xf]
    %v898 = vld [vmem:[%s881 + $0x40] sm:$0xf]
    %v899 = vld [vmem:[%s881 + $0x44] sm:$0xf]
    %v900 = vld [vmem:[%s881 + $0x48] sm:$0xf]
    %v901 = vld [vmem:[%s881 + $0x4c] sm:$0xf]
    %v902 = vld [vmem:[%s881 + $0x50] sm:$0xf]
    %v924 = vunpack.c.l.b16 %v882
    %v925 = vunpack.c.l.b16 %v883
    %v926 = vunpack.c.l.b16 %v884
    %v927 = vunpack.c.l.b16 %v885
    %v928 = vunpack.c.l.b16 %v886
    %v929 = vunpack.c.l.b16 %v887
    %v930 = vunpack.c.l.b16 %v888
    %v931 = vunpack.c.l.b16 %v889
    %v932 = vunpack.c.l.b16 %v890
    %v933 = vunpack.c.l.b16 %v891
    %v934 = vunpack.c.l.b16 %v892
    %v935 = vunpack.c.l.b16 %v893
    %v936 = vunpack.c.l.b16 %v894
    %v937 = vunpack.c.l.b16 %v895
    %v938 = vunpack.c.l.b16 %v896
    %v939 = vunpack.c.l.b16 %v897
    %v940 = vunpack.c.l.b16 %v898
    %v941 = vunpack.c.l.b16 %v899
    %v942 = vunpack.c.l.b16 %v900
    %v943 = vunpack.c.l.b16 %v901
    %v944 = vunpack.c.l.b16 %v902
    %v945 = vpack.c.b16 %v925, %v924
    %v946 = vpack.c.b16 %v927, %v926
    %v947 = vpack.c.b16 %v929, %v928
    %v948 = vpack.c.b16 %v931, %v930
    %v949 = vpack.c.b16 %v933, %v932
    %v950 = vpack.c.b16 %v935, %v934
    %v951 = vpack.c.b16 %v937, %v936
    %v952 = vpack.c.b16 %v939, %v938
    %v953 = vpack.c.b16 %v941, %v940
    %v954 = vpack.c.b16 %v943, %v942
    %v955 = vpack.c.b16 %v944, %v944
    %v967 = vsel %vm836, %v955, 0
    %969 = vmatprep.subr.bf16.mxu0 0
    %970 = vmatpush1.bf16.msra.mxu0 %v945
    %971 = vmatprep.subr.bf16.mxu0 0
    %972 = vmatpush1.bf16.msra.mxu0 %v946
    %973 = vmatprep.subr.bf16.mxu0 0
    %974 = vmatpush1.bf16.msra.mxu0 %v947
    %975 = vmatprep.subr.bf16.mxu0 0
    %976 = vmatpush1.bf16.msra.mxu0 %v948
    %977 = vmatprep.subr.bf16.mxu0 0
    %978 = vmatpush1.bf16.msra.mxu0 %v949
    %979 = vmatprep.subr.bf16.mxu0 0
    %980 = vmatpush1.bf16.msra.mxu0 %v950
    %981 = vmatprep.subr.bf16.mxu0 0
    %982 = vmatpush1.bf16.msra.mxu0 %v951
    %983 = vmatprep.subr.bf16.mxu0 0
    %984 = vmatpush1.bf16.msra.mxu0 %v952
    %985 = vmatprep.subr.bf16.mxu0 0
    %986 = vmatpush1.bf16.msra.mxu0 %v953
    %987 = vmatprep.subr.bf16.mxu0 0
    %988 = vmatpush1.bf16.msra.mxu0 %v954
    %989 = vmatprep.subr.bf16.mxu0 0
    %990 = vmatpush1.bf16.msra.mxu0 %v967
    %991 = vmatprep.subr.bf16.mxu0 0
    %992 = vmatpush1.bf16.msra.mxu0 0
    %993 = vmatprep.subr.bf16.mxu0 0
    %994 = vmatpush1.bf16.msra.mxu0 0
    %995 = vmatprep.subr.bf16.mxu0 0
    %996 = vmatpush1.bf16.msra.mxu0 0
    %997 = vmatprep.subr.bf16.mxu0 0
    %998 = vmatpush1.bf16.msra.mxu0 0
    %999 = vmatprep.subr.bf16.mxu0 0
    %1000 = vmatpush1.bf16.msra.mxu0 0
    %1001 = vmatprep.mubr.bf16.mxu0 %v834
    %1002 = vmatmul.mubr.bf16.gmra.mrb[0].mxu0 %v746
    %v1003 = vpop.f32.mrb[0].mxu0
    %v1004 = vadd.f32 0.0, %v1003
    %v1005 = vpop.f32.mrb[0].mxu0
    %v1006 = vpop.f32.mrb[0].mxu0
    %v1007 = vadd.f32 0.0, %v1006
    %v1008 = vpop.f32.mrb[0].mxu0
    %1009 = vdwg.mxu0
    %v1010 = vmax.f32 %v875, %v1004
    %v1011 = vmax.f32 %v878, %v1007
    %v1012 = vpack.c.bf16 %v1011, %v1010
    %v1014 = vshrl.u32 %v1012, 16
    %v1016 = vshll.u32 %v1012, 16
    %v1018 = vrot.slane %v1016, 1
    %v1019 = vor.u32 %v1014, %v1018
    %1020 = vrot.lane.b32.xlu0 %v1019, 84
    %v1021 = vpop.permute.xlu0 %1020
    %v1023 = vrot.slane %v1012, 1
    %1024 = vrot.lane.b32.xlu0 %v1023, 40
    %v1025 = vpop.permute.xlu0 %1024
    %v1026 = vrot.slane %v1014, 1
    %v1027 = vrot.slane %v1016, 2
    %v1028 = vor.u32 %v1026, %v1027
    %1029 = vrot.lane.b32.xlu0 %v1028, 124
    %v1030 = vpop.permute.xlu0 %1029
    %v1031 = vrot.slane %v1012, 2
    %1032 = vrot.lane.b32.xlu0 %v1031, 80
    %v1033 = vpop.permute.xlu0 %1032
    %vm1034 = vcmask 687104
    %v1036 = vsel %vm1034, %v1012, %v1021
    %v1039 = vsel %vm832, %v1021, %v1025
    %vm1040 = vcmask 1014784
    %v1042 = vsel %vm1040, %v1039, %v1030
    %vm1044 = vcmask 654336
    %v1046 = vsel %vm1044, %v1030, %v1033
    %v1048 = vld [vmem:[%s5] sm:$0xff]
    %v1049 = vld [vmem:[%s5 + $0x8] sm:$0xff]
    %v1050 = vld [vmem:[%s5 + $0x10] sm:$0xff]
    %v1051 = vld [vmem:[%s5 + $0x18] sm:$0xff]
    %v1052 = vld [vmem:[%s5 + $0x20] sm:$0xff]
    %v1053 = vld [vmem:[%s5 + $0x28] sm:$0xff]
    %v1054 = vld [vmem:[%s5 + $0x30] sm:$0xff]
    %v1055 = vld [vmem:[%s5 + $0x38] sm:$0xff]
    %v1056 = vld [vmem:[%s5 + $0x40] sm:$0xff]
    %v1057 = vld [vmem:[%s5 + $0x48] sm:$0xff]
    %v1058 = vld [vmem:[%s5 + $0x50] sm:$0xff]
    %v1059 = vld [vmem:[%s5 + $0x58] sm:$0xff]
    %v1060 = vld [vmem:[%s5 + $0x60] sm:$0xff]
    %v1061 = vld [vmem:[%s5 + $0x68] sm:$0xff]
    %v1062 = vld [vmem:[%s5 + $0x70] sm:$0xff]
    %v1063 = vld [vmem:[%s5 + $0x78] sm:$0xff]
    %v1064 = vld [vmem:[%s5 + $0x80] sm:$0xff]
    %v1065 = vld [vmem:[%s5 + $0x88] sm:$0xff]
    %v1066 = vld [vmem:[%s5 + $0x90] sm:$0xff]
    %v1067 = vld [vmem:[%s5 + $0x98] sm:$0xff]
    %v1068 = vld [vmem:[%s5 + $0xa0] sm:$0xff]
    %v1069 = vld [vmem:[%s5 + $0xa8] sm:$0xff]
    %v1070 = vld [vmem:[%s5 + $0xb0] sm:$0xff]
    %v1071 = vld [vmem:[%s5 + $0xb8] sm:$0xff]
    %v1072 = vld [vmem:[%s5 + $0xc0] sm:$0xff]
    %v1073 = vld [vmem:[%s5 + $0xc8] sm:$0xff]
    %v1074 = vld [vmem:[%s5 + $0xd0] sm:$0xff]
    %v1075 = vld [vmem:[%s5 + $0xd8] sm:$0xff]
    %v1076 = vld [vmem:[%s5 + $0xe0] sm:$0xff]
    %v1077 = vld [vmem:[%s5 + $0xe8] sm:$0xff]
    %v1078 = vld [vmem:[%s5 + $0xf0] sm:$0xff]
    %v1079 = vld [vmem:[%s5 + $0xf8] sm:$0xff]
    %v1080 = vld [vmem:[%s5 + $0x100] sm:$0xff]
    %v1081 = vld [vmem:[%s5 + $0x108] sm:$0xff]
    %v1082 = vld [vmem:[%s5 + $0x110] sm:$0xff]
    %v1083 = vld [vmem:[%s5 + $0x118] sm:$0xff]
    %v1084 = vld [vmem:[%s5 + $0x120] sm:$0xff]
    %v1085 = vld [vmem:[%s5 + $0x128] sm:$0xff]
    %v1086 = vld [vmem:[%s5 + $0x130] sm:$0xff]
    %v1087 = vld [vmem:[%s5 + $0x138] sm:$0xff]
    %v1088 = vld [vmem:[%s5 + $0x140] sm:$0xff]
    %v1089 = vld [vmem:[%s5 + $0x148] sm:$0xff]
    %v1090 = vld [vmem:[%s5 + $0x150] sm:$0xff]
    %v1091 = vld [vmem:[%s5 + $0x158] sm:$0xff]
    %v1092 = vld [vmem:[%s5 + $0x160] sm:$0xff]
    %v1093 = vld [vmem:[%s5 + $0x168] sm:$0xff]
    %v1094 = vld [vmem:[%s5 + $0x170] sm:$0xff]
    %v1095 = vld [vmem:[%s5 + $0x178] sm:$0xff]
    %v1096 = vld [vmem:[%s5 + $0x180] sm:$0xff]
    %v1097 = vld [vmem:[%s5 + $0x188] sm:$0xff]
    %v1098 = vld [vmem:[%s5 + $0x190] sm:$0xff]
    %v1099 = vld [vmem:[%s5 + $0x198] sm:$0xff]
    %v1100 = vld [vmem:[%s5 + $0x1a0] sm:$0x33]
    %v1101 = vld [vmem:[%s6] sm:$0x3]
    %v1103 = vlaneseq
    %v1104 = vshrl.u32 %v1103, 7
    %v1105 = vsub.s32 0, %v1104
    %v1106 = vrot.slane %v1101, %v1105
    %v1107 = vlaneseq
    %v1108 = vshrl.u32 %v1107, 7
    %v1109 = vsub.s32 1, %v1108
    %v1110 = vrot.slane %v1101, %v1109
    %v1166 = vunpack.c.l.b16 %v1048
    %v1167 = vunpack.c.h.b16 %v1048
    %v1168 = vunpack.c.l.b16 %v1049
    %v1169 = vunpack.c.h.b16 %v1049
    %v1170 = vunpack.c.l.b16 %v1050
    %v1171 = vunpack.c.h.b16 %v1050
    %v1172 = vunpack.c.l.b16 %v1051
    %v1173 = vunpack.c.h.b16 %v1051
    %v1174 = vunpack.c.l.b16 %v1052
    %v1175 = vunpack.c.h.b16 %v1052
    %v1176 = vunpack.c.l.b16 %v1053
    %v1177 = vunpack.c.h.b16 %v1053
    %v1178 = vunpack.c.l.b16 %v1054
    %v1179 = vunpack.c.h.b16 %v1054
    %v1180 = vunpack.c.l.b16 %v1055
    %v1181 = vunpack.c.h.b16 %v1055
    %v1182 = vunpack.c.l.b16 %v1056
    %v1183 = vunpack.c.h.b16 %v1056
    %v1184 = vunpack.c.l.b16 %v1057
    %v1185 = vunpack.c.h.b16 %v1057
    %v1186 = vunpack.c.l.b16 %v1058
    %v1187 = vunpack.c.h.b16 %v1058
    %v1188 = vunpack.c.l.b16 %v1059
    %v1189 = vunpack.c.h.b16 %v1059
    %v1190 = vunpack.c.l.b16 %v1060
    %v1191 = vunpack.c.h.b16 %v1060
    %v1192 = vunpack.c.l.b16 %v1061
    %v1193 = vunpack.c.h.b16 %v1061
    %v1194 = vunpack.c.l.b16 %v1062
    %v1195 = vunpack.c.h.b16 %v1062
    %v1196 = vunpack.c.l.b16 %v1063
    %v1197 = vunpack.c.h.b16 %v1063
    %v1198 = vunpack.c.l.b16 %v1064
    %v1199 = vunpack.c.h.b16 %v1064
    %v1200 = vunpack.c.l.b16 %v1065
    %v1201 = vunpack.c.h.b16 %v1065
    %v1202 = vunpack.c.l.b16 %v1066
    %v1203 = vunpack.c.h.b16 %v1066
    %v1204 = vunpack.c.l.b16 %v1067
    %v1205 = vunpack.c.h.b16 %v1067
    %v1206 = vunpack.c.l.b16 %v1068
    %v1207 = vunpack.c.h.b16 %v1068
    %v1208 = vunpack.c.l.b16 %v1069
    %v1209 = vunpack.c.h.b16 %v1069
    %v1210 = vunpack.c.l.b16 %v1070
    %v1211 = vunpack.c.h.b16 %v1070
    %v1212 = vunpack.c.l.b16 %v1071
    %v1213 = vunpack.c.h.b16 %v1071
    %v1214 = vunpack.c.l.b16 %v1072
    %v1215 = vunpack.c.h.b16 %v1072
    %v1216 = vunpack.c.l.b16 %v1073
    %v1217 = vunpack.c.h.b16 %v1073
    %v1218 = vunpack.c.l.b16 %v1074
    %v1219 = vunpack.c.h.b16 %v1074
    %v1220 = vunpack.c.l.b16 %v1075
    %v1221 = vunpack.c.h.b16 %v1075
    %v1222 = vunpack.c.l.b16 %v1076
    %v1223 = vunpack.c.h.b16 %v1076
    %v1224 = vunpack.c.l.b16 %v1077
    %v1225 = vunpack.c.h.b16 %v1077
    %v1226 = vunpack.c.l.b16 %v1078
    %v1227 = vunpack.c.h.b16 %v1078
    %v1228 = vunpack.c.l.b16 %v1079
    %v1229 = vunpack.c.h.b16 %v1079
    %v1230 = vunpack.c.l.b16 %v1080
    %v1231 = vunpack.c.h.b16 %v1080
    %v1232 = vunpack.c.l.b16 %v1081
    %v1233 = vunpack.c.h.b16 %v1081
    %v1234 = vunpack.c.l.b16 %v1082
    %v1235 = vunpack.c.h.b16 %v1082
    %v1236 = vunpack.c.l.b16 %v1083
    %v1237 = vunpack.c.h.b16 %v1083
    %v1238 = vunpack.c.l.b16 %v1084
    %v1239 = vunpack.c.h.b16 %v1084
    %v1240 = vunpack.c.l.b16 %v1085
    %v1241 = vunpack.c.h.b16 %v1085
    %v1242 = vunpack.c.l.b16 %v1086
    %v1243 = vunpack.c.h.b16 %v1086
    %v1244 = vunpack.c.l.b16 %v1087
    %v1245 = vunpack.c.h.b16 %v1087
    %v1246 = vunpack.c.l.b16 %v1088
    %v1247 = vunpack.c.h.b16 %v1088
    %v1248 = vunpack.c.l.b16 %v1089
    %v1249 = vunpack.c.h.b16 %v1089
    %v1250 = vunpack.c.l.b16 %v1090
    %v1251 = vunpack.c.h.b16 %v1090
    %v1252 = vunpack.c.l.b16 %v1091
    %v1253 = vunpack.c.h.b16 %v1091
    %v1254 = vunpack.c.l.b16 %v1092
    %v1255 = vunpack.c.h.b16 %v1092
    %v1256 = vunpack.c.l.b16 %v1093
    %v1257 = vunpack.c.h.b16 %v1093
    %v1258 = vunpack.c.l.b16 %v1094
    %v1259 = vunpack.c.h.b16 %v1094
    %v1260 = vunpack.c.l.b16 %v1095
    %v1261 = vunpack.c.h.b16 %v1095
    %v1262 = vunpack.c.l.b16 %v1096
    %v1263 = vunpack.c.h.b16 %v1096
    %v1264 = vunpack.c.l.b16 %v1097
    %v1265 = vunpack.c.h.b16 %v1097
    %v1266 = vunpack.c.l.b16 %v1098
    %v1267 = vunpack.c.h.b16 %v1098
    %v1268 = vunpack.c.l.b16 %v1099
    %v1269 = vunpack.c.h.b16 %v1099
    %v1270 = vunpack.c.l.b16 %v1100
    %v1271 = vunpack.c.h.b16 %v1100
    %v1272 = vpack.c.b16 %v1168, %v1166
    %v1273 = vpack.c.b16 %v1169, %v1167
    %v1274 = vpack.c.b16 %v1172, %v1170
    %v1275 = vpack.c.b16 %v1173, %v1171
    %v1276 = vpack.c.b16 %v1176, %v1174
    %v1277 = vpack.c.b16 %v1177, %v1175
    %v1278 = vpack.c.b16 %v1180, %v1178
    %v1279 = vpack.c.b16 %v1181, %v1179
    %v1280 = vpack.c.b16 %v1184, %v1182
    %v1281 = vpack.c.b16 %v1185, %v1183
    %v1282 = vpack.c.b16 %v1188, %v1186
    %v1283 = vpack.c.b16 %v1189, %v1187
    %v1284 = vpack.c.b16 %v1192, %v1190
    %v1285 = vpack.c.b16 %v1193, %v1191
    %v1286 = vpack.c.b16 %v1196, %v1194
    %v1287 = vpack.c.b16 %v1197, %v1195
    %v1288 = vpack.c.b16 %v1200, %v1198
    %v1289 = vpack.c.b16 %v1201, %v1199
    %v1290 = vpack.c.b16 %v1204, %v1202
    %v1291 = vpack.c.b16 %v1205, %v1203
    %v1292 = vpack.c.b16 %v1208, %v1206
    %v1293 = vpack.c.b16 %v1209, %v1207
    %v1294 = vpack.c.b16 %v1212, %v1210
    %v1295 = vpack.c.b16 %v1213, %v1211
    %v1296 = vpack.c.b16 %v1216, %v1214
    %v1297 = vpack.c.b16 %v1217, %v1215
    %v1298 = vpack.c.b16 %v1220, %v1218
    %v1299 = vpack.c.b16 %v1221, %v1219
    %v1300 = vpack.c.b16 %v1224, %v1222
    %v1301 = vpack.c.b16 %v1225, %v1223
    %v1302 = vpack.c.b16 %v1228, %v1226
    %v1303 = vpack.c.b16 %v1229, %v1227
    %v1304 = vpack.c.b16 %v1232, %v1230
    %v1305 = vpack.c.b16 %v1233, %v1231
    %v1306 = vpack.c.b16 %v1236, %v1234
    %v1307 = vpack.c.b16 %v1237, %v1235
    %v1308 = vpack.c.b16 %v1240, %v1238
    %v1309 = vpack.c.b16 %v1241, %v1239
    %v1310 = vpack.c.b16 %v1244, %v1242
    %v1311 = vpack.c.b16 %v1245, %v1243
    %v1312 = vpack.c.b16 %v1248, %v1246
    %v1313 = vpack.c.b16 %v1249, %v1247
    %v1314 = vpack.c.b16 %v1252, %v1250
    %v1315 = vpack.c.b16 %v1253, %v1251
    %v1316 = vpack.c.b16 %v1256, %v1254
    %v1317 = vpack.c.b16 %v1257, %v1255
    %v1318 = vpack.c.b16 %v1260, %v1258
    %v1319 = vpack.c.b16 %v1261, %v1259
    %v1320 = vpack.c.b16 %v1264, %v1262
    %v1321 = vpack.c.b16 %v1265, %v1263
    %v1322 = vpack.c.b16 %v1268, %v1266
    %v1323 = vpack.c.b16 %v1269, %v1267
    %v1324 = vpack.c.b16 %v1270, %v1270
    %v1325 = vpack.c.b16 %v1271, %v1271
    %vm1378 = vcmask 293888
    %v1379 = vsel %vm1378, %v1033, 0
    %vm1381 = vcmask 1041408
    %v1383 = vsel %vm1381, %v1324, 0
    %v1386 = vsel %vm1381, %v1325, 0
    %1388 = vmatprep.subr.bf16.mxu0 %v1273
    %1389 = vmatpush1.bf16.msra.mxu0 %v1272
    %1390 = vmatprep.subr.bf16.mxu0 %v1275
    %1391 = vmatpush1.bf16.msra.mxu0 %v1274
    %1392 = vmatprep.subr.bf16.mxu0 %v1277
    %1393 = vmatpush1.bf16.msra.mxu0 %v1276
    %1394 = vmatprep.subr.bf16.mxu0 %v1279
    %1395 = vmatpush1.bf16.msra.mxu0 %v1278
    %1396 = vmatprep.subr.bf16.mxu0 %v1281
    %1397 = vmatpush1.bf16.msra.mxu0 %v1280
    %1398 = vmatprep.subr.bf16.mxu0 %v1283
    %1399 = vmatpush1.bf16.msra.mxu0 %v1282
    %1400 = vmatprep.subr.bf16.mxu0 %v1285
    %1401 = vmatpush1.bf16.msra.mxu0 %v1284
    %1402 = vmatprep.subr.bf16.mxu0 %v1287
    %1403 = vmatpush1.bf16.msra.mxu0 %v1286
    %1404 = vmatprep.subr.bf16.mxu0 %v1289
    %1405 = vmatpush1.bf16.msra.mxu0 %v1288
    %1406 = vmatprep.subr.bf16.mxu0 %v1291
    %1407 = vmatpush1.bf16.msra.mxu0 %v1290
    %1408 = vmatprep.subr.bf16.mxu0 %v1293
    %1409 = vmatpush1.bf16.msra.mxu0 %v1292
    %1410 = vmatprep.subr.bf16.mxu0 %v1295
    %1411 = vmatpush1.bf16.msra.mxu0 %v1294
    %1412 = vmatprep.subr.bf16.mxu0 %v1297
    %1413 = vmatpush1.bf16.msra.mxu0 %v1296
    %1414 = vmatprep.subr.bf16.mxu0 %v1299
    %1415 = vmatpush1.bf16.msra.mxu0 %v1298
    %1416 = vmatprep.subr.bf16.mxu0 %v1301
    %1417 = vmatpush1.bf16.msra.mxu0 %v1300
    %1418 = vmatprep.subr.bf16.mxu0 %v1303
    %1419 = vmatpush1.bf16.msra.mxu0 %v1302
    %1420 = vmatprep.mubr.bf16.mxu0 %v1042
    %1421 = vmatmul.mubr.bf16.gmra.mrb[0].mxu0 %v1036
    %v1422 = vpop.f32.mrb[0].mxu0
    %v1423 = vadd.f32 %v1106, %v1422
    %v1424 = vpop.f32.mrb[0].mxu0
    %v1425 = vadd.f32 %v1110, %v1424
    %v1426 = vpop.f32.mrb[0].mxu0
    %v1427 = vadd.f32 %v1106, %v1426
    %v1428 = vpop.f32.mrb[0].mxu0
    %v1429 = vadd.f32 %v1110, %v1428
    %1430 = vdwg.mxu0
    %1431 = vmatprep.subr.bf16.mxu0 %v1305
    %1432 = vmatpush1.bf16.msra.mxu0 %v1304
    %1433 = vmatprep.subr.bf16.mxu0 %v1307
    %1434 = vmatpush1.bf16.msra.mxu0 %v1306
    %1435 = vmatprep.subr.bf16.mxu0 %v1309
    %1436 = vmatpush1.bf16.msra.mxu0 %v1308
    %1437 = vmatprep.subr.bf16.mxu0 %v1311
    %1438 = vmatpush1.bf16.msra.mxu0 %v1310
    %1439 = vmatprep.subr.bf16.mxu0 %v1313
    %1440 = vmatpush1.bf16.msra.mxu0 %v1312
    %1441 = vmatprep.subr.bf16.mxu0 %v1315
    %1442 = vmatpush1.bf16.msra.mxu0 %v1314
    %1443 = vmatprep.subr.bf16.mxu0 %v1317
    %1444 = vmatpush1.bf16.msra.mxu0 %v1316
    %1445 = vmatprep.subr.bf16.mxu0 %v1319
    %1446 = vmatpush1.bf16.msra.mxu0 %v1318
    %1447 = vmatprep.subr.bf16.mxu0 %v1321
    %1448 = vmatpush1.bf16.msra.mxu0 %v1320
    %1449 = vmatprep.subr.bf16.mxu0 %v1323
    %1450 = vmatpush1.bf16.msra.mxu0 %v1322
    %1451 = vmatprep.subr.bf16.mxu0 %v1386
    %1452 = vmatpush1.bf16.msra.mxu0 %v1383
    %1453 = vmatprep.subr.bf16.mxu0 0
    %1454 = vmatpush1.bf16.msra.mxu0 0
    %1455 = vmatprep.subr.bf16.mxu0 0
    %1456 = vmatpush1.bf16.msra.mxu0 0
    %1457 = vmatprep.subr.bf16.mxu0 0
    %1458 = vmatpush1.bf16.msra.mxu0 0
    %1459 = vmatprep.subr.bf16.mxu0 0
    %1460 = vmatpush1.bf16.msra.mxu0 0
    %1461 = vmatprep.subr.bf16.mxu0 0
    %1462 = vmatpush1.bf16.msra.mxu0 0
    %1463 = vmatprep.mubr.bf16.mxu0 %v1379
    %1464 = vmatmul.mubr.bf16.gmra.mrb[0].mxu0 %v1046
    %v1465 = vpop.f32.mrb[0].mxu0
    %v1466 = vadd.f32 %v1423, %v1465
    %v1467 = vpop.f32.mrb[0].mxu0
    %v1468 = vadd.f32 %v1425, %v1467
    %v1469 = vpop.f32.mrb[0].mxu0
    %v1470 = vadd.f32 %v1427, %v1469
    %v1471 = vpop.f32.mrb[0].mxu0
    %v1472 = vadd.f32 %v1429, %v1471
    %1473 = vdwg.mxu0
    %v1474 = vmax.f32 %v1466, 0.0
    %v1475 = vmax.f32 %v1468, 0.0
    %v1476 = vmax.f32 %v1470, 0.0
    %v1477 = vmax.f32 %v1472, 0.0
    %v1478 = vpack.c.bf16 %v1476, %v1474
    %v1479 = vpack.c.bf16 %v1477, %v1475
    %v1480 = vld [vmem:[%s7] sm:$0x7]
    %vm1481 = vcmask 80896
    %v1483 = vsel %vm1481, %v1480, 0
    %vm1485 = vcmask 1044480
    %v1487 = vsel %vm1485, %v1478, 0
    %v1490 = vsel %vm1485, %v1479, 0
    %1492 = vmatprep.subr.bf16.mxu0 %v1490
    %1493 = vmatpush1.bf16.msra.mxu0 %v1487
    %1494 = vmatprep.subr.bf16.mxu0 0
    %1495 = vmatpush1.bf16.msra.mxu0 0
    %1496 = vmatprep.subr.bf16.mxu0 0
    %1497 = vmatpush1.bf16.msra.mxu0 0
    %1498 = vmatprep.subr.bf16.mxu0 0
    %1499 = vmatpush1.bf16.msra.mxu0 0
    %1500 = vmatprep.subr.bf16.mxu0 0
    %1501 = vmatpush1.bf16.msra.mxu0 0
    %1502 = vmatprep.subr.bf16.mxu0 0
    %1503 = vmatpush1.bf16.msra.mxu0 0
    %1504 = vmatprep.subr.bf16.mxu0 0
    %1505 = vmatpush1.bf16.msra.mxu0 0
    %1506 = vmatprep.subr.bf16.mxu0 0
    %1507 = vmatpush1.bf16.msra.mxu0 0
    %1508 = vmatprep.subr.bf16.mxu0 0
    %1509 = vmatpush1.bf16.msra.mxu0 0
    %1510 = vmatprep.subr.bf16.mxu0 0
    %1511 = vmatpush1.bf16.msra.mxu0 0
    %1512 = vmatprep.subr.bf16.mxu0 0
    %1513 = vmatpush1.bf16.msra.mxu0 0
    %1514 = vmatprep.subr.bf16.mxu0 0
    %1515 = vmatpush1.bf16.msra.mxu0 0
    %1516 = vmatprep.subr.bf16.mxu0 0
    %1517 = vmatpush1.bf16.msra.mxu0 0
    %1518 = vmatprep.subr.bf16.mxu0 0
    %1519 = vmatpush1.bf16.msra.mxu0 0
    %1520 = vmatprep.subr.bf16.mxu0 0
    %1521 = vmatpush1.bf16.msra.mxu0 0
    %1522 = vmatprep.subr.bf16.mxu0 0
    %1523 = vmatpush1.bf16.msra.mxu0 0
    %1524 = vmatprep.mubr.bf16.mxu0 0
    %1525 = vmatmul.mubr.bf16.gmra.mrb[0].mxu0 %v1483
    %v1526 = vpop.f32.mrb[0].mxu0
    %v1527 = vadd.f32 0.0, %v1526
    %v1528 = vpop.f32.mrb[0].mxu0
    %v1529 = vadd.f32 0.0, %v1528
    %v1530 = vpop.f32.mrb[0].mxu0
    %v1531 = vpop.f32.mrb[0].mxu0
    %1532 = vdwg.mxu0
    %s1533 = scalar_lea.vmem %s7, 4
    %v1534 = vld [vmem:[%s1533] sm:$0x7]
    %v1536 = vsel %vm1481, %v1534, 0
    %1538 = vmatprep.subr.bf16.mxu0 %v1490
    %1539 = vmatpush1.bf16.msra.mxu0 %v1487
    %1540 = vmatprep.subr.bf16.mxu0 0
    %1541 = vmatpush1.bf16.msra.mxu0 0
    %1542 = vmatprep.subr.bf16.mxu0 0
    %1543 = vmatpush1.bf16.msra.mxu0 0
    %1544 = vmatprep.subr.bf16.mxu0 0
    %1545 = vmatpush1.bf16.msra.mxu0 0
    %1546 = vmatprep.subr.bf16.mxu0 0
    %1547 = vmatpush1.bf16.msra.mxu0 0
    %1548 = vmatprep.subr.bf16.mxu0 0
    %1549 = vmatpush1.bf16.msra.mxu0 0
    %1550 = vmatprep.subr.bf16.mxu0 0
    %1551 = vmatpush1.bf16.msra.mxu0 0
    %1552 = vmatprep.subr.bf16.mxu0 0
    %1553 = vmatpush1.bf16.msra.mxu0 0
    %1554 = vmatprep.subr.bf16.mxu0 0
    %1555 = vmatpush1.bf16.msra.mxu0 0
    %1556 = vmatprep.subr.bf16.mxu0 0
    %1557 = vmatpush1.bf16.msra.mxu0 0
    %1558 = vmatprep.subr.bf16.mxu0 0
    %1559 = vmatpush1.bf16.msra.mxu0 0
    %1560 = vmatprep.subr.bf16.mxu0 0
    %1561 = vmatpush1.bf16.msra.mxu0 0
    %1562 = vmatprep.subr.bf16.mxu0 0
    %1563 = vmatpush1.bf16.msra.mxu0 0
    %1564 = vmatprep.subr.bf16.mxu0 0
    %1565 = vmatpush1.bf16.msra.mxu0 0
    %1566 = vmatprep.subr.bf16.mxu0 0
    %1567 = vmatpush1.bf16.msra.mxu0 0
    %1568 = vmatprep.subr.bf16.mxu0 0
    %1569 = vmatpush1.bf16.msra.mxu0 0
    %1570 = vmatprep.mubr.bf16.mxu0 0
    %1571 = vmatmul.mubr.bf16.gmra.mrb[0].mxu0 %v1536
    %v1572 = vpop.f32.mrb[0].mxu0
    %v1573 = vadd.f32 0.0, %v1572
    %v1574 = vpop.f32.mrb[0].mxu0
    %v1575 = vadd.f32 0.0, %v1574
    %v1576 = vpop.f32.mrb[0].mxu0
    %v1577 = vpop.f32.mrb[0].mxu0
    %1578 = vdwg.mxu0
    %v1579 = vmax.f32 %v1527, %v1573
    %v1580 = vmax.f32 %v1529, %v1575
    %v1581 = vpack.c.bf16 %v1579, %v1579
    %v1582 = vpack.c.bf16 %v1580, %v1580
    %v1583 = vld [vmem:[%s8] sm:$0xf]
    %v1584 = vld [vmem:[%s8 + $0x4] sm:$0xf]
    %v1585 = vld [vmem:[%s8 + $0x8] sm:$0xf]
    %v1586 = vld [vmem:[%s8 + $0xc] sm:$0xf]
    %v1587 = vld [vmem:[%s8 + $0x10] sm:$0xf]
    %v1588 = vld [vmem:[%s8 + $0x14] sm:$0xf]
    %v1589 = vld [vmem:[%s8 + $0x18] sm:$0xf]
    %v1590 = vld [vmem:[%s8 + $0x1c] sm:$0xf]
    %v1591 = vld [vmem:[%s8 + $0x20] sm:$0xf]
    %v1592 = vld [vmem:[%s8 + $0x24] sm:$0xf]
    %v1593 = vld [vmem:[%s8 + $0x28] sm:$0xf]
    %v1594 = vld [vmem:[%s8 + $0x2c] sm:$0xf]
    %v1595 = vld [vmem:[%s8 + $0x30] sm:$0xf]
    %v1596 = vld [vmem:[%s8 + $0x34] sm:$0xf]
    %v1597 = vld [vmem:[%s8 + $0x38] sm:$0xf]
    %v1598 = vld [vmem:[%s8 + $0x3c] sm:$0xf]
    %v1599 = vld [vmem:[%s8 + $0x40] sm:$0xf]
    %v1600 = vld [vmem:[%s8 + $0x44] sm:$0xf]
    %v1601 = vld [vmem:[%s8 + $0x48] sm:$0xf]
    %v1602 = vld [vmem:[%s8 + $0x4c] sm:$0xf]
    %v1623 = vunpack.c.l.b16 %v1583
    %v1624 = vunpack.c.l.b16 %v1584
    %v1625 = vunpack.c.l.b16 %v1585
    %v1626 = vunpack.c.l.b16 %v1586
    %v1627 = vunpack.c.l.b16 %v1587
    %v1628 = vunpack.c.l.b16 %v1588
    %v1629 = vunpack.c.l.b16 %v1589
    %v1630 = vunpack.c.l.b16 %v1590
    %v1631 = vunpack.c.l.b16 %v1591
    %v1632 = vunpack.c.l.b16 %v1592
    %v1633 = vunpack.c.l.b16 %v1593
    %v1634 = vunpack.c.l.b16 %v1594
    %v1635 = vunpack.c.l.b16 %v1595
    %v1636 = vunpack.c.l.b16 %v1596
    %v1637 = vunpack.c.l.b16 %v1597
    %v1638 = vunpack.c.l.b16 %v1598
    %v1639 = vunpack.c.l.b16 %v1599
    %v1640 = vunpack.c.l.b16 %v1600
    %v1641 = vunpack.c.l.b16 %v1601
    %v1642 = vunpack.c.l.b16 %v1602
    %v1643 = vpack.c.b16 %v1624, %v1623
    %v1644 = vpack.c.b16 %v1626, %v1625
    %v1645 = vpack.c.b16 %v1628, %v1627
    %v1646 = vpack.c.b16 %v1630, %v1629
    %v1647 = vpack.c.b16 %v1632, %v1631
    %v1648 = vpack.c.b16 %v1634, %v1633
    %v1649 = vpack.c.b16 %v1636, %v1635
    %v1650 = vpack.c.b16 %v1638, %v1637
    %v1651 = vpack.c.b16 %v1640, %v1639
    %v1652 = vpack.c.b16 %v1642, %v1641
    %v1664 = vsel %vm124, %v1582, 0
    %1666 = vmatprep.subr.bf16.mxu0 0
    %1667 = vmatpush1.bf16.msra.mxu0 %v1643
    %1668 = vmatprep.subr.bf16.mxu0 0
    %1669 = vmatpush1.bf16.msra.mxu0 %v1644
    %1670 = vmatprep.subr.bf16.mxu0 0
    %1671 = vmatpush1.bf16.msra.mxu0 %v1645
    %1672 = vmatprep.subr.bf16.mxu0 0
    %1673 = vmatpush1.bf16.msra.mxu0 %v1646
    %1674 = vmatprep.subr.bf16.mxu0 0
    %1675 = vmatpush1.bf16.msra.mxu0 %v1647
    %1676 = vmatprep.subr.bf16.mxu0 0
    %1677 = vmatpush1.bf16.msra.mxu0 %v1648
    %1678 = vmatprep.subr.bf16.mxu0 0
    %1679 = vmatpush1.bf16.msra.mxu0 %v1649
    %1680 = vmatprep.subr.bf16.mxu0 0
    %1681 = vmatpush1.bf16.msra.mxu0 %v1650
    %1682 = vmatprep.subr.bf16.mxu0 0
    %1683 = vmatpush1.bf16.msra.mxu0 %v1651
    %1684 = vmatprep.subr.bf16.mxu0 0
    %1685 = vmatpush1.bf16.msra.mxu0 %v1652
    %1686 = vmatprep.subr.bf16.mxu0 0
    %1687 = vmatpush1.bf16.msra.mxu0 0
    %1688 = vmatprep.subr.bf16.mxu0 0
    %1689 = vmatpush1.bf16.msra.mxu0 0
    %1690 = vmatprep.subr.bf16.mxu0 0
    %1691 = vmatpush1.bf16.msra.mxu0 0
    %1692 = vmatprep.subr.bf16.mxu0 0
    %1693 = vmatpush1.bf16.msra.mxu0 0
    %1694 = vmatprep.subr.bf16.mxu0 0
    %1695 = vmatpush1.bf16.msra.mxu0 0
    %1696 = vmatprep.subr.bf16.mxu0 0
    %1697 = vmatpush1.bf16.msra.mxu0 0
    %1698 = vmatprep.mubr.bf16.mxu0 %v1664
    %1699 = vmatmul.mubr.bf16.gmra.mrb[0].mxu0 %v1581
    %v1700 = vpop.f32.mrb[0].mxu0
    %v1701 = vadd.f32 0.0, %v1700
    %v1702 = vpop.f32.mrb[0].mxu0
    %v1703 = vpop.f32.mrb[0].mxu0
    %v1704 = vpop.f32.mrb[0].mxu0
    %1705 = vdwg.mxu0
    %s1706 = scalar_lea.vmem %s8, 80
    %v1707 = vld [vmem:[%s1706] sm:$0xf]
    %v1708 = vld [vmem:[%s1706 + $0x4] sm:$0xf]
    %v1709 = vld [vmem:[%s1706 + $0x8] sm:$0xf]
    %v1710 = vld [vmem:[%s1706 + $0xc] sm:$0xf]
    %v1711 = vld [vmem:[%s1706 + $0x10] sm:$0xf]
    %v1712 = vld [vmem:[%s1706 + $0x14] sm:$0xf]
    %v1713 = vld [vmem:[%s1706 + $0x18] sm:$0xf]
    %v1714 = vld [vmem:[%s1706 + $0x1c] sm:$0xf]
    %v1715 = vld [vmem:[%s1706 + $0x20] sm:$0xf]
    %v1716 = vld [vmem:[%s1706 + $0x24] sm:$0xf]
    %v1717 = vld [vmem:[%s1706 + $0x28] sm:$0xf]
    %v1718 = vld [vmem:[%s1706 + $0x2c] sm:$0xf]
    %v1719 = vld [vmem:[%s1706 + $0x30] sm:$0xf]
    %v1720 = vld [vmem:[%s1706 + $0x34] sm:$0xf]
    %v1721 = vld [vmem:[%s1706 + $0x38] sm:$0xf]
    %v1722 = vld [vmem:[%s1706 + $0x3c] sm:$0xf]
    %v1723 = vld [vmem:[%s1706 + $0x40] sm:$0xf]
    %v1724 = vld [vmem:[%s1706 + $0x44] sm:$0xf]
    %v1725 = vld [vmem:[%s1706 + $0x48] sm:$0xf]
    %v1726 = vld [vmem:[%s1706 + $0x4c] sm:$0xf]
    %v1747 = vunpack.c.l.b16 %v1707
    %v1748 = vunpack.c.l.b16 %v1708
    %v1749 = vunpack.c.l.b16 %v1709
    %v1750 = vunpack.c.l.b16 %v1710
    %v1751 = vunpack.c.l.b16 %v1711
    %v1752 = vunpack.c.l.b16 %v1712
    %v1753 = vunpack.c.l.b16 %v1713
    %v1754 = vunpack.c.l.b16 %v1714
    %v1755 = vunpack.c.l.b16 %v1715
    %v1756 = vunpack.c.l.b16 %v1716
    %v1757 = vunpack.c.l.b16 %v1717
    %v1758 = vunpack.c.l.b16 %v1718
    %v1759 = vunpack.c.l.b16 %v1719
    %v1760 = vunpack.c.l.b16 %v1720
    %v1761 = vunpack.c.l.b16 %v1721
    %v1762 = vunpack.c.l.b16 %v1722
    %v1763 = vunpack.c.l.b16 %v1723
    %v1764 = vunpack.c.l.b16 %v1724
    %v1765 = vunpack.c.l.b16 %v1725
    %v1766 = vunpack.c.l.b16 %v1726
    %v1767 = vpack.c.b16 %v1748, %v1747
    %v1768 = vpack.c.b16 %v1750, %v1749
    %v1769 = vpack.c.b16 %v1752, %v1751
    %v1770 = vpack.c.b16 %v1754, %v1753
    %v1771 = vpack.c.b16 %v1756, %v1755
    %v1772 = vpack.c.b16 %v1758, %v1757
    %v1773 = vpack.c.b16 %v1760, %v1759
    %v1774 = vpack.c.b16 %v1762, %v1761
    %v1775 = vpack.c.b16 %v1764, %v1763
    %v1776 = vpack.c.b16 %v1766, %v1765
    %1787 = vmatprep.subr.bf16.mxu0 0
    %1788 = vmatpush1.bf16.msra.mxu0 %v1767
    %1789 = vmatprep.subr.bf16.mxu0 0
    %1790 = vmatpush1.bf16.msra.mxu0 %v1768
    %1791 = vmatprep.subr.bf16.mxu0 0
    %1792 = vmatpush1.bf16.msra.mxu0 %v1769
    %1793 = vmatprep.subr.bf16.mxu0 0
    %1794 = vmatpush1.bf16.msra.mxu0 %v1770
    %1795 = vmatprep.subr.bf16.mxu0 0
    %1796 = vmatpush1.bf16.msra.mxu0 %v1771
    %1797 = vmatprep.subr.bf16.mxu0 0
    %1798 = vmatpush1.bf16.msra.mxu0 %v1772
    %1799 = vmatprep.subr.bf16.mxu0 0
    %1800 = vmatpush1.bf16.msra.mxu0 %v1773
    %1801 = vmatprep.subr.bf16.mxu0 0
    %1802 = vmatpush1.bf16.msra.mxu0 %v1774
    %1803 = vmatprep.subr.bf16.mxu0 0
    %1804 = vmatpush1.bf16.msra.mxu0 %v1775
    %1805 = vmatprep.subr.bf16.mxu0 0
    %1806 = vmatpush1.bf16.msra.mxu0 %v1776
    %1807 = vmatprep.subr.bf16.mxu0 0
    %1808 = vmatpush1.bf16.msra.mxu0 0
    %1809 = vmatprep.subr.bf16.mxu0 0
    %1810 = vmatpush1.bf16.msra.mxu0 0
    %1811 = vmatprep.subr.bf16.mxu0 0
    %1812 = vmatpush1.bf16.msra.mxu0 0
    %1813 = vmatprep.subr.bf16.mxu0 0
    %1814 = vmatpush1.bf16.msra.mxu0 0
    %1815 = vmatprep.subr.bf16.mxu0 0
    %1816 = vmatpush1.bf16.msra.mxu0 0
    %1817 = vmatprep.subr.bf16.mxu0 0
    %1818 = vmatpush1.bf16.msra.mxu0 0
    %1819 = vmatprep.mubr.bf16.mxu0 %v1664
    %1820 = vmatmul.mubr.bf16.gmra.mrb[0].mxu0 %v1581
    %v1821 = vpop.f32.mrb[0].mxu0
    %v1822 = vadd.f32 0.0, %v1821
    %v1823 = vpop.f32.mrb[0].mxu0
    %v1824 = vpop.f32.mrb[0].mxu0
    %v1825 = vpop.f32.mrb[0].mxu0
    %1826 = vdwg.mxu0
    %v1827 = vmax.f32 %v1701, %v1822
    %v1828 = vpack.c.bf16 %v1827, %v1827
    %vm1829 = vcmask 649216
    %vm1830 = vsmask.f32 2304
    %vm1831 = vmand %vm1829, %vm1830
    %v1832 = vld [vmem:[#allocation2] sm:$0x7]
    %v1833 = vsel %vm1831, %v1828, %v1832
    %1834 = vst [vmem:[#allocation2] sm:$0x7] %v1833
    %s1835 = scalar_lea.vmem %s0, 16
    %v1836 = vld [vmem:[%s1835] sm:$0xf]
    %v1837 = vld [vmem:[%s1835 + $0x4] sm:$0xf]
    %v1838 = vld [vmem:[%s1835 + $0x8] sm:$0xf]
    %v1839 = vld [vmem:[%s1835 + $0xc] sm:$0xf]
    %v1844 = vunpack.c.l.b16 %v1836
    %v1845 = vunpack.c.l.b16 %v1837
    %v1846 = vunpack.c.l.b16 %v1838
    %v1847 = vunpack.c.l.b16 %v1839
    %v1848 = vpack.c.b16 %v1845, %v1844
    %v1849 = vpack.c.b16 %v1847, %v1846
    %v1851 = vshrl.u32 %v1848, 16
    %v1853 = vshll.u32 %v1848, 16
    %v1855 = vrot.slane %v1853, 1
    %v1856 = vor.u32 %v1851, %v1855
    %v1858 = vshll.u32 %v1849, 16
    %v1860 = vrot.slane %v1858, 1
    %v1861 = vsel %vm66, %v1856, %v1860
    %v1862 = vshrl.u32 %v1849, 16
    %v1864 = vor.u32 %v1862, %v1860
    %1865 = vrot.lane.b32.xlu0 %v1861, 96
    %v1866 = vpop.permute.xlu0 %1865
    %1867 = vrot.lane.b32.xlu0 %v1864, 96
    %v1868 = vpop.permute.xlu0 %1867
    %v1869 = vrot.slane %v1848, 1
    %v1870 = vrot.slane %v1849, 1
    %v1871 = vsel %vm86, %v1869, %v1870
    %1872 = vrot.lane.b32.xlu0 %v1871, 64
    %v1873 = vpop.permute.xlu0 %1872
    %1874 = vrot.lane.b32.xlu0 %v1870, 64
    %v1875 = vpop.permute.xlu0 %1874
    %v1876 = vrot.slane %v1851, 1
    %v1877 = vrot.slane %v1853, 2
    %v1878 = vor.u32 %v1876, %v1877
    %v1879 = vrot.slane %v1862, 1
    %v1880 = vrot.slane %v1858, 2
    %v1881 = vor.u32 %v1879, %v1880
    %v1882 = vsel %vm94, %v1878, %v1881
    %1883 = vrot.lane.b32.xlu0 %v1882, 32
    %v1884 = vpop.permute.xlu0 %1883
    %1885 = vrot.lane.b32.xlu0 %v1881, 32
    %v1886 = vpop.permute.xlu0 %1885
    %v1887 = vrot.slane %v1848, 2
    %v1888 = vrot.slane %v1849, 2
    %v1889 = vsel %vm106, %v1887, %v1888
    %v1891 = vsel %vm110, %v1848, %v1866
    %v1894 = vsel %vm110, %v1849, %v1868
    %v1897 = vsel %vm117, %v1866, %v1873
    %v1900 = vsel %vm117, %v1868, %v1875
    %v1903 = vsel %vm124, %v1873, %v1884
    %v1906 = vsel %vm124, %v1875, %v1886
    %v1908 = vld [vmem:[%s1] sm:$0xff]
    %v1909 = vld [vmem:[%s1 + $0x8] sm:$0xff]
    %v1910 = vld [vmem:[%s1 + $0x10] sm:$0xff]
    %v1911 = vld [vmem:[%s1 + $0x18] sm:$0xff]
    %v1912 = vld [vmem:[%s1 + $0x20] sm:$0xff]
    %v1913 = vld [vmem:[%s1 + $0x28] sm:$0xff]
    %v1914 = vld [vmem:[%s1 + $0x30] sm:$0xff]
    %v1915 = vld [vmem:[%s1 + $0x38] sm:$0xff]
    %v1916 = vld [vmem:[%s1 + $0x40] sm:$0xff]
    %v1917 = vld [vmem:[%s1 + $0x48] sm:$0xff]
    %v1918 = vld [vmem:[%s1 + $0x50] sm:$0xff]
    %v1919 = vld [vmem:[%s1 + $0x58] sm:$0xff]
    %v1920 = vld [vmem:[%s1 + $0x60] sm:$0xff]
    %v1921 = vld [vmem:[%s1 + $0x68] sm:$0xff]
    %v1922 = vld [vmem:[%s1 + $0x70] sm:$0xff]
    %v1923 = vld [vmem:[%s1 + $0x78] sm:$0xff]
    %v1924 = vld [vmem:[%s1 + $0x80] sm:$0xff]
    %v1925 = vld [vmem:[%s1 + $0x88] sm:$0xff]
    %v1926 = vld [vmem:[%s1 + $0x90] sm:$0xff]
    %v1927 = vld [vmem:[%s1 + $0x98] sm:$0xff]
    %v1928 = vld [vmem:[%s1 + $0xa0] sm:$0xff]
    %v1929 = vld [vmem:[%s1 + $0xa8] sm:$0xff]
    %v1930 = vld [vmem:[%s1 + $0xb0] sm:$0xff]
    %v1931 = vld [vmem:[%s1 + $0xb8] sm:$0xff]
    %v1932 = vld [vmem:[%s1 + $0xc0] sm:$0xff]
    %v1933 = vld [vmem:[%s1 + $0xc8] sm:$0xff]
    %v1934 = vld [vmem:[%s1 + $0xd0] sm:$0xff]
    %v1935 = vld [vmem:[%s1 + $0xd8] sm:$0xff]
    %v1936 = vld [vmem:[%s1 + $0xe0] sm:$0xff]
    %v1937 = vld [vmem:[%s1 + $0xe8] sm:$0xff]
    %v1938 = vld [vmem:[%s1 + $0xf0] sm:$0xff]
    %v1939 = vld [vmem:[%s1 + $0xf8] sm:$0xff]
    %v1940 = vld [vmem:[%s1 + $0x100] sm:$0xff]
    %v1941 = vld [vmem:[%s1 + $0x108] sm:$0xff]
    %v1942 = vld [vmem:[%s1 + $0x110] sm:$0xff]
    %v1943 = vld [vmem:[%s1 + $0x118] sm:$0xff]
    %v1944 = vld [vmem:[%s1 + $0x120] sm:$0xff]
    %v1945 = vld [vmem:[%s1 + $0x128] sm:$0xff]
    %v1946 = vld [vmem:[%s1 + $0x130] sm:$0xff]
    %v1947 = vld [vmem:[%s1 + $0x138] sm:$0xff]
    %v1948 = vld [vmem:[%s1 + $0x140] sm:$0xff]
    %v1949 = vld [vmem:[%s1 + $0x148] sm:$0xff]
    %v1950 = vld [vmem:[%s1 + $0x150] sm:$0xff]
    %v1951 = vld [vmem:[%s1 + $0x158] sm:$0xff]
    %v1952 = vld [vmem:[%s1 + $0x160] sm:$0xff]
    %v1953 = vld [vmem:[%s1 + $0x168] sm:$0xff]
    %v1954 = vld [vmem:[%s1 + $0x170] sm:$0xff]
    %v1955 = vld [vmem:[%s1 + $0x178] sm:$0xff]
    %v1956 = vld [vmem:[%s1 + $0x180] sm:$0xff]
    %v1957 = vld [vmem:[%s1 + $0x188] sm:$0xff]
    %v1958 = vld [vmem:[%s1 + $0x190] sm:$0xff]
    %v1959 = vld [vmem:[%s1 + $0x198] sm:$0xff]
    %v1960 = vld [vmem:[%s1 + $0x1a0] sm:$0xff]
    %v1961 = vld [vmem:[%s1 + $0x1a8] sm:$0xff]
    %v1962 = vld [vmem:[%s1 + $0x1b0] sm:$0xff]
    %v1963 = vld [vmem:[%s1 + $0x1b8] sm:$0xff]
    %v1964 = vld [vmem:[%s1 + $0x1c0] sm:$0xff]
    %v1965 = vld [vmem:[%s1 + $0x1c8] sm:$0xff]
    %v1966 = vld [vmem:[%s1 + $0x1d0] sm:$0xff]
    %v1967 = vld [vmem:[%s1 + $0x1d8] sm:$0xff]
    %v1968 = vld [vmem:[%s2] sm:$0x3]
    %v1970 = vlaneseq
    %v1971 = vshrl.u32 %v1970, 7
    %v1972 = vsub.s32 0, %v1971
    %v1973 = vrot.slane %v1968, %v1972
    %v1974 = vlaneseq
    %v1975 = vshrl.u32 %v1974, 7
    %v1976 = vsub.s32 1, %v1975
    %v1977 = vrot.slane %v1968, %v1976
    %v2040 = vunpack.c.l.b16 %v1908
    %v2041 = vunpack.c.h.b16 %v1908
    %v2042 = vunpack.c.l.b16 %v1909
    %v2043 = vunpack.c.h.b16 %v1909
    %v2044 = vunpack.c.l.b16 %v1910
    %v2045 = vunpack.c.h.b16 %v1910
    %v2046 = vunpack.c.l.b16 %v1911
    %v2047 = vunpack.c.h.b16 %v1911
    %v2048 = vunpack.c.l.b16 %v1912
    %v2049 = vunpack.c.h.b16 %v1912
    %v2050 = vunpack.c.l.b16 %v1913
    %v2051 = vunpack.c.h.b16 %v1913
    %v2052 = vunpack.c.l.b16 %v1914
    %v2053 = vunpack.c.h.b16 %v1914
    %v2054 = vunpack.c.l.b16 %v1915
    %v2055 = vunpack.c.h.b16 %v1915
    %v2056 = vunpack.c.l.b16 %v1916
    %v2057 = vunpack.c.h.b16 %v1916
    %v2058 = vunpack.c.l.b16 %v1917
    %v2059 = vunpack.c.h.b16 %v1917
    %v2060 = vunpack.c.l.b16 %v1918
    %v2061 = vunpack.c.h.b16 %v1918
    %v2062 = vunpack.c.l.b16 %v1919
    %v2063 = vunpack.c.h.b16 %v1919
    %v2064 = vunpack.c.l.b16 %v1920
    %v2065 = vunpack.c.h.b16 %v1920
    %v2066 = vunpack.c.l.b16 %v1921
    %v2067 = vunpack.c.h.b16 %v1921
    %v2068 = vunpack.c.l.b16 %v1922
    %v2069 = vunpack.c.h.b16 %v1922
    %v2070 = vunpack.c.l.b16 %v1923
    %v2071 = vunpack.c.h.b16 %v1923
    %v2072 = vunpack.c.l.b16 %v1924
    %v2073 = vunpack.c.h.b16 %v1924
    %v2074 = vunpack.c.l.b16 %v1925
    %v2075 = vunpack.c.h.b16 %v1925
    %v2076 = vunpack.c.l.b16 %v1926
    %v2077 = vunpack.c.h.b16 %v1926
    %v2078 = vunpack.c.l.b16 %v1927
    %v2079 = vunpack.c.h.b16 %v1927
    %v2080 = vunpack.c.l.b16 %v1928
    %v2081 = vunpack.c.h.b16 %v1928
    %v2082 = vunpack.c.l.b16 %v1929
    %v2083 = vunpack.c.h.b16 %v1929
    %v2084 = vunpack.c.l.b16 %v1930
    %v2085 = vunpack.c.h.b16 %v1930
    %v2086 = vunpack.c.l.b16 %v1931
    %v2087 = vunpack.c.h.b16 %v1931
    %v2088 = vunpack.c.l.b16 %v1932
    %v2089 = vunpack.c.h.b16 %v1932
    %v2090 = vunpack.c.l.b16 %v1933
    %v2091 = vunpack.c.h.b16 %v1933
    %v2092 = vunpack.c.l.b16 %v1934
    %v2093 = vunpack.c.h.b16 %v1934
    %v2094 = vunpack.c.l.b16 %v1935
    %v2095 = vunpack.c.h.b16 %v1935
    %v2096 = vunpack.c.l.b16 %v1936
    %v2097 = vunpack.c.h.b16 %v1936
    %v2098 = vunpack.c.l.b16 %v1937
    %v2099 = vunpack.c.h.b16 %v1937
    %v2100 = vunpack.c.l.b16 %v1938
    %v2101 = vunpack.c.h.b16 %v1938
    %v2102 = vunpack.c.l.b16 %v1939
    %v2103 = vunpack.c.h.b16 %v1939
    %v2104 = vunpack.c.l.b16 %v1940
    %v2105 = vunpack.c.h.b16 %v1940
    %v2106 = vunpack.c.l.b16 %v1941
    %v2107 = vunpack.c.h.b16 %v1941
    %v2108 = vunpack.c.l.b16 %v1942
    %v2109 = vunpack.c.h.b16 %v1942
    %v2110 = vunpack.c.l.b16 %v1943
    %v2111 = vunpack.c.h.b16 %v1943
    %v2112 = vunpack.c.l.b16 %v1944
    %v2113 = vunpack.c.h.b16 %v1944
    %v2114 = vunpack.c.l.b16 %v1945
    %v2115 = vunpack.c.h.b16 %v1945
    %v2116 = vunpack.c.l.b16 %v1946
    %v2117 = vunpack.c.h.b16 %v1946
    %v2118 = vunpack.c.l.b16 %v1947
    %v2119 = vunpack.c.h.b16 %v1947
    %v2120 = vunpack.c.l.b16 %v1948
    %v2121 = vunpack.c.h.b16 %v1948
    %v2122 = vunpack.c.l.b16 %v1949
    %v2123 = vunpack.c.h.b16 %v1949
    %v2124 = vunpack.c.l.b16 %v1950
    %v2125 = vunpack.c.h.b16 %v1950
    %v2126 = vunpack.c.l.b16 %v1951
    %v2127 = vunpack.c.h.b16 %v1951
    %v2128 = vunpack.c.l.b16 %v1952
    %v2129 = vunpack.c.h.b16 %v1952
    %v2130 = vunpack.c.l.b16 %v1953
    %v2131 = vunpack.c.h.b16 %v1953
    %v2132 = vunpack.c.l.b16 %v1954
    %v2133 = vunpack.c.h.b16 %v1954
    %v2134 = vunpack.c.l.b16 %v1955
    %v2135 = vunpack.c.h.b16 %v1955
    %v2136 = vunpack.c.l.b16 %v1956
    %v2137 = vunpack.c.h.b16 %v1956
    %v2138 = vunpack.c.l.b16 %v1957
    %v2139 = vunpack.c.h.b16 %v1957
    %v2140 = vunpack.c.l.b16 %v1958
    %v2141 = vunpack.c.h.b16 %v1958
    %v2142 = vunpack.c.l.b16 %v1959
    %v2143 = vunpack.c.h.b16 %v1959
    %v2144 = vunpack.c.l.b16 %v1960
    %v2145 = vunpack.c.h.b16 %v1960
    %v2146 = vunpack.c.l.b16 %v1961
    %v2147 = vunpack.c.h.b16 %v1961
    %v2148 = vunpack.c.l.b16 %v1962
    %v2149 = vunpack.c.h.b16 %v1962
    %v2150 = vunpack.c.l.b16 %v1963
    %v2151 = vunpack.c.h.b16 %v1963
    %v2152 = vunpack.c.l.b16 %v1964
    %v2153 = vunpack.c.h.b16 %v1964
    %v2154 = vunpack.c.l.b16 %v1965
    %v2155 = vunpack.c.h.b16 %v1965
    %v2156 = vunpack.c.l.b16 %v1966
    %v2157 = vunpack.c.h.b16 %v1966
    %v2158 = vunpack.c.l.b16 %v1967
    %v2159 = vunpack.c.h.b16 %v1967
    %v2160 = vpack.c.b16 %v2042, %v2040
    %v2161 = vpack.c.b16 %v2043, %v2041
    %v2162 = vpack.c.b16 %v2046, %v2044
    %v2163 = vpack.c.b16 %v2047, %v2045
    %v2164 = vpack.c.b16 %v2050, %v2048
    %v2165 = vpack.c.b16 %v2051, %v2049
    %v2166 = vpack.c.b16 %v2054, %v2052
    %v2167 = vpack.c.b16 %v2055, %v2053
    %v2168 = vpack.c.b16 %v2058, %v2056
    %v2169 = vpack.c.b16 %v2059, %v2057
    %v2170 = vpack.c.b16 %v2062, %v2060
    %v2171 = vpack.c.b16 %v2063, %v2061
    %v2172 = vpack.c.b16 %v2066, %v2064
    %v2173 = vpack.c.b16 %v2067, %v2065
    %v2174 = vpack.c.b16 %v2070, %v2068
    %v2175 = vpack.c.b16 %v2071, %v2069
    %v2176 = vpack.c.b16 %v2074, %v2072
    %v2177 = vpack.c.b16 %v2075, %v2073
    %v2178 = vpack.c.b16 %v2078, %v2076
    %v2179 = vpack.c.b16 %v2079, %v2077
    %v2180 = vpack.c.b16 %v2082, %v2080
    %v2181 = vpack.c.b16 %v2083, %v2081
    %v2182 = vpack.c.b16 %v2086, %v2084
    %v2183 = vpack.c.b16 %v2087, %v2085
    %v2184 = vpack.c.b16 %v2090, %v2088
    %v2185 = vpack.c.b16 %v2091, %v2089
    %v2186 = vpack.c.b16 %v2094, %v2092
    %v2187 = vpack.c.b16 %v2095, %v2093
    %v2188 = vpack.c.b16 %v2098, %v2096
    %v2189 = vpack.c.b16 %v2099, %v2097
    %v2190 = vpack.c.b16 %v2102, %v2100
    %v2191 = vpack.c.b16 %v2103, %v2101
    %v2192 = vpack.c.b16 %v2106, %v2104
    %v2193 = vpack.c.b16 %v2107, %v2105
    %v2194 = vpack.c.b16 %v2110, %v2108
    %v2195 = vpack.c.b16 %v2111, %v2109
    %v2196 = vpack.c.b16 %v2114, %v2112
    %v2197 = vpack.c.b16 %v2115, %v2113
    %v2198 = vpack.c.b16 %v2118, %v2116
    %v2199 = vpack.c.b16 %v2119, %v2117
    %v2200 = vpack.c.b16 %v2122, %v2120
    %v2201 = vpack.c.b16 %v2123, %v2121
    %v2202 = vpack.c.b16 %v2126, %v2124
    %v2203 = vpack.c.b16 %v2127, %v2125
    %v2204 = vpack.c.b16 %v2130, %v2128
    %v2205 = vpack.c.b16 %v2131, %v2129
    %v2206 = vpack.c.b16 %v2134, %v2132
    %v2207 = vpack.c.b16 %v2135, %v2133
    %v2208 = vpack.c.b16 %v2138, %v2136
    %v2209 = vpack.c.b16 %v2139, %v2137
    %v2210 = vpack.c.b16 %v2142, %v2140
    %v2211 = vpack.c.b16 %v2143, %v2141
    %v2212 = vpack.c.b16 %v2146, %v2144
    %v2213 = vpack.c.b16 %v2147, %v2145
    %v2214 = vpack.c.b16 %v2150, %v2148
    %v2215 = vpack.c.b16 %v2151, %v2149
    %v2216 = vpack.c.b16 %v2154, %v2152
    %v2217 = vpack.c.b16 %v2155, %v2153
    %v2218 = vpack.c.b16 %v2158, %v2156
    %v2219 = vpack.c.b16 %v2159, %v2157
    %v2281 = vsel %vm110, %v1889, 0
    %v2284 = vsel %vm110, %v1888, 0
    %2286 = vmatprep.subr.bf16.mxu0 %v2161
    %2287 = vmatpush1.bf16.msra.mxu0 %v2160
    %2288 = vmatprep.subr.bf16.mxu0 %v2163
    %2289 = vmatpush1.bf16.msra.mxu0 %v2162
    %2290 = vmatprep.subr.bf16.mxu0 %v2165
    %2291 = vmatpush1.bf16.msra.mxu0 %v2164
    %2292 = vmatprep.subr.bf16.mxu0 %v2167
    %2293 = vmatpush1.bf16.msra.mxu0 %v2166
    %2294 = vmatprep.subr.bf16.mxu0 %v2169
    %2295 = vmatpush1.bf16.msra.mxu0 %v2168
    %2296 = vmatprep.subr.bf16.mxu0 %v2171
    %2297 = vmatpush1.bf16.msra.mxu0 %v2170
    %2298 = vmatprep.subr.bf16.mxu0 %v2173
    %2299 = vmatpush1.bf16.msra.mxu0 %v2172
    %2300 = vmatprep.subr.bf16.mxu0 %v2175
    %2301 = vmatpush1.bf16.msra.mxu0 %v2174
    %2302 = vmatprep.subr.bf16.mxu0 %v2177
    %2303 = vmatpush1.bf16.msra.mxu0 %v2176
    %2304 = vmatprep.subr.bf16.mxu0 %v2179
    %2305 = vmatpush1.bf16.msra.mxu0 %v2178
    %2306 = vmatprep.subr.bf16.mxu0 %v2181
    %2307 = vmatpush1.bf16.msra.mxu0 %v2180
    %2308 = vmatprep.subr.bf16.mxu0 %v2183
    %2309 = vmatpush1.bf16.msra.mxu0 %v2182
    %2310 = vmatprep.subr.bf16.mxu0 %v2185
    %2311 = vmatpush1.bf16.msra.mxu0 %v2184
    %2312 = vmatprep.subr.bf16.mxu0 %v2187
    %2313 = vmatpush1.bf16.msra.mxu0 %v2186
    %2314 = vmatprep.subr.bf16.mxu0 %v2189
    %2315 = vmatpush1.bf16.msra.mxu0 %v2188
    %2316 = vmatprep.subr.bf16.mxu0 %v2191
    %2317 = vmatpush1.bf16.msra.mxu0 %v2190
    %2318 = vmatprep.mubr.bf16.mxu0 %v1897
    %2319 = vmatmul.mubr.bf16.gmra.mrb[0].mxu0 %v1891
    %v2320 = vpop.f32.mrb[0].mxu0
    %v2321 = vadd.f32 %v1973, %v2320
    %v2322 = vpop.f32.mrb[0].mxu0
    %v2323 = vadd.f32 %v1977, %v2322
    %v2324 = vpop.f32.mrb[0].mxu0
    %v2325 = vadd.f32 %v1973, %v2324
    %v2326 = vpop.f32.mrb[0].mxu0
    %v2327 = vadd.f32 %v1977, %v2326
    %2328 = vmatprep.mubr.bf16.mxu0 %v1900
    %2329 = vmatmul.mubr.bf16.gmra.mrb[0].mxu0 %v1894
    %v2330 = vpop.f32.mrb[0].mxu0
    %v2331 = vadd.f32 %v1973, %v2330
    %v2332 = vpop.f32.mrb[0].mxu0
    %v2333 = vadd.f32 %v1977, %v2332
    %v2334 = vpop.f32.mrb[0].mxu0
    %v2335 = vadd.f32 %v1973, %v2334
    %v2336 = vpop.f32.mrb[0].mxu0
    %v2337 = vadd.f32 %v1977, %v2336
    %2338 = vdwg.mxu0
    %2339 = vmatprep.subr.bf16.mxu0 %v2193
    %2340 = vmatpush1.bf16.msra.mxu0 %v2192
    %2341 = vmatprep.subr.bf16.mxu0 %v2195
    %2342 = vmatpush1.bf16.msra.mxu0 %v2194
    %2343 = vmatprep.subr.bf16.mxu0 %v2197
    %2344 = vmatpush1.bf16.msra.mxu0 %v2196
    %2345 = vmatprep.subr.bf16.mxu0 %v2199
    %2346 = vmatpush1.bf16.msra.mxu0 %v2198
    %2347 = vmatprep.subr.bf16.mxu0 %v2201
    %2348 = vmatpush1.bf16.msra.mxu0 %v2200
    %2349 = vmatprep.subr.bf16.mxu0 %v2203
    %2350 = vmatpush1.bf16.msra.mxu0 %v2202
    %2351 = vmatprep.subr.bf16.mxu0 %v2205
    %2352 = vmatpush1.bf16.msra.mxu0 %v2204
    %2353 = vmatprep.subr.bf16.mxu0 %v2207
    %2354 = vmatpush1.bf16.msra.mxu0 %v2206
    %2355 = vmatprep.subr.bf16.mxu0 %v2209
    %2356 = vmatpush1.bf16.msra.mxu0 %v2208
    %2357 = vmatprep.subr.bf16.mxu0 %v2211
    %2358 = vmatpush1.bf16.msra.mxu0 %v2210
    %2359 = vmatprep.subr.bf16.mxu0 %v2213
    %2360 = vmatpush1.bf16.msra.mxu0 %v2212
    %2361 = vmatprep.subr.bf16.mxu0 %v2215
    %2362 = vmatpush1.bf16.msra.mxu0 %v2214
    %2363 = vmatprep.subr.bf16.mxu0 %v2217
    %2364 = vmatpush1.bf16.msra.mxu0 %v2216
    %2365 = vmatprep.subr.bf16.mxu0 %v2219
    %2366 = vmatpush1.bf16.msra.mxu0 %v2218
    %2367 = vmatprep.subr.bf16.mxu0 0
    %2368 = vmatpush1.bf16.msra.mxu0 0
    %2369 = vmatprep.subr.bf16.mxu0 0
    %2370 = vmatpush1.bf16.msra.mxu0 0
    %2371 = vmatprep.mubr.bf16.mxu0 %v2281
    %2372 = vmatmul.mubr.bf16.gmra.mrb[0].mxu0 %v1903
    %v2373 = vpop.f32.mrb[0].mxu0
    %v2374 = vadd.f32 %v2321, %v2373
    %v2375 = vpop.f32.mrb[0].mxu0
    %v2376 = vadd.f32 %v2323, %v2375
    %v2377 = vpop.f32.mrb[0].mxu0
    %v2378 = vadd.f32 %v2325, %v2377
    %v2379 = vpop.f32.mrb[0].mxu0
    %v2380 = vadd.f32 %v2327, %v2379
    %2381 = vmatprep.mubr.bf16.mxu0 %v2284
    %2382 = vmatmul.mubr.bf16.gmra.mrb[0].mxu0 %v1906
    %v2383 = vpop.f32.mrb[0].mxu0
    %v2384 = vadd.f32 %v2331, %v2383
    %v2385 = vpop.f32.mrb[0].mxu0
    %v2386 = vadd.f32 %v2333, %v2385
    %v2387 = vpop.f32.mrb[0].mxu0
    %v2388 = vadd.f32 %v2335, %v2387
    %v2389 = vpop.f32.mrb[0].mxu0
    %v2390 = vadd.f32 %v2337, %v2389
    %2391 = vdwg.mxu0
    %v2392 = vmax.f32 %v2374, 0.0
    %v2393 = vmax.f32 %v2376, 0.0
    %v2394 = vmax.f32 %v2378, 0.0
    %v2395 = vmax.f32 %v2380, 0.0
    %v2396 = vmax.f32 %v2384, 0.0
    %v2397 = vmax.f32 %v2386, 0.0
    %v2398 = vmax.f32 %v2388, 0.0
    %v2399 = vmax.f32 %v2390, 0.0
    %v2400 = vpack.c.bf16 %v2394, %v2392
    %v2401 = vpack.c.bf16 %v2395, %v2393
    %v2402 = vpack.c.bf16 %v2398, %v2396
    %v2403 = vpack.c.bf16 %v2399, %v2397
    %v2404 = vld [vmem:[%s3] sm:$0xf]
    %v2405 = vld [vmem:[%s3 + $0x4] sm:$0x7]
    %v2408 = vunpack.c.l.b16 %v2404
    %v2409 = vunpack.c.l.b16 %v2405
    %v2410 = vpack.c.b16 %v2409, %v2408
    %v2412 = vsel %vm634, %v2410, 0
    %v2415 = vsel %vm638, %v2402, 0
    %v2418 = vsel %vm638, %v2403, 0
    %2420 = vmatprep.subr.bf16.mxu0 %v2401
    %2421 = vmatpush1.bf16.msra.mxu0 %v2400
    %2422 = vmatprep.subr.bf16.mxu0 %v2418
    %2423 = vmatpush1.bf16.msra.mxu0 %v2415
    %2424 = vmatprep.subr.bf16.mxu0 0
    %2425 = vmatpush1.bf16.msra.mxu0 0
    %2426 = vmatprep.subr.bf16.mxu0 0
    %2427 = vmatpush1.bf16.msra.mxu0 0
    %2428 = vmatprep.subr.bf16.mxu0 0
    %2429 = vmatpush1.bf16.msra.mxu0 0
    %2430 = vmatprep.subr.bf16.mxu0 0
    %2431 = vmatpush1.bf16.msra.mxu0 0
    %2432 = vmatprep.subr.bf16.mxu0 0
    %2433 = vmatpush1.bf16.msra.mxu0 0
    %2434 = vmatprep.subr.bf16.mxu0 0
    %2435 = vmatpush1.bf16.msra.mxu0 0
    %2436 = vmatprep.subr.bf16.mxu0 0
    %2437 = vmatpush1.bf16.msra.mxu0 0
    %2438 = vmatprep.subr.bf16.mxu0 0
    %2439 = vmatpush1.bf16.msra.mxu0 0
    %2440 = vmatprep.subr.bf16.mxu0 0
    %2441 = vmatpush1.bf16.msra.mxu0 0
    %2442 = vmatprep.subr.bf16.mxu0 0
    %2443 = vmatpush1.bf16.msra.mxu0 0
    %2444 = vmatprep.subr.bf16.mxu0 0
    %2445 = vmatpush1.bf16.msra.mxu0 0
    %2446 = vmatprep.subr.bf16.mxu0 0
    %2447 = vmatpush1.bf16.msra.mxu0 0
    %2448 = vmatprep.subr.bf16.mxu0 0
    %2449 = vmatpush1.bf16.msra.mxu0 0
    %2450 = vmatprep.subr.bf16.mxu0 0
    %2451 = vmatpush1.bf16.msra.mxu0 0
    %2452 = vmatprep.mubr.bf16.mxu0 0
    %2453 = vmatmul.mubr.bf16.gmra.mrb[0].mxu0 %v2412
    %v2454 = vpop.f32.mrb[0].mxu0
    %v2455 = vadd.f32 0.0, %v2454
    %v2456 = vpop.f32.mrb[0].mxu0
    %v2457 = vadd.f32 0.0, %v2456
    %v2458 = vpop.f32.mrb[0].mxu0
    %v2459 = vadd.f32 0.0, %v2458
    %v2460 = vpop.f32.mrb[0].mxu0
    %v2461 = vadd.f32 0.0, %v2460
    %2462 = vdwg.mxu0
    %v2463 = vld [vmem:[%s688] sm:$0xf]
    %v2464 = vld [vmem:[%s688 + $0x4] sm:$0x7]
    %v2467 = vunpack.c.l.b16 %v2463
    %v2468 = vunpack.c.l.b16 %v2464
    %v2469 = vpack.c.b16 %v2468, %v2467
    %v2471 = vsel %vm634, %v2469, 0
    %2473 = vmatprep.subr.bf16.mxu0 %v2401
    %2474 = vmatpush1.bf16.msra.mxu0 %v2400
    %2475 = vmatprep.subr.bf16.mxu0 %v2418
    %2476 = vmatpush1.bf16.msra.mxu0 %v2415
    %2477 = vmatprep.subr.bf16.mxu0 0
    %2478 = vmatpush1.bf16.msra.mxu0 0
    %2479 = vmatprep.subr.bf16.mxu0 0
    %2480 = vmatpush1.bf16.msra.mxu0 0
    %2481 = vmatprep.subr.bf16.mxu0 0
    %2482 = vmatpush1.bf16.msra.mxu0 0
    %2483 = vmatprep.subr.bf16.mxu0 0
    %2484 = vmatpush1.bf16.msra.mxu0 0
    %2485 = vmatprep.subr.bf16.mxu0 0
    %2486 = vmatpush1.bf16.msra.mxu0 0
    %2487 = vmatprep.subr.bf16.mxu0 0
    %2488 = vmatpush1.bf16.msra.mxu0 0
    %2489 = vmatprep.subr.bf16.mxu0 0
    %2490 = vmatpush1.bf16.msra.mxu0 0
    %2491 = vmatprep.subr.bf16.mxu0 0
    %2492 = vmatpush1.bf16.msra.mxu0 0
    %2493 = vmatprep.subr.bf16.mxu0 0
    %2494 = vmatpush1.bf16.msra.mxu0 0
    %2495 = vmatprep.subr.bf16.mxu0 0
    %2496 = vmatpush1.bf16.msra.mxu0 0
    %2497 = vmatprep.subr.bf16.mxu0 0
    %2498 = vmatpush1.bf16.msra.mxu0 0
    %2499 = vmatprep.subr.bf16.mxu0 0
    %2500 = vmatpush1.bf16.msra.mxu0 0
    %2501 = vmatprep.subr.bf16.mxu0 0
    %2502 = vmatpush1.bf16.msra.mxu0 0
    %2503 = vmatprep.subr.bf16.mxu0 0
    %2504 = vmatpush1.bf16.msra.mxu0 0
    %2505 = vmatprep.mubr.bf16.mxu0 0
    %2506 = vmatmul.mubr.bf16.gmra.mrb[0].mxu0 %v2471
    %v2507 = vpop.f32.mrb[0].mxu0
    %v2508 = vadd.f32 0.0, %v2507
    %v2509 = vpop.f32.mrb[0].mxu0
    %v2510 = vadd.f32 0.0, %v2509
    %v2511 = vpop.f32.mrb[0].mxu0
    %v2512 = vadd.f32 0.0, %v2511
    %v2513 = vpop.f32.mrb[0].mxu0
    %v2514 = vadd.f32 0.0, %v2513
    %2515 = vdwg.mxu0
    %v2516 = vmax.f32 %v2455, %v2508
    %v2517 = vmax.f32 %v2457, %v2510
    %v2518 = vmax.f32 %v2459, %v2512
    %v2519 = vmax.f32 %v2461, %v2514
    %v2520 = vpack.c.bf16 %v2518, %v2516
    %v2521 = vpack.c.bf16 %v2519, %v2517
    %v2522 = vld [vmem:[%s4] sm:$0xf]
    %v2523 = vld [vmem:[%s4 + $0x4] sm:$0xf]
    %v2524 = vld [vmem:[%s4 + $0x8] sm:$0xf]
    %v2525 = vld [vmem:[%s4 + $0xc] sm:$0xf]
    %v2526 = vld [vmem:[%s4 + $0x10] sm:$0xf]
    %v2527 = vld [vmem:[%s4 + $0x14] sm:$0xf]
    %v2528 = vld [vmem:[%s4 + $0x18] sm:$0xf]
    %v2529 = vld [vmem:[%s4 + $0x1c] sm:$0xf]
    %v2530 = vld [vmem:[%s4 + $0x20] sm:$0xf]
    %v2531 = vld [vmem:[%s4 + $0x24] sm:$0xf]
    %v2532 = vld [vmem:[%s4 + $0x28] sm:$0xf]
    %v2533 = vld [vmem:[%s4 + $0x2c] sm:$0xf]
    %v2534 = vld [vmem:[%s4 + $0x30] sm:$0xf]
    %v2535 = vld [vmem:[%s4 + $0x34] sm:$0xf]
    %v2536 = vld [vmem:[%s4 + $0x38] sm:$0xf]
    %v2537 = vld [vmem:[%s4 + $0x3c] sm:$0xf]
    %v2538 = vld [vmem:[%s4 + $0x40] sm:$0xf]
    %v2539 = vld [vmem:[%s4 + $0x44] sm:$0xf]
    %v2540 = vld [vmem:[%s4 + $0x48] sm:$0xf]
    %v2541 = vld [vmem:[%s4 + $0x4c] sm:$0xf]
    %v2542 = vld [vmem:[%s4 + $0x50] sm:$0xf]
    %v2564 = vunpack.c.l.b16 %v2522
    %v2565 = vunpack.c.l.b16 %v2523
    %v2566 = vunpack.c.l.b16 %v2524
    %v2567 = vunpack.c.l.b16 %v2525
    %v2568 = vunpack.c.l.b16 %v2526
    %v2569 = vunpack.c.l.b16 %v2527
    %v2570 = vunpack.c.l.b16 %v2528
    %v2571 = vunpack.c.l.b16 %v2529
    %v2572 = vunpack.c.l.b16 %v2530
    %v2573 = vunpack.c.l.b16 %v2531
    %v2574 = vunpack.c.l.b16 %v2532
    %v2575 = vunpack.c.l.b16 %v2533
    %v2576 = vunpack.c.l.b16 %v2534
    %v2577 = vunpack.c.l.b16 %v2535
    %v2578 = vunpack.c.l.b16 %v2536
    %v2579 = vunpack.c.l.b16 %v2537
    %v2580 = vunpack.c.l.b16 %v2538
    %v2581 = vunpack.c.l.b16 %v2539
    %v2582 = vunpack.c.l.b16 %v2540
    %v2583 = vunpack.c.l.b16 %v2541
    %v2584 = vunpack.c.l.b16 %v2542
    %v2585 = vpack.c.b16 %v2565, %v2564
    %v2586 = vpack.c.b16 %v2567, %v2566
    %v2587 = vpack.c.b16 %v2569, %v2568
    %v2588 = vpack.c.b16 %v2571, %v2570
    %v2589 = vpack.c.b16 %v2573, %v2572
    %v2590 = vpack.c.b16 %v2575, %v2574
    %v2591 = vpack.c.b16 %v2577, %v2576
    %v2592 = vpack.c.b16 %v2579, %v2578
    %v2593 = vpack.c.b16 %v2581, %v2580
    %v2594 = vpack.c.b16 %v2583, %v2582
    %v2595 = vpack.c.b16 %v2584, %v2584
    %v2607 = vsel %vm832, %v2521, 0
    %v2610 = vsel %vm836, %v2595, 0
    %2612 = vmatprep.subr.bf16.mxu0 0
    %2613 = vmatpush1.bf16.msra.mxu0 %v2585
    %2614 = vmatprep.subr.bf16.mxu0 0
    %2615 = vmatpush1.bf16.msra.mxu0 %v2586
    %2616 = vmatprep.subr.bf16.mxu0 0
    %2617 = vmatpush1.bf16.msra.mxu0 %v2587
    %2618 = vmatprep.subr.bf16.mxu0 0
    %2619 = vmatpush1.bf16.msra.mxu0 %v2588
    %2620 = vmatprep.subr.bf16.mxu0 0
    %2621 = vmatpush1.bf16.msra.mxu0 %v2589
    %2622 = vmatprep.subr.bf16.mxu0 0
    %2623 = vmatpush1.bf16.msra.mxu0 %v2590
    %2624 = vmatprep.subr.bf16.mxu0 0
    %2625 = vmatpush1.bf16.msra.mxu0 %v2591
    %2626 = vmatprep.subr.bf16.mxu0 0
    %2627 = vmatpush1.bf16.msra.mxu0 %v2592
    %2628 = vmatprep.subr.bf16.mxu0 0
    %2629 = vmatpush1.bf16.msra.mxu0 %v2593
    %2630 = vmatprep.subr.bf16.mxu0 0
    %2631 = vmatpush1.bf16.msra.mxu0 %v2594
    %2632 = vmatprep.subr.bf16.mxu0 0
    %2633 = vmatpush1.bf16.msra.mxu0 %v2610
    %2634 = vmatprep.subr.bf16.mxu0 0
    %2635 = vmatpush1.bf16.msra.mxu0 0
    %2636 = vmatprep.subr.bf16.mxu0 0
    %2637 = vmatpush1.bf16.msra.mxu0 0
    %2638 = vmatprep.subr.bf16.mxu0 0
    %2639 = vmatpush1.bf16.msra.mxu0 0
    %2640 = vmatprep.subr.bf16.mxu0 0
    %2641 = vmatpush1.bf16.msra.mxu0 0
    %2642 = vmatprep.subr.bf16.mxu0 0
    %2643 = vmatpush1.bf16.msra.mxu0 0
    %2644 = vmatprep.mubr.bf16.mxu0 %v2607
    %2645 = vmatmul.mubr.bf16.gmra.mrb[0].mxu0 %v2520
    %v2646 = vpop.f32.mrb[0].mxu0
    %v2647 = vadd.f32 0.0, %v2646
    %v2648 = vpop.f32.mrb[0].mxu0
    %v2649 = vpop.f32.mrb[0].mxu0
    %v2650 = vadd.f32 0.0, %v2649
    %v2651 = vpop.f32.mrb[0].mxu0
    %2652 = vdwg.mxu0
    %v2653 = vld [vmem:[%s881] sm:$0xf]
    %v2654 = vld [vmem:[%s881 + $0x4] sm:$0xf]
    %v2655 = vld [vmem:[%s881 + $0x8] sm:$0xf]
    %v2656 = vld [vmem:[%s881 + $0xc] sm:$0xf]
    %v2657 = vld [vmem:[%s881 + $0x10] sm:$0xf]
    %v2658 = vld [vmem:[%s881 + $0x14] sm:$0xf]
    %v2659 = vld [vmem:[%s881 + $0x18] sm:$0xf]
    %v2660 = vld [vmem:[%s881 + $0x1c] sm:$0xf]
    %v2661 = vld [vmem:[%s881 + $0x20] sm:$0xf]
    %v2662 = vld [vmem:[%s881 + $0x24] sm:$0xf]
    %v2663 = vld [vmem:[%s881 + $0x28] sm:$0xf]
    %v2664 = vld [vmem:[%s881 + $0x2c] sm:$0xf]
    %v2665 = vld [vmem:[%s881 + $0x30] sm:$0xf]
    %v2666 = vld [vmem:[%s881 + $0x34] sm:$0xf]
    %v2667 = vld [vmem:[%s881 + $0x38] sm:$0xf]
    %v2668 = vld [vmem:[%s881 + $0x3c] sm:$0xf]
    %v2669 = vld [vmem:[%s881 + $0x40] sm:$0xf]
    %v2670 = vld [vmem:[%s881 + $0x44] sm:$0xf]
    %v2671 = vld [vmem:[%s881 + $0x48] sm:$0xf]
    %v2672 = vld [vmem:[%s881 + $0x4c] sm:$0xf]
    %v2673 = vld [vmem:[%s881 + $0x50] sm:$0xf]
    %v2695 = vunpack.c.l.b16 %v2653
    %v2696 = vunpack.c.l.b16 %v2654
    %v2697 = vunpack.c.l.b16 %v2655
    %v2698 = vunpack.c.l.b16 %v2656
    %v2699 = vunpack.c.l.b16 %v2657
    %v2700 = vunpack.c.l.b16 %v2658
    %v2701 = vunpack.c.l.b16 %v2659
    %v2702 = vunpack.c.l.b16 %v2660
    %v2703 = vunpack.c.l.b16 %v2661
    %v2704 = vunpack.c.l.b16 %v2662
    %v2705 = vunpack.c.l.b16 %v2663
    %v2706 = vunpack.c.l.b16 %v2664
    %v2707 = vunpack.c.l.b16 %v2665
    %v2708 = vunpack.c.l.b16 %v2666
    %v2709 = vunpack.c.l.b16 %v2667
    %v2710 = vunpack.c.l.b16 %v2668
    %v2711 = vunpack.c.l.b16 %v2669
    %v2712 = vunpack.c.l.b16 %v2670
    %v2713 = vunpack.c.l.b16 %v2671
    %v2714 = vunpack.c.l.b16 %v2672
    %v2715 = vunpack.c.l.b16 %v2673
    %v2716 = vpack.c.b16 %v2696, %v2695
    %v2717 = vpack.c.b16 %v2698, %v2697
    %v2718 = vpack.c.b16 %v2700, %v2699
    %v2719 = vpack.c.b16 %v2702, %v2701
    %v2720 = vpack.c.b16 %v2704, %v2703
    %v2721 = vpack.c.b16 %v2706, %v2705
    %v2722 = vpack.c.b16 %v2708, %v2707
    %v2723 = vpack.c.b16 %v2710, %v2709
    %v2724 = vpack.c.b16 %v2712, %v2711
    %v2725 = vpack.c.b16 %v2714, %v2713
    %v2726 = vpack.c.b16 %v2715, %v2715
    %v2738 = vsel %vm836, %v2726, 0
    %2740 = vmatprep.subr.bf16.mxu0 0
    %2741 = vmatpush1.bf16.msra.mxu0 %v2716
    %2742 = vmatprep.subr.bf16.mxu0 0
    %2743 = vmatpush1.bf16.msra.mxu0 %v2717
    %2744 = vmatprep.subr.bf16.mxu0 0
    %2745 = vmatpush1.bf16.msra.mxu0 %v2718
    %2746 = vmatprep.subr.bf16.mxu0 0
    %2747 = vmatpush1.bf16.msra.mxu0 %v2719
    %2748 = vmatprep.subr.bf16.mxu0 0
    %2749 = vmatpush1.bf16.msra.mxu0 %v2720
    %2750 = vmatprep.subr.bf16.mxu0 0
    %2751 = vmatpush1.bf16.msra.mxu0 %v2721
    %2752 = vmatprep.subr.bf16.mxu0 0
    %2753 = vmatpush1.bf16.msra.mxu0 %v2722
    %2754 = vmatprep.subr.bf16.mxu0 0
    %2755 = vmatpush1.bf16.msra.mxu0 %v2723
    %2756 = vmatprep.subr.bf16.mxu0 0
    %2757 = vmatpush1.bf16.msra.mxu0 %v2724
    %2758 = vmatprep.subr.bf16.mxu0 0
    %2759 = vmatpush1.bf16.msra.mxu0 %v2725
    %2760 = vmatprep.subr.bf16.mxu0 0
    %2761 = vmatpush1.bf16.msra.mxu0 %v2738
    %2762 = vmatprep.subr.bf16.mxu0 0
    %2763 = vmatpush1.bf16.msra.mxu0 0
    %2764 = vmatprep.subr.bf16.mxu0 0
    %2765 = vmatpush1.bf16.msra.mxu0 0
    %2766 = vmatprep.subr.bf16.mxu0 0
    %2767 = vmatpush1.bf16.msra.mxu0 0
    %2768 = vmatprep.subr.bf16.mxu0 0
    %2769 = vmatpush1.bf16.msra.mxu0 0
    %2770 = vmatprep.subr.bf16.mxu0 0
    %2771 = vmatpush1.bf16.msra.mxu0 0
    %2772 = vmatprep.mubr.bf16.mxu0 %v2607
    %2773 = vmatmul.mubr.bf16.gmra.mrb[0].mxu0 %v2520
    %v2774 = vpop.f32.mrb[0].mxu0
    %v2775 = vadd.f32 0.0, %v2774
    %v2776 = vpop.f32.mrb[0].mxu0
    %v2777 = vpop.f32.mrb[0].mxu0
    %v2778 = vadd.f32 0.0, %v2777
    %v2779 = vpop.f32.mrb[0].mxu0
    %2780 = vdwg.mxu0
    %v2781 = vmax.f32 %v2647, %v2775
    %v2782 = vmax.f32 %v2650, %v2778
    %v2783 = vpack.c.bf16 %v2782, %v2781
    %v2785 = vshrl.u32 %v2783, 16
    %v2787 = vshll.u32 %v2783, 16
    %v2789 = vrot.slane %v2787, 1
    %v2790 = vor.u32 %v2785, %v2789
    %2791 = vrot.lane.b32.xlu0 %v2790, 84
    %v2792 = vpop.permute.xlu0 %2791
    %v2794 = vrot.slane %v2783, 1
    %2795 = vrot.lane.b32.xlu0 %v2794, 40
    %v2796 = vpop.permute.xlu0 %2795
    %v2797 = vrot.slane %v2785, 1
    %v2798 = vrot.slane %v2787, 2
    %v2799 = vor.u32 %v2797, %v2798
    %2800 = vrot.lane.b32.xlu0 %v2799, 124
    %v2801 = vpop.permute.xlu0 %2800
    %v2802 = vrot.slane %v2783, 2
    %2803 = vrot.lane.b32.xlu0 %v2802, 80
    %v2804 = vpop.permute.xlu0 %2803
    %v2806 = vsel %vm1034, %v2783, %v2792
    %v2809 = vsel %vm832, %v2792, %v2796
    %v2811 = vsel %vm1040, %v2809, %v2801
    %v2814 = vsel %vm1044, %v2801, %v2804
    %v2816 = vld [vmem:[%s5] sm:$0xff]
    %v2817 = vld [vmem:[%s5 + $0x8] sm:$0xff]
    %v2818 = vld [vmem:[%s5 + $0x10] sm:$0xff]
    %v2819 = vld [vmem:[%s5 + $0x18] sm:$0xff]
    %v2820 = vld [vmem:[%s5 + $0x20] sm:$0xff]
    %v2821 = vld [vmem:[%s5 + $0x28] sm:$0xff]
    %v2822 = vld [vmem:[%s5 + $0x30] sm:$0xff]
    %v2823 = vld [vmem:[%s5 + $0x38] sm:$0xff]
    %v2824 = vld [vmem:[%s5 + $0x40] sm:$0xff]
    %v2825 = vld [vmem:[%s5 + $0x48] sm:$0xff]
    %v2826 = vld [vmem:[%s5 + $0x50] sm:$0xff]
    %v2827 = vld [vmem:[%s5 + $0x58] sm:$0xff]
    %v2828 = vld [vmem:[%s5 + $0x60] sm:$0xff]
    %v2829 = vld [vmem:[%s5 + $0x68] sm:$0xff]
    %v2830 = vld [vmem:[%s5 + $0x70] sm:$0xff]
    %v2831 = vld [vmem:[%s5 + $0x78] sm:$0xff]
    %v2832 = vld [vmem:[%s5 + $0x80] sm:$0xff]
    %v2833 = vld [vmem:[%s5 + $0x88] sm:$0xff]
    %v2834 = vld [vmem:[%s5 + $0x90] sm:$0xff]
    %v2835 = vld [vmem:[%s5 + $0x98] sm:$0xff]
    %v2836 = vld [vmem:[%s5 + $0xa0] sm:$0xff]
    %v2837 = vld [vmem:[%s5 + $0xa8] sm:$0xff]
    %v2838 = vld [vmem:[%s5 + $0xb0] sm:$0xff]
    %v2839 = vld [vmem:[%s5 + $0xb8] sm:$0xff]
    %v2840 = vld [vmem:[%s5 + $0xc0] sm:$0xff]
    %v2841 = vld [vmem:[%s5 + $0xc8] sm:$0xff]
    %v2842 = vld [vmem:[%s5 + $0xd0] sm:$0xff]
    %v2843 = vld [vmem:[%s5 + $0xd8] sm:$0xff]
    %v2844 = vld [vmem:[%s5 + $0xe0] sm:$0xff]
    %v2845 = vld [vmem:[%s5 + $0xe8] sm:$0xff]
    %v2846 = vld [vmem:[%s5 + $0xf0] sm:$0xff]
    %v2847 = vld [vmem:[%s5 + $0xf8] sm:$0xff]
    %v2848 = vld [vmem:[%s5 + $0x100] sm:$0xff]
    %v2849 = vld [vmem:[%s5 + $0x108] sm:$0xff]
    %v2850 = vld [vmem:[%s5 + $0x110] sm:$0xff]
    %v2851 = vld [vmem:[%s5 + $0x118] sm:$0xff]
    %v2852 = vld [vmem:[%s5 + $0x120] sm:$0xff]
    %v2853 = vld [vmem:[%s5 + $0x128] sm:$0xff]
    %v2854 = vld [vmem:[%s5 + $0x130] sm:$0xff]
    %v2855 = vld [vmem:[%s5 + $0x138] sm:$0xff]
    %v2856 = vld [vmem:[%s5 + $0x140] sm:$0xff]
    %v2857 = vld [vmem:[%s5 + $0x148] sm:$0xff]
    %v2858 = vld [vmem:[%s5 + $0x150] sm:$0xff]
    %v2859 = vld [vmem:[%s5 + $0x158] sm:$0xff]
    %v2860 = vld [vmem:[%s5 + $0x160] sm:$0xff]
    %v2861 = vld [vmem:[%s5 + $0x168] sm:$0xff]
    %v2862 = vld [vmem:[%s5 + $0x170] sm:$0xff]
    %v2863 = vld [vmem:[%s5 + $0x178] sm:$0xff]
    %v2864 = vld [vmem:[%s5 + $0x180] sm:$0xff]
    %v2865 = vld [vmem:[%s5 + $0x188] sm:$0xff]
    %v2866 = vld [vmem:[%s5 + $0x190] sm:$0xff]
    %v2867 = vld [vmem:[%s5 + $0x198] sm:$0xff]
    %v2868 = vld [vmem:[%s5 + $0x1a0] sm:$0x33]
    %v2869 = vld [vmem:[%s6] sm:$0x3]
    %v2871 = vlaneseq
    %v2872 = vshrl.u32 %v2871, 7
    %v2873 = vsub.s32 0, %v2872
    %v2874 = vrot.slane %v2869, %v2873
    %v2875 = vlaneseq
    %v2876 = vshrl.u32 %v2875, 7
    %v2877 = vsub.s32 1, %v2876
    %v2878 = vrot.slane %v2869, %v2877
    %v2934 = vunpack.c.l.b16 %v2816
    %v2935 = vunpack.c.h.b16 %v2816
    %v2936 = vunpack.c.l.b16 %v2817
    %v2937 = vunpack.c.h.b16 %v2817
    %v2938 = vunpack.c.l.b16 %v2818
    %v2939 = vunpack.c.h.b16 %v2818
    %v2940 = vunpack.c.l.b16 %v2819
    %v2941 = vunpack.c.h.b16 %v2819
    %v2942 = vunpack.c.l.b16 %v2820
    %v2943 = vunpack.c.h.b16 %v2820
    %v2944 = vunpack.c.l.b16 %v2821
    %v2945 = vunpack.c.h.b16 %v2821
    %v2946 = vunpack.c.l.b16 %v2822
    %v2947 = vunpack.c.h.b16 %v2822
    %v2948 = vunpack.c.l.b16 %v2823
    %v2949 = vunpack.c.h.b16 %v2823
    %v2950 = vunpack.c.l.b16 %v2824
    %v2951 = vunpack.c.h.b16 %v2824
    %v2952 = vunpack.c.l.b16 %v2825
    %v2953 = vunpack.c.h.b16 %v2825
    %v2954 = vunpack.c.l.b16 %v2826
    %v2955 = vunpack.c.h.b16 %v2826
    %v2956 = vunpack.c.l.b16 %v2827
    %v2957 = vunpack.c.h.b16 %v2827
    %v2958 = vunpack.c.l.b16 %v2828
    %v2959 = vunpack.c.h.b16 %v2828
    %v2960 = vunpack.c.l.b16 %v2829
    %v2961 = vunpack.c.h.b16 %v2829
    %v2962 = vunpack.c.l.b16 %v2830
    %v2963 = vunpack.c.h.b16 %v2830
    %v2964 = vunpack.c.l.b16 %v2831
    %v2965 = vunpack.c.h.b16 %v2831
    %v2966 = vunpack.c.l.b16 %v2832
    %v2967 = vunpack.c.h.b16 %v2832
    %v2968 = vunpack.c.l.b16 %v2833
    %v2969 = vunpack.c.h.b16 %v2833
    %v2970 = vunpack.c.l.b16 %v2834
    %v2971 = vunpack.c.h.b16 %v2834
    %v2972 = vunpack.c.l.b16 %v2835
    %v2973 = vunpack.c.h.b16 %v2835
    %v2974 = vunpack.c.l.b16 %v2836
    %v2975 = vunpack.c.h.b16 %v2836
    %v2976 = vunpack.c.l.b16 %v2837
    %v2977 = vunpack.c.h.b16 %v2837
    %v2978 = vunpack.c.l.b16 %v2838
    %v2979 = vunpack.c.h.b16 %v2838
    %v2980 = vunpack.c.l.b16 %v2839
    %v2981 = vunpack.c.h.b16 %v2839
    %v2982 = vunpack.c.l.b16 %v2840
    %v2983 = vunpack.c.h.b16 %v2840
    %v2984 = vunpack.c.l.b16 %v2841
    %v2985 = vunpack.c.h.b16 %v2841
    %v2986 = vunpack.c.l.b16 %v2842
    %v2987 = vunpack.c.h.b16 %v2842
    %v2988 = vunpack.c.l.b16 %v2843
    %v2989 = vunpack.c.h.b16 %v2843
    %v2990 = vunpack.c.l.b16 %v2844
    %v2991 = vunpack.c.h.b16 %v2844
    %v2992 = vunpack.c.l.b16 %v2845
    %v2993 = vunpack.c.h.b16 %v2845
    %v2994 = vunpack.c.l.b16 %v2846
    %v2995 = vunpack.c.h.b16 %v2846
    %v2996 = vunpack.c.l.b16 %v2847
    %v2997 = vunpack.c.h.b16 %v2847
    %v2998 = vunpack.c.l.b16 %v2848
    %v2999 = vunpack.c.h.b16 %v2848
    %v3000 = vunpack.c.l.b16 %v2849
    %v3001 = vunpack.c.h.b16 %v2849
    %v3002 = vunpack.c.l.b16 %v2850
    %v3003 = vunpack.c.h.b16 %v2850
    %v3004 = vunpack.c.l.b16 %v2851
    %v3005 = vunpack.c.h.b16 %v2851
    %v3006 = vunpack.c.l.b16 %v2852
    %v3007 = vunpack.c.h.b16 %v2852
    %v3008 = vunpack.c.l.b16 %v2853
    %v3009 = vunpack.c.h.b16 %v2853
    %v3010 = vunpack.c.l.b16 %v2854
    %v3011 = vunpack.c.h.b16 %v2854
    %v3012 = vunpack.c.l.b16 %v2855
    %v3013 = vunpack.c.h.b16 %v2855
    %v3014 = vunpack.c.l.b16 %v2856
    %v3015 = vunpack.c.h.b16 %v2856
    %v3016 = vunpack.c.l.b16 %v2857
    %v3017 = vunpack.c.h.b16 %v2857
    %v3018 = vunpack.c.l.b16 %v2858
    %v3019 = vunpack.c.h.b16 %v2858
    %v3020 = vunpack.c.l.b16 %v2859
    %v3021 = vunpack.c.h.b16 %v2859
    %v3022 = vunpack.c.l.b16 %v2860
    %v3023 = vunpack.c.h.b16 %v2860
    %v3024 = vunpack.c.l.b16 %v2861
    %v3025 = vunpack.c.h.b16 %v2861
    %v3026 = vunpack.c.l.b16 %v2862
    %v3027 = vunpack.c.h.b16 %v2862
    %v3028 = vunpack.c.l.b16 %v2863
    %v3029 = vunpack.c.h.b16 %v2863
    %v3030 = vunpack.c.l.b16 %v2864
    %v3031 = vunpack.c.h.b16 %v2864
    %v3032 = vunpack.c.l.b16 %v2865
    %v3033 = vunpack.c.h.b16 %v2865
    %v3034 = vunpack.c.l.b16 %v2866
    %v3035 = vunpack.c.h.b16 %v2866
    %v3036 = vunpack.c.l.b16 %v2867
    %v3037 = vunpack.c.h.b16 %v2867
    %v3038 = vunpack.c.l.b16 %v2868
    %v3039 = vunpack.c.h.b16 %v2868
    %v3040 = vpack.c.b16 %v2936, %v2934
    %v3041 = vpack.c.b16 %v2937, %v2935
    %v3042 = vpack.c.b16 %v2940, %v2938
    %v3043 = vpack.c.b16 %v2941, %v2939
    %v3044 = vpack.c.b16 %v2944, %v2942
    %v3045 = vpack.c.b16 %v2945, %v2943
    %v3046 = vpack.c.b16 %v2948, %v2946
    %v3047 = vpack.c.b16 %v2949, %v2947
    %v3048 = vpack.c.b16 %v2952, %v2950
    %v3049 = vpack.c.b16 %v2953, %v2951
    %v3050 = vpack.c.b16 %v2956, %v2954
    %v3051 = vpack.c.b16 %v2957, %v2955
    %v3052 = vpack.c.b16 %v2960, %v2958
    %v3053 = vpack.c.b16 %v2961, %v2959
    %v3054 = vpack.c.b16 %v2964, %v2962
    %v3055 = vpack.c.b16 %v2965, %v2963
    %v3056 = vpack.c.b16 %v2968, %v2966
    %v3057 = vpack.c.b16 %v2969, %v2967
    %v3058 = vpack.c.b16 %v2972, %v2970
    %v3059 = vpack.c.b16 %v2973, %v2971
    %v3060 = vpack.c.b16 %v2976, %v2974
    %v3061 = vpack.c.b16 %v2977, %v2975
    %v3062 = vpack.c.b16 %v2980, %v2978
    %v3063 = vpack.c.b16 %v2981, %v2979
    %v3064 = vpack.c.b16 %v2984, %v2982
    %v3065 = vpack.c.b16 %v2985, %v2983
    %v3066 = vpack.c.b16 %v2988, %v2986
    %v3067 = vpack.c.b16 %v2989, %v2987
    %v3068 = vpack.c.b16 %v2992, %v2990
    %v3069 = vpack.c.b16 %v2993, %v2991
    %v3070 = vpack.c.b16 %v2996, %v2994
    %v3071 = vpack.c.b16 %v2997, %v2995
    %v3072 = vpack.c.b16 %v3000, %v2998
    %v3073 = vpack.c.b16 %v3001, %v2999
    %v3074 = vpack.c.b16 %v3004, %v3002
    %v3075 = vpack.c.b16 %v3005, %v3003
    %v3076 = vpack.c.b16 %v3008, %v3006
    %v3077 = vpack.c.b16 %v3009, %v3007
    %v3078 = vpack.c.b16 %v3012, %v3010
    %v3079 = vpack.c.b16 %v3013, %v3011
    %v3080 = vpack.c.b16 %v3016, %v3014
    %v3081 = vpack.c.b16 %v3017, %v3015
    %v3082 = vpack.c.b16 %v3020, %v3018
    %v3083 = vpack.c.b16 %v3021, %v3019
    %v3084 = vpack.c.b16 %v3024, %v3022
    %v3085 = vpack.c.b16 %v3025, %v3023
    %v3086 = vpack.c.b16 %v3028, %v3026
    %v3087 = vpack.c.b16 %v3029, %v3027
    %v3088 = vpack.c.b16 %v3032, %v3030
    %v3089 = vpack.c.b16 %v3033, %v3031
    %v3090 = vpack.c.b16 %v3036, %v3034
    %v3091 = vpack.c.b16 %v3037, %v3035
    %v3092 = vpack.c.b16 %v3038, %v3038
    %v3093 = vpack.c.b16 %v3039, %v3039
    %v3146 = vsel %vm1378, %v2804, 0
    %v3149 = vsel %vm1381, %v3092, 0
    %v3152 = vsel %vm1381, %v3093, 0
    %3154 = vmatprep.subr.bf16.mxu0 %v3041
    %3155 = vmatpush1.bf16.msra.mxu0 %v3040
    %3156 = vmatprep.subr.bf16.mxu0 %v3043
    %3157 = vmatpush1.bf16.msra.mxu0 %v3042
    %3158 = vmatprep.subr.bf16.mxu0 %v3045
    %3159 = vmatpush1.bf16.msra.mxu0 %v3044
    %3160 = vmatprep.subr.bf16.mxu0 %v3047
    %3161 = vmatpush1.bf16.msra.mxu0 %v3046
    %3162 = vmatprep.subr.bf16.mxu0 %v3049
    %3163 = vmatpush1.bf16.msra.mxu0 %v3048
    %3164 = vmatprep.subr.bf16.mxu0 %v3051
    %3165 = vmatpush1.bf16.msra.mxu0 %v3050
    %3166 = vmatprep.subr.bf16.mxu0 %v3053
    %3167 = vmatpush1.bf16.msra.mxu0 %v3052
    %3168 = vmatprep.subr.bf16.mxu0 %v3055
    %3169 = vmatpush1.bf16.msra.mxu0 %v3054
    %3170 = vmatprep.subr.bf16.mxu0 %v3057
    %3171 = vmatpush1.bf16.msra.mxu0 %v3056
    %3172 = vmatprep.subr.bf16.mxu0 %v3059
    %3173 = vmatpush1.bf16.msra.mxu0 %v3058
    %3174 = vmatprep.subr.bf16.mxu0 %v3061
    %3175 = vmatpush1.bf16.msra.mxu0 %v3060
    %3176 = vmatprep.subr.bf16.mxu0 %v3063
    %3177 = vmatpush1.bf16.msra.mxu0 %v3062
    %3178 = vmatprep.subr.bf16.mxu0 %v3065
    %3179 = vmatpush1.bf16.msra.mxu0 %v3064
    %3180 = vmatprep.subr.bf16.mxu0 %v3067
    %3181 = vmatpush1.bf16.msra.mxu0 %v3066
    %3182 = vmatprep.subr.bf16.mxu0 %v3069
    %3183 = vmatpush1.bf16.msra.mxu0 %v3068
    %3184 = vmatprep.subr.bf16.mxu0 %v3071
    %3185 = vmatpush1.bf16.msra.mxu0 %v3070
    %3186 = vmatprep.mubr.bf16.mxu0 %v2811
    %3187 = vmatmul.mubr.bf16.gmra.mrb[0].mxu0 %v2806
    %v3188 = vpop.f32.mrb[0].mxu0
    %v3189 = vadd.f32 %v2874, %v3188
    %v3190 = vpop.f32.mrb[0].mxu0
    %v3191 = vadd.f32 %v2878, %v3190
    %v3192 = vpop.f32.mrb[0].mxu0
    %v3193 = vadd.f32 %v2874, %v3192
    %v3194 = vpop.f32.mrb[0].mxu0
    %v3195 = vadd.f32 %v2878, %v3194
    %3196 = vdwg.mxu0
    %3197 = vmatprep.subr.bf16.mxu0 %v3073
    %3198 = vmatpush1.bf16.msra.mxu0 %v3072
    %3199 = vmatprep.subr.bf16.mxu0 %v3075
    %3200 = vmatpush1.bf16.msra.mxu0 %v3074
    %3201 = vmatprep.subr.bf16.mxu0 %v3077
    %3202 = vmatpush1.bf16.msra.mxu0 %v3076
    %3203 = vmatprep.subr.bf16.mxu0 %v3079
    %3204 = vmatpush1.bf16.msra.mxu0 %v3078
    %3205 = vmatprep.subr.bf16.mxu0 %v3081
    %3206 = vmatpush1.bf16.msra.mxu0 %v3080
    %3207 = vmatprep.subr.bf16.mxu0 %v3083
    %3208 = vmatpush1.bf16.msra.mxu0 %v3082
    %3209 = vmatprep.subr.bf16.mxu0 %v3085
    %3210 = vmatpush1.bf16.msra.mxu0 %v3084
    %3211 = vmatprep.subr.bf16.mxu0 %v3087
    %3212 = vmatpush1.bf16.msra.mxu0 %v3086
    %3213 = vmatprep.subr.bf16.mxu0 %v3089
    %3214 = vmatpush1.bf16.msra.mxu0 %v3088
    %3215 = vmatprep.subr.bf16.mxu0 %v3091
    %3216 = vmatpush1.bf16.msra.mxu0 %v3090
    %3217 = vmatprep.subr.bf16.mxu0 %v3152
    %3218 = vmatpush1.bf16.msra.mxu0 %v3149
    %3219 = vmatprep.subr.bf16.mxu0 0
    %3220 = vmatpush1.bf16.msra.mxu0 0
    %3221 = vmatprep.subr.bf16.mxu0 0
    %3222 = vmatpush1.bf16.msra.mxu0 0
    %3223 = vmatprep.subr.bf16.mxu0 0
    %3224 = vmatpush1.bf16.msra.mxu0 0
    %3225 = vmatprep.subr.bf16.mxu0 0
    %3226 = vmatpush1.bf16.msra.mxu0 0
    %3227 = vmatprep.subr.bf16.mxu0 0
    %3228 = vmatpush1.bf16.msra.mxu0 0
    %3229 = vmatprep.mubr.bf16.mxu0 %v3146
    %3230 = vmatmul.mubr.bf16.gmra.mrb[0].mxu0 %v2814
    %v3231 = vpop.f32.mrb[0].mxu0
    %v3232 = vadd.f32 %v3189, %v3231
    %v3233 = vpop.f32.mrb[0].mxu0
    %v3234 = vadd.f32 %v3191, %v3233
    %v3235 = vpop.f32.mrb[0].mxu0
    %v3236 = vadd.f32 %v3193, %v3235
    %v3237 = vpop.f32.mrb[0].mxu0
    %v3238 = vadd.f32 %v3195, %v3237
    %3239 = vdwg.mxu0
    %v3240 = vmax.f32 %v3232, 0.0
    %v3241 = vmax.f32 %v3234, 0.0
    %v3242 = vmax.f32 %v3236, 0.0
    %v3243 = vmax.f32 %v3238, 0.0
    %v3244 = vpack.c.bf16 %v3242, %v3240
    %v3245 = vpack.c.bf16 %v3243, %v3241
    %v3246 = vld [vmem:[%s7] sm:$0x7]
    %v3248 = vsel %vm1481, %v3246, 0
    %v3251 = vsel %vm1485, %v3244, 0
    %v3254 = vsel %vm1485, %v3245, 0
    %3256 = vmatprep.subr.bf16.mxu0 %v3254
    %3257 = vmatpush1.bf16.msra.mxu0 %v3251
    %3258 = vmatprep.subr.bf16.mxu0 0
    %3259 = vmatpush1.bf16.msra.mxu0 0
    %3260 = vmatprep.subr.bf16.mxu0 0
    %3261 = vmatpush1.bf16.msra.mxu0 0
    %3262 = vmatprep.subr.bf16.mxu0 0
    %3263 = vmatpush1.bf16.msra.mxu0 0
    %3264 = vmatprep.subr.bf16.mxu0 0
    %3265 = vmatpush1.bf16.msra.mxu0 0
    %3266 = vmatprep.subr.bf16.mxu0 0
    %3267 = vmatpush1.bf16.msra.mxu0 0
    %3268 = vmatprep.subr.bf16.mxu0 0
    %3269 = vmatpush1.bf16.msra.mxu0 0
    %3270 = vmatprep.subr.bf16.mxu0 0
    %3271 = vmatpush1.bf16.msra.mxu0 0
    %3272 = vmatprep.subr.bf16.mxu0 0
    %3273 = vmatpush1.bf16.msra.mxu0 0
    %3274 = vmatprep.subr.bf16.mxu0 0
    %3275 = vmatpush1.bf16.msra.mxu0 0
    %3276 = vmatprep.subr.bf16.mxu0 0
    %3277 = vmatpush1.bf16.msra.mxu0 0
    %3278 = vmatprep.subr.bf16.mxu0 0
    %3279 = vmatpush1.bf16.msra.mxu0 0
    %3280 = vmatprep.subr.bf16.mxu0 0
    %3281 = vmatpush1.bf16.msra.mxu0 0
    %3282 = vmatprep.subr.bf16.mxu0 0
    %3283 = vmatpush1.bf16.msra.mxu0 0
    %3284 = vmatprep.subr.bf16.mxu0 0
    %3285 = vmatpush1.bf16.msra.mxu0 0
    %3286 = vmatprep.subr.bf16.mxu0 0
    %3287 = vmatpush1.bf16.msra.mxu0 0
    %3288 = vmatprep.mubr.bf16.mxu0 0
    %3289 = vmatmul.mubr.bf16.gmra.mrb[0].mxu0 %v3248
    %v3290 = vpop.f32.mrb[0].mxu0
    %v3291 = vadd.f32 0.0, %v3290
    %v3292 = vpop.f32.mrb[0].mxu0
    %v3293 = vadd.f32 0.0, %v3292
    %v3294 = vpop.f32.mrb[0].mxu0
    %v3295 = vpop.f32.mrb[0].mxu0
    %3296 = vdwg.mxu0
    %v3297 = vld [vmem:[%s1533] sm:$0x7]
    %v3299 = vsel %vm1481, %v3297, 0
    %3301 = vmatprep.subr.bf16.mxu0 %v3254
    %3302 = vmatpush1.bf16.msra.mxu0 %v3251
    %3303 = vmatprep.subr.bf16.mxu0 0
    %3304 = vmatpush1.bf16.msra.mxu0 0
    %3305 = vmatprep.subr.bf16.mxu0 0
    %3306 = vmatpush1.bf16.msra.mxu0 0
    %3307 = vmatprep.subr.bf16.mxu0 0
    %3308 = vmatpush1.bf16.msra.mxu0 0
    %3309 = vmatprep.subr.bf16.mxu0 0
    %3310 = vmatpush1.bf16.msra.mxu0 0
    %3311 = vmatprep.subr.bf16.mxu0 0
    %3312 = vmatpush1.bf16.msra.mxu0 0
    %3313 = vmatprep.subr.bf16.mxu0 0
    %3314 = vmatpush1.bf16.msra.mxu0 0
    %3315 = vmatprep.subr.bf16.mxu0 0
    %3316 = vmatpush1.bf16.msra.mxu0 0
    %3317 = vmatprep.subr.bf16.mxu0 0
    %3318 = vmatpush1.bf16.msra.mxu0 0
    %3319 = vmatprep.subr.bf16.mxu0 0
    %3320 = vmatpush1.bf16.msra.mxu0 0
    %3321 = vmatprep.subr.bf16.mxu0 0
    %3322 = vmatpush1.bf16.msra.mxu0 0
    %3323 = vmatprep.subr.bf16.mxu0 0
    %3324 = vmatpush1.bf16.msra.mxu0 0
    %3325 = vmatprep.subr.bf16.mxu0 0
    %3326 = vmatpush1.bf16.msra.mxu0 0
    %3327 = vmatprep.subr.bf16.mxu0 0
    %3328 = vmatpush1.bf16.msra.mxu0 0
    %3329 = vmatprep.subr.bf16.mxu0 0
    %3330 = vmatpush1.bf16.msra.mxu0 0
    %3331 = vmatprep.subr.bf16.mxu0 0
    %3332 = vmatpush1.bf16.msra.mxu0 0
    %3333 = vmatprep.mubr.bf16.mxu0 0
    %3334 = vmatmul.mubr.bf16.gmra.mrb[0].mxu0 %v3299
    %v3335 = vpop.f32.mrb[0].mxu0
    %v3336 = vadd.f32 0.0, %v3335
    %v3337 = vpop.f32.mrb[0].mxu0
    %v3338 = vadd.f32 0.0, %v3337
    %v3339 = vpop.f32.mrb[0].mxu0
    %v3340 = vpop.f32.mrb[0].mxu0
    %3341 = vdwg.mxu0
    %v3342 = vmax.f32 %v3291, %v3336
    %v3343 = vmax.f32 %v3293, %v3338
    %v3344 = vpack.c.bf16 %v3342, %v3342
    %v3345 = vpack.c.bf16 %v3343, %v3343
    %v3346 = vld [vmem:[%s8] sm:$0xf]
    %v3347 = vld [vmem:[%s8 + $0x4] sm:$0xf]
    %v3348 = vld [vmem:[%s8 + $0x8] sm:$0xf]
    %v3349 = vld [vmem:[%s8 + $0xc] sm:$0xf]
    %v3350 = vld [vmem:[%s8 + $0x10] sm:$0xf]
    %v3351 = vld [vmem:[%s8 + $0x14] sm:$0xf]
    %v3352 = vld [vmem:[%s8 + $0x18] sm:$0xf]
    %v3353 = vld [vmem:[%s8 + $0x1c] sm:$0xf]
    %v3354 = vld [vmem:[%s8 + $0x20] sm:$0xf]
    %v3355 = vld [vmem:[%s8 + $0x24] sm:$0xf]
    %v3356 = vld [vmem:[%s8 + $0x28] sm:$0xf]
    %v3357 = vld [vmem:[%s8 + $0x2c] sm:$0xf]
    %v3358 = vld [vmem:[%s8 + $0x30] sm:$0xf]
    %v3359 = vld [vmem:[%s8 + $0x34] sm:$0xf]
    %v3360 = vld [vmem:[%s8 + $0x38] sm:$0xf]
    %v3361 = vld [vmem:[%s8 + $0x3c] sm:$0xf]
    %v3362 = vld [vmem:[%s8 + $0x40] sm:$0xf]
    %v3363 = vld [vmem:[%s8 + $0x44] sm:$0xf]
    %v3364 = vld [vmem:[%s8 + $0x48] sm:$0xf]
    %v3365 = vld [vmem:[%s8 + $0x4c] sm:$0xf]
    %v3386 = vunpack.c.l.b16 %v3346
    %v3387 = vunpack.c.l.b16 %v3347
    %v3388 = vunpack.c.l.b16 %v3348
    %v3389 = vunpack.c.l.b16 %v3349
    %v3390 = vunpack.c.l.b16 %v3350
    %v3391 = vunpack.c.l.b16 %v3351
    %v3392 = vunpack.c.l.b16 %v3352
    %v3393 = vunpack.c.l.b16 %v3353
    %v3394 = vunpack.c.l.b16 %v3354
    %v3395 = vunpack.c.l.b16 %v3355
    %v3396 = vunpack.c.l.b16 %v3356
    %v3397 = vunpack.c.l.b16 %v3357
    %v3398 = vunpack.c.l.b16 %v3358
    %v3399 = vunpack.c.l.b16 %v3359
    %v3400 = vunpack.c.l.b16 %v3360
    %v3401 = vunpack.c.l.b16 %v3361
    %v3402 = vunpack.c.l.b16 %v3362
    %v3403 = vunpack.c.l.b16 %v3363
    %v3404 = vunpack.c.l.b16 %v3364
    %v3405 = vunpack.c.l.b16 %v3365
    %v3406 = vpack.c.b16 %v3387, %v3386
    %v3407 = vpack.c.b16 %v3389, %v3388
    %v3408 = vpack.c.b16 %v3391, %v3390
    %v3409 = vpack.c.b16 %v3393, %v3392
    %v3410 = vpack.c.b16 %v3395, %v3394
    %v3411 = vpack.c.b16 %v3397, %v3396
    %v3412 = vpack.c.b16 %v3399, %v3398
    %v3413 = vpack.c.b16 %v3401, %v3400
    %v3414 = vpack.c.b16 %v3403, %v3402
    %v3415 = vpack.c.b16 %v3405, %v3404
    %v3427 = vsel %vm124, %v3345, 0
    %3429 = vmatprep.subr.bf16.mxu0 0
    %3430 = vmatpush1.bf16.msra.mxu0 %v3406
    %3431 = vmatprep.subr.bf16.mxu0 0
    %3432 = vmatpush1.bf16.msra.mxu0 %v3407
    %3433 = vmatprep.subr.bf16.mxu0 0
    %3434 = vmatpush1.bf16.msra.mxu0 %v3408
    %3435 = vmatprep.subr.bf16.mxu0 0
    %3436 = vmatpush1.bf16.msra.mxu0 %v3409
    %3437 = vmatprep.subr.bf16.mxu0 0
    %3438 = vmatpush1.bf16.msra.mxu0 %v3410
    %3439 = vmatprep.subr.bf16.mxu0 0
    %3440 = vmatpush1.bf16.msra.mxu0 %v3411
    %3441 = vmatprep.subr.bf16.mxu0 0
    %3442 = vmatpush1.bf16.msra.mxu0 %v3412
    %3443 = vmatprep.subr.bf16.mxu0 0
    %3444 = vmatpush1.bf16.msra.mxu0 %v3413
    %3445 = vmatprep.subr.bf16.mxu0 0
    %3446 = vmatpush1.bf16.msra.mxu0 %v3414
    %3447 = vmatprep.subr.bf16.mxu0 0
    %3448 = vmatpush1.bf16.msra.mxu0 %v3415
    %3449 = vmatprep.subr.bf16.mxu0 0
    %3450 = vmatpush1.bf16.msra.mxu0 0
    %3451 = vmatprep.subr.bf16.mxu0 0
    %3452 = vmatpush1.bf16.msra.mxu0 0
    %3453 = vmatprep.subr.bf16.mxu0 0
    %3454 = vmatpush1.bf16.msra.mxu0 0
    %3455 = vmatprep.subr.bf16.mxu0 0
    %3456 = vmatpush1.bf16.msra.mxu0 0
    %3457 = vmatprep.subr.bf16.mxu0 0
    %3458 = vmatpush1.bf16.msra.mxu0 0
    %3459 = vmatprep.subr.bf16.mxu0 0
    %3460 = vmatpush1.bf16.msra.mxu0 0
    %3461 = vmatprep.mubr.bf16.mxu0 %v3427
    %3462 = vmatmul.mubr.bf16.gmra.mrb[0].mxu0 %v3344
    %v3463 = vpop.f32.mrb[0].mxu0
    %v3464 = vadd.f32 0.0, %v3463
    %v3465 = vpop.f32.mrb[0].mxu0
    %v3466 = vpop.f32.mrb[0].mxu0
    %v3467 = vpop.f32.mrb[0].mxu0
    %3468 = vdwg.mxu0
    %v3469 = vld [vmem:[%s1706] sm:$0xf]
    %v3470 = vld [vmem:[%s1706 + $0x4] sm:$0xf]
    %v3471 = vld [vmem:[%s1706 + $0x8] sm:$0xf]
    %v3472 = vld [vmem:[%s1706 + $0xc] sm:$0xf]
    %v3473 = vld [vmem:[%s1706 + $0x10] sm:$0xf]
    %v3474 = vld [vmem:[%s1706 + $0x14] sm:$0xf]
    %v3475 = vld [vmem:[%s1706 + $0x18] sm:$0xf]
    %v3476 = vld [vmem:[%s1706 + $0x1c] sm:$0xf]
    %v3477 = vld [vmem:[%s1706 + $0x20] sm:$0xf]
    %v3478 = vld [vmem:[%s1706 + $0x24] sm:$0xf]
    %v3479 = vld [vmem:[%s1706 + $0x28] sm:$0xf]
    %v3480 = vld [vmem:[%s1706 + $0x2c] sm:$0xf]
    %v3481 = vld [vmem:[%s1706 + $0x30] sm:$0xf]
    %v3482 = vld [vmem:[%s1706 + $0x34] sm:$0xf]
    %v3483 = vld [vmem:[%s1706 + $0x38] sm:$0xf]
    %v3484 = vld [vmem:[%s1706 + $0x3c] sm:$0xf]
    %v3485 = vld [vmem:[%s1706 + $0x40] sm:$0xf]
    %v3486 = vld [vmem:[%s1706 + $0x44] sm:$0xf]
    %v3487 = vld [vmem:[%s1706 + $0x48] sm:$0xf]
    %v3488 = vld [vmem:[%s1706 + $0x4c] sm:$0xf]
    %v3509 = vunpack.c.l.b16 %v3469
    %v3510 = vunpack.c.l.b16 %v3470
    %v3511 = vunpack.c.l.b16 %v3471
    %v3512 = vunpack.c.l.b16 %v3472
    %v3513 = vunpack.c.l.b16 %v3473
    %v3514 = vunpack.c.l.b16 %v3474
    %v3515 = vunpack.c.l.b16 %v3475
    %v3516 = vunpack.c.l.b16 %v3476
    %v3517 = vunpack.c.l.b16 %v3477
    %v3518 = vunpack.c.l.b16 %v3478
    %v3519 = vunpack.c.l.b16 %v3479
    %v3520 = vunpack.c.l.b16 %v3480
    %v3521 = vunpack.c.l.b16 %v3481
    %v3522 = vunpack.c.l.b16 %v3482
    %v3523 = vunpack.c.l.b16 %v3483
    %v3524 = vunpack.c.l.b16 %v3484
    %v3525 = vunpack.c.l.b16 %v3485
    %v3526 = vunpack.c.l.b16 %v3486
    %v3527 = vunpack.c.l.b16 %v3487
    %v3528 = vunpack.c.l.b16 %v3488
    %v3529 = vpack.c.b16 %v3510, %v3509
    %v3530 = vpack.c.b16 %v3512, %v3511
    %v3531 = vpack.c.b16 %v3514, %v3513
    %v3532 = vpack.c.b16 %v3516, %v3515
    %v3533 = vpack.c.b16 %v3518, %v3517
    %v3534 = vpack.c.b16 %v3520, %v3519
    %v3535 = vpack.c.b16 %v3522, %v3521
    %v3536 = vpack.c.b16 %v3524, %v3523
    %v3537 = vpack.c.b16 %v3526, %v3525
    %v3538 = vpack.c.b16 %v3528, %v3527
    %3549 = vmatprep.subr.bf16.mxu0 0
    %3550 = vmatpush1.bf16.msra.mxu0 %v3529
    %3551 = vmatprep.subr.bf16.mxu0 0
    %3552 = vmatpush1.bf16.msra.mxu0 %v3530
    %3553 = vmatprep.subr.bf16.mxu0 0
    %3554 = vmatpush1.bf16.msra.mxu0 %v3531
    %3555 = vmatprep.subr.bf16.mxu0 0
    %3556 = vmatpush1.bf16.msra.mxu0 %v3532
    %3557 = vmatprep.subr.bf16.mxu0 0
    %3558 = vmatpush1.bf16.msra.mxu0 %v3533
    %3559 = vmatprep.subr.bf16.mxu0 0
    %3560 = vmatpush1.bf16.msra.mxu0 %v3534
    %3561 = vmatprep.subr.bf16.mxu0 0
    %3562 = vmatpush1.bf16.msra.mxu0 %v3535
    %3563 = vmatprep.subr.bf16.mxu0 0
    %3564 = vmatpush1.bf16.msra.mxu0 %v3536
    %3565 = vmatprep.subr.bf16.mxu0 0
    %3566 = vmatpush1.bf16.msra.mxu0 %v3537
    %3567 = vmatprep.subr.bf16.mxu0 0
    %3568 = vmatpush1.bf16.msra.mxu0 %v3538
    %3569 = vmatprep.subr.bf16.mxu0 0
    %3570 = vmatpush1.bf16.msra.mxu0 0
    %3571 = vmatprep.subr.bf16.mxu0 0
    %3572 = vmatpush1.bf16.msra.mxu0 0
    %3573 = vmatprep.subr.bf16.mxu0 0
    %3574 = vmatpush1.bf16.msra.mxu0 0
    %3575 = vmatprep.subr.bf16.mxu0 0
    %3576 = vmatpush1.bf16.msra.mxu0 0
    %3577 = vmatprep.subr.bf16.mxu0 0
    %3578 = vmatpush1.bf16.msra.mxu0 0
    %3579 = vmatprep.subr.bf16.mxu0 0
    %3580 = vmatpush1.bf16.msra.mxu0 0
    %3581 = vmatprep.mubr.bf16.mxu0 %v3427
    %3582 = vmatmul.mubr.bf16.gmra.mrb[0].mxu0 %v3344
    %v3583 = vpop.f32.mrb[0].mxu0
    %v3584 = vadd.f32 0.0, %v3583
    %v3585 = vpop.f32.mrb[0].mxu0
    %v3586 = vpop.f32.mrb[0].mxu0
    %v3587 = vpop.f32.mrb[0].mxu0
    %3588 = vdwg.mxu0
    %v3589 = vmax.f32 %v3464, %v3584
    %v3590 = vpack.c.bf16 %v3589, %v3589
    %s3591 = scalar_lea.vmem [#allocation2], 4
    %v3592 = vld [vmem:[%s3591] sm:$0x7]
    %v3593 = vsel %vm1831, %v3590, %v3592
    %3594 = vst [vmem:[%s3591] sm:$0x7] %v3593
    %v3595 = vld [vmem:[#allocation2] sm:$0x1]
    %v3596 = vld [vmem:[#allocation2 + $0x4] sm:$0x1]
    %v3597 = vld [vmem:[%s9] sm:$0xf]
    %v3598 = vld [vmem:[%s9 + $0x4] sm:$0xf]
    %v3599 = vld [vmem:[%s9 + $0x8] sm:$0xf]
    %v3600 = vld [vmem:[%s9 + $0xc] sm:$0xf]
    %v3601 = vld [vmem:[%s9 + $0x10] sm:$0xf]
    %v3602 = vld [vmem:[%s9 + $0x14] sm:$0xf]
    %v3603 = vld [vmem:[%s9 + $0x18] sm:$0xf]
    %v3604 = vld [vmem:[%s9 + $0x1c] sm:$0xf]
    %v3605 = vld [vmem:[%s9 + $0x20] sm:$0xf]
    %v3606 = vld [vmem:[%s9 + $0x24] sm:$0xf]
    %s3607 = scalar_lea.vmem %s9, 40
    %v3608 = vld [vmem:[%s3607] sm:$0xf]
    %v3609 = vld [vmem:[%s3607 + $0x4] sm:$0xf]
    %v3610 = vld [vmem:[%s3607 + $0x8] sm:$0xf]
    %v3611 = vld [vmem:[%s3607 + $0xc] sm:$0xf]
    %v3612 = vld [vmem:[%s3607 + $0x10] sm:$0xf]
    %v3613 = vld [vmem:[%s3607 + $0x14] sm:$0xf]
    %v3614 = vld [vmem:[%s3607 + $0x18] sm:$0xf]
    %v3615 = vld [vmem:[%s3607 + $0x1c] sm:$0xf]
    %v3616 = vld [vmem:[%s3607 + $0x20] sm:$0xf]
    %v3617 = vld [vmem:[%s3607 + $0x24] sm:$0xf]
    %v3620 = vunpack.c.l.b16 %v3595
    %v3621 = vunpack.c.l.b16 %v3596
    %v3622 = vpack.c.b16 %v3620, %v3620
    %v3623 = vpack.c.b16 %v3621, %v3621
    %v3624 = vunpack.c.l.b16 %v3622
    %v3625 = vunpack.c.l.b16 %v3623
    %v3626 = vrot.slane %v3624, 1
    %vm3627 = vcmask 1041409
    %v3628 = vsel %vm3627, %v3625, %v3626
    %v3629 = vpack.c.b16 %v3628, %v3628
    %v3640 = vunpack.c.l.b16 %v3608
    %v3641 = vunpack.c.l.b16 %v3609
    %v3642 = vunpack.c.l.b16 %v3610
    %v3643 = vunpack.c.l.b16 %v3611
    %v3644 = vunpack.c.l.b16 %v3612
    %v3645 = vunpack.c.l.b16 %v3613
    %v3646 = vunpack.c.l.b16 %v3614
    %v3647 = vunpack.c.l.b16 %v3615
    %v3648 = vunpack.c.l.b16 %v3616
    %v3649 = vunpack.c.l.b16 %v3617
    %v3650 = vpack.c.b16 %v3641, %v3640
    %v3651 = vpack.c.b16 %v3643, %v3642
    %v3652 = vpack.c.b16 %v3645, %v3644
    %v3653 = vpack.c.b16 %v3647, %v3646
    %v3654 = vpack.c.b16 %v3649, %v3648
    %v3661 = vsel %vm1044, %v3629, 0
    %3663 = vmatprep.subr.bf16.mxu0 0
    %3664 = vmatpush1.bf16.msra.mxu0 %v3650
    %3665 = vmatprep.subr.bf16.mxu0 0
    %3666 = vmatpush1.bf16.msra.mxu0 %v3651
    %3667 = vmatprep.subr.bf16.mxu0 0
    %3668 = vmatpush1.bf16.msra.mxu0 %v3652
    %3669 = vmatprep.subr.bf16.mxu0 0
    %3670 = vmatpush1.bf16.msra.mxu0 %v3653
    %3671 = vmatprep.subr.bf16.mxu0 0
    %3672 = vmatpush1.bf16.msra.mxu0 %v3654
    %3673 = vmatprep.subr.bf16.mxu0 0
    %3674 = vmatpush1.bf16.msra.mxu0 0
    %3675 = vmatprep.subr.bf16.mxu0 0
    %3676 = vmatpush1.bf16.msra.mxu0 0
    %3677 = vmatprep.subr.bf16.mxu0 0
    %3678 = vmatpush1.bf16.msra.mxu0 0
    %3679 = vmatprep.subr.bf16.mxu0 0
    %3680 = vmatpush1.bf16.msra.mxu0 0
    %3681 = vmatprep.subr.bf16.mxu0 0
    %3682 = vmatpush1.bf16.msra.mxu0 0
    %3683 = vmatprep.subr.bf16.mxu0 0
    %3684 = vmatpush1.bf16.msra.mxu0 0
    %3685 = vmatprep.subr.bf16.mxu0 0
    %3686 = vmatpush1.bf16.msra.mxu0 0
    %3687 = vmatprep.subr.bf16.mxu0 0
    %3688 = vmatpush1.bf16.msra.mxu0 0
    %3689 = vmatprep.subr.bf16.mxu0 0
    %3690 = vmatpush1.bf16.msra.mxu0 0
    %3691 = vmatprep.subr.bf16.mxu0 0
    %3692 = vmatpush1.bf16.msra.mxu0 0
    %3693 = vmatprep.subr.bf16.mxu0 0
    %3694 = vmatpush1.bf16.msra.mxu0 0
    %3695 = vmatprep.mubr.bf16.mxu0 0
    %3696 = vmatmul.mubr.bf16.gmra.mrb[0].mxu0 %v3661
    %v3697 = vpop.f32.mrb[0].mxu0
    %v3698 = vadd.f32 0.0, %v3697
    %v3699 = vpop.f32.mrb[0].mxu0
    %v3700 = vpop.f32.mrb[0].mxu0
    %v3701 = vpop.f32.mrb[0].mxu0
    %3702 = vdwg.mxu0
    %v3703 = vrot.slane %v3625, 7
    %v3704 = vsel %vm3627, %v3703, %v3624
    %v3705 = vpack.c.b16 %v3704, %v3704
    %v3716 = vunpack.c.l.b16 %v3597
    %v3717 = vunpack.c.l.b16 %v3598
    %v3718 = vunpack.c.l.b16 %v3599
    %v3719 = vunpack.c.l.b16 %v3600
    %v3720 = vunpack.c.l.b16 %v3601
    %v3721 = vunpack.c.l.b16 %v3602
    %v3722 = vunpack.c.l.b16 %v3603
    %v3723 = vunpack.c.l.b16 %v3604
    %v3724 = vunpack.c.l.b16 %v3605
    %v3725 = vunpack.c.l.b16 %v3606
    %v3726 = vpack.c.b16 %v3717, %v3716
    %v3727 = vpack.c.b16 %v3719, %v3718
    %v3728 = vpack.c.b16 %v3721, %v3720
    %v3729 = vpack.c.b16 %v3723, %v3722
    %v3730 = vpack.c.b16 %v3725, %v3724
    %v3737 = vsel %vm1044, %v3705, 0
    %3739 = vmatprep.subr.bf16.mxu0 0
    %3740 = vmatpush1.bf16.msra.mxu0 %v3726
    %3741 = vmatprep.subr.bf16.mxu0 0
    %3742 = vmatpush1.bf16.msra.mxu0 %v3727
    %3743 = vmatprep.subr.bf16.mxu0 0
    %3744 = vmatpush1.bf16.msra.mxu0 %v3728
    %3745 = vmatprep.subr.bf16.mxu0 0
    %3746 = vmatpush1.bf16.msra.mxu0 %v3729
    %3747 = vmatprep.subr.bf16.mxu0 0
    %3748 = vmatpush1.bf16.msra.mxu0 %v3730
    %3749 = vmatprep.subr.bf16.mxu0 0
    %3750 = vmatpush1.bf16.msra.mxu0 0
    %3751 = vmatprep.subr.bf16.mxu0 0
    %3752 = vmatpush1.bf16.msra.mxu0 0
    %3753 = vmatprep.subr.bf16.mxu0 0
    %3754 = vmatpush1.bf16.msra.mxu0 0
    %3755 = vmatprep.subr.bf16.mxu0 0
    %3756 = vmatpush1.bf16.msra.mxu0 0
    %3757 = vmatprep.subr.bf16.mxu0 0
    %3758 = vmatpush1.bf16.msra.mxu0 0
    %3759 = vmatprep.subr.bf16.mxu0 0
    %3760 = vmatpush1.bf16.msra.mxu0 0
    %3761 = vmatprep.subr.bf16.mxu0 0
    %3762 = vmatpush1.bf16.msra.mxu0 0
    %3763 = vmatprep.subr.bf16.mxu0 0
    %3764 = vmatpush1.bf16.msra.mxu0 0
    %3765 = vmatprep.subr.bf16.mxu0 0
    %3766 = vmatpush1.bf16.msra.mxu0 0
    %3767 = vmatprep.subr.bf16.mxu0 0
    %3768 = vmatpush1.bf16.msra.mxu0 0
    %3769 = vmatprep.subr.bf16.mxu0 0
    %3770 = vmatpush1.bf16.msra.mxu0 0
    %3771 = vmatprep.mubr.bf16.mxu0 0
    %3772 = vmatmul.mubr.bf16.gmra.mrb[0].mxu0 %v3737
    %v3773 = vpop.f32.mrb[0].mxu0
    %v3774 = vadd.f32 %v3698, %v3773
    %v3775 = vpop.f32.mrb[0].mxu0
    %v3776 = vpop.f32.mrb[0].mxu0
    %v3777 = vpop.f32.mrb[0].mxu0
    %3778 = vdwg.mxu0
    %v3779 = vld [vmem:[#allocation2] sm:$0x2]
    %v3780 = vld [vmem:[#allocation2 + $0x4] sm:$0x2]
    %s3781 = scalar_lea.vmem %s9, 80
    %v3782 = vld [vmem:[%s3781] sm:$0xf]
    %v3783 = vld [vmem:[%s3781 + $0x4] sm:$0xf]
    %v3784 = vld [vmem:[%s3781 + $0x8] sm:$0xf]
    %v3785 = vld [vmem:[%s3781 + $0xc] sm:$0xf]
    %v3786 = vld [vmem:[%s3781 + $0x10] sm:$0xf]
    %v3787 = vld [vmem:[%s3781 + $0x14] sm:$0xf]
    %v3788 = vld [vmem:[%s3781 + $0x18] sm:$0xf]
    %v3789 = vld [vmem:[%s3781 + $0x1c] sm:$0xf]
    %v3790 = vld [vmem:[%s3781 + $0x20] sm:$0xf]
    %v3791 = vld [vmem:[%s3781 + $0x24] sm:$0xf]
    %v3794 = vunpack.c.l.b16 %v3779
    %v3795 = vunpack.c.l.b16 %v3780
    %v3796 = vpack.c.b16 %v3794, %v3794
    %v3797 = vpack.c.b16 %v3795, %v3795
    %v3798 = vunpack.c.l.b16 %v3796
    %v3799 = vunpack.c.l.b16 %v3797
    %v3800 = vrot.slane %v3798, 2
    %v3801 = vrot.slane %v3799, 1
    %v3802 = vsel %vm3627, %v3801, %v3800
    %v3803 = vpack.c.b16 %v3802, %v3802
    %v3814 = vunpack.c.l.b16 %v3782
    %v3815 = vunpack.c.l.b16 %v3783
    %v3816 = vunpack.c.l.b16 %v3784
    %v3817 = vunpack.c.l.b16 %v3785
    %v3818 = vunpack.c.l.b16 %v3786
    %v3819 = vunpack.c.l.b16 %v3787
    %v3820 = vunpack.c.l.b16 %v3788
    %v3821 = vunpack.c.l.b16 %v3789
    %v3822 = vunpack.c.l.b16 %v3790
    %v3823 = vunpack.c.l.b16 %v3791
    %v3824 = vpack.c.b16 %v3815, %v3814
    %v3825 = vpack.c.b16 %v3817, %v3816
    %v3826 = vpack.c.b16 %v3819, %v3818
    %v3827 = vpack.c.b16 %v3821, %v3820
    %v3828 = vpack.c.b16 %v3823, %v3822
    %v3835 = vsel %vm1044, %v3803, 0
    %3837 = vmatprep.subr.bf16.mxu0 0
    %3838 = vmatpush1.bf16.msra.mxu0 %v3824
    %3839 = vmatprep.subr.bf16.mxu0 0
    %3840 = vmatpush1.bf16.msra.mxu0 %v3825
    %3841 = vmatprep.subr.bf16.mxu0 0
    %3842 = vmatpush1.bf16.msra.mxu0 %v3826
    %3843 = vmatprep.subr.bf16.mxu0 0
    %3844 = vmatpush1.bf16.msra.mxu0 %v3827
    %3845 = vmatprep.subr.bf16.mxu0 0
    %3846 = vmatpush1.bf16.msra.mxu0 %v3828
    %3847 = vmatprep.subr.bf16.mxu0 0
    %3848 = vmatpush1.bf16.msra.mxu0 0
    %3849 = vmatprep.subr.bf16.mxu0 0
    %3850 = vmatpush1.bf16.msra.mxu0 0
    %3851 = vmatprep.subr.bf16.mxu0 0
    %3852 = vmatpush1.bf16.msra.mxu0 0
    %3853 = vmatprep.subr.bf16.mxu0 0
    %3854 = vmatpush1.bf16.msra.mxu0 0
    %3855 = vmatprep.subr.bf16.mxu0 0
    %3856 = vmatpush1.bf16.msra.mxu0 0
    %3857 = vmatprep.subr.bf16.mxu0 0
    %3858 = vmatpush1.bf16.msra.mxu0 0
    %3859 = vmatprep.subr.bf16.mxu0 0
    %3860 = vmatpush1.bf16.msra.mxu0 0
    %3861 = vmatprep.subr.bf16.mxu0 0
    %3862 = vmatpush1.bf16.msra.mxu0 0
    %3863 = vmatprep.subr.bf16.mxu0 0
    %3864 = vmatpush1.bf16.msra.mxu0 0
    %3865 = vmatprep.subr.bf16.mxu0 0
    %3866 = vmatpush1.bf16.msra.mxu0 0
    %3867 = vmatprep.subr.bf16.mxu0 0
    %3868 = vmatpush1.bf16.msra.mxu0 0
    %3869 = vmatprep.mubr.bf16.mxu0 0
    %3870 = vmatmul.mubr.bf16.gmra.mrb[0].mxu0 %v3835
    %v3871 = vpop.f32.mrb[0].mxu0
    %v3872 = vadd.f32 0.0, %v3871
    %v3873 = vpop.f32.mrb[0].mxu0
    %v3874 = vpop.f32.mrb[0].mxu0
    %v3875 = vpop.f32.mrb[0].mxu0
    %3876 = vdwg.mxu0
    %v3877 = vadd.f32 %v3774, %v3872
    %s3878 = scalar_lea.vmem %s9, 120
    %v3879 = vld [vmem:[%s3878] sm:$0xf]
    %v3880 = vld [vmem:[%s3878 + $0x4] sm:$0xf]
    %v3881 = vld [vmem:[%s3878 + $0x8] sm:$0xf]
    %v3882 = vld [vmem:[%s3878 + $0xc] sm:$0xf]
    %v3883 = vld [vmem:[%s3878 + $0x10] sm:$0xf]
    %v3884 = vld [vmem:[%s3878 + $0x14] sm:$0xf]
    %v3885 = vld [vmem:[%s3878 + $0x18] sm:$0xf]
    %v3886 = vld [vmem:[%s3878 + $0x1c] sm:$0xf]
    %v3887 = vld [vmem:[%s3878 + $0x20] sm:$0xf]
    %v3888 = vld [vmem:[%s3878 + $0x24] sm:$0xf]
    %v3889 = vrot.slane %v3798, 3
    %v3890 = vrot.slane %v3799, 2
    %v3891 = vsel %vm3627, %v3890, %v3889
    %v3892 = vpack.c.b16 %v3891, %v3891
    %v3903 = vunpack.c.l.b16 %v3879
    %v3904 = vunpack.c.l.b16 %v3880
    %v3905 = vunpack.c.l.b16 %v3881
    %v3906 = vunpack.c.l.b16 %v3882
    %v3907 = vunpack.c.l.b16 %v3883
    %v3908 = vunpack.c.l.b16 %v3884
    %v3909 = vunpack.c.l.b16 %v3885
    %v3910 = vunpack.c.l.b16 %v3886
    %v3911 = vunpack.c.l.b16 %v3887
    %v3912 = vunpack.c.l.b16 %v3888
    %v3913 = vpack.c.b16 %v3904, %v3903
    %v3914 = vpack.c.b16 %v3906, %v3905
    %v3915 = vpack.c.b16 %v3908, %v3907
    %v3916 = vpack.c.b16 %v3910, %v3909
    %v3917 = vpack.c.b16 %v3912, %v3911
    %v3924 = vsel %vm1044, %v3892, 0
    %3926 = vmatprep.subr.bf16.mxu0 0
    %3927 = vmatpush1.bf16.msra.mxu0 %v3913
    %3928 = vmatprep.subr.bf16.mxu0 0
    %3929 = vmatpush1.bf16.msra.mxu0 %v3914
    %3930 = vmatprep.subr.bf16.mxu0 0
    %3931 = vmatpush1.bf16.msra.mxu0 %v3915
    %3932 = vmatprep.subr.bf16.mxu0 0
    %3933 = vmatpush1.bf16.msra.mxu0 %v3916
    %3934 = vmatprep.subr.bf16.mxu0 0
    %3935 = vmatpush1.bf16.msra.mxu0 %v3917
    %3936 = vmatprep.subr.bf16.mxu0 0
    %3937 = vmatpush1.bf16.msra.mxu0 0
    %3938 = vmatprep.subr.bf16.mxu0 0
    %3939 = vmatpush1.bf16.msra.mxu0 0
    %3940 = vmatprep.subr.bf16.mxu0 0
    %3941 = vmatpush1.bf16.msra.mxu0 0
    %3942 = vmatprep.subr.bf16.mxu0 0
    %3943 = vmatpush1.bf16.msra.mxu0 0
    %3944 = vmatprep.subr.bf16.mxu0 0
    %3945 = vmatpush1.bf16.msra.mxu0 0
    %3946 = vmatprep.subr.bf16.mxu0 0
    %3947 = vmatpush1.bf16.msra.mxu0 0
    %3948 = vmatprep.subr.bf16.mxu0 0
    %3949 = vmatpush1.bf16.msra.mxu0 0
    %3950 = vmatprep.subr.bf16.mxu0 0
    %3951 = vmatpush1.bf16.msra.mxu0 0
    %3952 = vmatprep.subr.bf16.mxu0 0
    %3953 = vmatpush1.bf16.msra.mxu0 0
    %3954 = vmatprep.subr.bf16.mxu0 0
    %3955 = vmatpush1.bf16.msra.mxu0 0
    %3956 = vmatprep.subr.bf16.mxu0 0
    %3957 = vmatpush1.bf16.msra.mxu0 0
    %3958 = vmatprep.mubr.bf16.mxu0 0
    %3959 = vmatmul.mubr.bf16.gmra.mrb[0].mxu0 %v3924
    %v3960 = vpop.f32.mrb[0].mxu0
    %v3961 = vadd.f32 0.0, %v3960
    %v3962 = vpop.f32.mrb[0].mxu0
    %v3963 = vpop.f32.mrb[0].mxu0
    %v3964 = vpop.f32.mrb[0].mxu0
    %3965 = vdwg.mxu0
    %v3966 = vadd.f32 %v3877, %v3961
    %v3967 = vld [vmem:[#allocation2] sm:$0x4]
    %v3968 = vld [vmem:[#allocation2 + $0x4] sm:$0x4]
    %s3969 = scalar_lea.vmem %s9, 160
    %v3970 = vld [vmem:[%s3969] sm:$0xf]
    %v3971 = vld [vmem:[%s3969 + $0x4] sm:$0xf]
    %v3972 = vld [vmem:[%s3969 + $0x8] sm:$0xf]
    %v3973 = vld [vmem:[%s3969 + $0xc] sm:$0xf]
    %v3974 = vld [vmem:[%s3969 + $0x10] sm:$0xf]
    %v3975 = vld [vmem:[%s3969 + $0x14] sm:$0xf]
    %v3976 = vld [vmem:[%s3969 + $0x18] sm:$0xf]
    %v3977 = vld [vmem:[%s3969 + $0x1c] sm:$0xf]
    %v3978 = vld [vmem:[%s3969 + $0x20] sm:$0xf]
    %v3979 = vld [vmem:[%s3969 + $0x24] sm:$0xf]
    %v3982 = vunpack.c.l.b16 %v3967
    %v3983 = vunpack.c.l.b16 %v3968
    %v3984 = vpack.c.b16 %v3982, %v3982
    %v3985 = vpack.c.b16 %v3983, %v3983
    %v3986 = vunpack.c.l.b16 %v3984
    %v3987 = vunpack.c.l.b16 %v3985
    %v3988 = vrot.slane %v3986, 4
    %v3989 = vrot.slane %v3987, 3
    %v3990 = vsel %vm3627, %v3989, %v3988
    %v3991 = vpack.c.b16 %v3990, %v3990
    %v4002 = vunpack.c.l.b16 %v3970
    %v4003 = vunpack.c.l.b16 %v3971
    %v4004 = vunpack.c.l.b16 %v3972
    %v4005 = vunpack.c.l.b16 %v3973
    %v4006 = vunpack.c.l.b16 %v3974
    %v4007 = vunpack.c.l.b16 %v3975
    %v4008 = vunpack.c.l.b16 %v3976
    %v4009 = vunpack.c.l.b16 %v3977
    %v4010 = vunpack.c.l.b16 %v3978
    %v4011 = vunpack.c.l.b16 %v3979
    %v4012 = vpack.c.b16 %v4003, %v4002
    %v4013 = vpack.c.b16 %v4005, %v4004
    %v4014 = vpack.c.b16 %v4007, %v4006
    %v4015 = vpack.c.b16 %v4009, %v4008
    %v4016 = vpack.c.b16 %v4011, %v4010
    %v4023 = vsel %vm1044, %v3991, 0
    %4025 = vmatprep.subr.bf16.mxu0 0
    %4026 = vmatpush1.bf16.msra.mxu0 %v4012
    %4027 = vmatprep.subr.bf16.mxu0 0
    %4028 = vmatpush1.bf16.msra.mxu0 %v4013
    %4029 = vmatprep.subr.bf16.mxu0 0
    %4030 = vmatpush1.bf16.msra.mxu0 %v4014
    %4031 = vmatprep.subr.bf16.mxu0 0
    %4032 = vmatpush1.bf16.msra.mxu0 %v4015
    %4033 = vmatprep.subr.bf16.mxu0 0
    %4034 = vmatpush1.bf16.msra.mxu0 %v4016
    %4035 = vmatprep.subr.bf16.mxu0 0
    %4036 = vmatpush1.bf16.msra.mxu0 0
    %4037 = vmatprep.subr.bf16.mxu0 0
    %4038 = vmatpush1.bf16.msra.mxu0 0
    %4039 = vmatprep.subr.bf16.mxu0 0
    %4040 = vmatpush1.bf16.msra.mxu0 0
    %4041 = vmatprep.subr.bf16.mxu0 0
    %4042 = vmatpush1.bf16.msra.mxu0 0
    %4043 = vmatprep.subr.bf16.mxu0 0
    %4044 = vmatpush1.bf16.msra.mxu0 0
    %4045 = vmatprep.subr.bf16.mxu0 0
    %4046 = vmatpush1.bf16.msra.mxu0 0
    %4047 = vmatprep.subr.bf16.mxu0 0
    %4048 = vmatpush1.bf16.msra.mxu0 0
    %4049 = vmatprep.subr.bf16.mxu0 0
    %4050 = vmatpush1.bf16.msra.mxu0 0
    %4051 = vmatprep.subr.bf16.mxu0 0
    %4052 = vmatpush1.bf16.msra.mxu0 0
    %4053 = vmatprep.subr.bf16.mxu0 0
    %4054 = vmatpush1.bf16.msra.mxu0 0
    %4055 = vmatprep.subr.bf16.mxu0 0
    %4056 = vmatpush1.bf16.msra.mxu0 0
    %4057 = vmatprep.mubr.bf16.mxu0 0
    %4058 = vmatmul.mubr.bf16.gmra.mrb[0].mxu0 %v4023
    %v4059 = vpop.f32.mrb[0].mxu0
    %v4060 = vadd.f32 0.0, %v4059
    %v4061 = vpop.f32.mrb[0].mxu0
    %v4062 = vpop.f32.mrb[0].mxu0
    %v4063 = vpop.f32.mrb[0].mxu0
    %4064 = vdwg.mxu0
    %v4065 = vadd.f32 %v3966, %v4060
    %v4066 = vld [vmem:[%s10] sm:$0x1]
    %v4068 = vlaneseq
    %v4069 = vshrl.u32 %v4068, 7
    %v4070 = vsub.s32 0, %v4069
    %v4071 = vrot.slane %v4066, %v4070
    %v4073 = vadd.f32 %v4065, %v4071
    %v4074 = vmax.f32 %v4073, 0.0
    %v4075 = vpack.c.bf16 %v4074, %v4074
    %v4076 = vld [vmem:[%s11] sm:$0xf]
    %v4077 = vld [vmem:[%s11 + $0x4] sm:$0xf]
    %v4078 = vld [vmem:[%s11 + $0x8] sm:$0xf]
    %v4079 = vld [vmem:[%s11 + $0xc] sm:$0xf]
    %v4080 = vld [vmem:[%s11 + $0x10] sm:$0xf]
    %v4081 = vld [vmem:[%s11 + $0x14] sm:$0xf]
    %v4082 = vld [vmem:[%s11 + $0x18] sm:$0xf]
    %v4083 = vld [vmem:[%s11 + $0x1c] sm:$0xf]
    %v4084 = vld [vmem:[%s11 + $0x20] sm:$0xf]
    %v4085 = vld [vmem:[%s11 + $0x24] sm:$0xf]
    %v4086 = vld [vmem:[%s11 + $0x28] sm:$0xf]
    %v4087 = vld [vmem:[%s11 + $0x2c] sm:$0xf]
    %v4088 = vld [vmem:[%s11 + $0x30] sm:$0xf]
    %v4089 = vld [vmem:[%s11 + $0x34] sm:$0xf]
    %v4090 = vld [vmem:[%s11 + $0x38] sm:$0xf]
    %v4091 = vld [vmem:[%s12] sm:$0x1]
    %v4093 = vlaneseq
    %v4094 = vshrl.u32 %v4093, 7
    %v4095 = vsub.s32 0, %v4094
    %v4096 = vrot.slane %v4091, %v4095
    %v4113 = vunpack.c.l.b16 %v4076
    %v4114 = vunpack.c.l.b16 %v4077
    %v4115 = vunpack.c.l.b16 %v4078
    %v4116 = vunpack.c.l.b16 %v4079
    %v4117 = vunpack.c.l.b16 %v4080
    %v4118 = vunpack.c.l.b16 %v4081
    %v4119 = vunpack.c.l.b16 %v4082
    %v4120 = vunpack.c.l.b16 %v4083
    %v4121 = vunpack.c.l.b16 %v4084
    %v4122 = vunpack.c.l.b16 %v4085
    %v4123 = vunpack.c.l.b16 %v4086
    %v4124 = vunpack.c.l.b16 %v4087
    %v4125 = vunpack.c.l.b16 %v4088
    %v4126 = vunpack.c.l.b16 %v4089
    %v4127 = vunpack.c.l.b16 %v4090
    %v4128 = vpack.c.b16 %v4114, %v4113
    %v4129 = vpack.c.b16 %v4116, %v4115
    %v4130 = vpack.c.b16 %v4118, %v4117
    %v4131 = vpack.c.b16 %v4120, %v4119
    %v4132 = vpack.c.b16 %v4122, %v4121
    %v4133 = vpack.c.b16 %v4124, %v4123
    %v4134 = vpack.c.b16 %v4126, %v4125
    %v4135 = vpack.c.b16 %v4127, %v4127
    %vm4143 = vcmask 982016
    %v4145 = vsel %vm4143, %v4075, 0
    %v4148 = vsel %vm836, %v4135, 0
    %4150 = vmatprep.subr.bf16.mxu0 0
    %4151 = vmatpush1.bf16.msra.mxu0 %v4128
    %4152 = vmatprep.subr.bf16.mxu0 0
    %4153 = vmatpush1.bf16.msra.mxu0 %v4129
    %4154 = vmatprep.subr.bf16.mxu0 0
    %4155 = vmatpush1.bf16.msra.mxu0 %v4130
    %4156 = vmatprep.subr.bf16.mxu0 0
    %4157 = vmatpush1.bf16.msra.mxu0 %v4131
    %4158 = vmatprep.subr.bf16.mxu0 0
    %4159 = vmatpush1.bf16.msra.mxu0 %v4132
    %4160 = vmatprep.subr.bf16.mxu0 0
    %4161 = vmatpush1.bf16.msra.mxu0 %v4133
    %4162 = vmatprep.subr.bf16.mxu0 0
    %4163 = vmatpush1.bf16.msra.mxu0 %v4134
    %4164 = vmatprep.subr.bf16.mxu0 0
    %4165 = vmatpush1.bf16.msra.mxu0 %v4148
    %4166 = vmatprep.subr.bf16.mxu0 0
    %4167 = vmatpush1.bf16.msra.mxu0 0
    %4168 = vmatprep.subr.bf16.mxu0 0
    %4169 = vmatpush1.bf16.msra.mxu0 0
    %4170 = vmatprep.subr.bf16.mxu0 0
    %4171 = vmatpush1.bf16.msra.mxu0 0
    %4172 = vmatprep.subr.bf16.mxu0 0
    %4173 = vmatpush1.bf16.msra.mxu0 0
    %4174 = vmatprep.subr.bf16.mxu0 0
    %4175 = vmatpush1.bf16.msra.mxu0 0
    %4176 = vmatprep.subr.bf16.mxu0 0
    %4177 = vmatpush1.bf16.msra.mxu0 0
    %4178 = vmatprep.subr.bf16.mxu0 0
    %4179 = vmatpush1.bf16.msra.mxu0 0
    %4180 = vmatprep.subr.bf16.mxu0 0
    %4181 = vmatpush1.bf16.msra.mxu0 0
    %4182 = vmatprep.mubr.bf16.mxu0 0
    %4183 = vmatmul.mubr.bf16.gmra.mrb[0].mxu0 %v4145
    %v4184 = vpop.f32.mrb[0].mxu0
    %v4185 = vadd.f32 %v4096, %v4184
    %v4186 = vpop.f32.mrb[0].mxu0
    %v4187 = vpop.f32.mrb[0].mxu0
    %v4188 = vpop.f32.mrb[0].mxu0
    %4189 = vdwg.mxu0
    %v4190 = vmax.f32 %v4185, 0.0
    %v4191 = vpack.c.bf16 %v4190, %v4190
    %v4192 = vld [vmem:[%s13] sm:$0xf]
    %v4193 = vld [vmem:[%s13 + $0x4] sm:$0xf]
    %v4194 = vld [vmem:[%s13 + $0x8] sm:$0xf]
    %v4195 = vld [vmem:[%s13 + $0xc] sm:$0xf]
    %v4196 = vld [vmem:[%s13 + $0x10] sm:$0xf]
    %v4197 = vld [vmem:[%s13 + $0x14] sm:$0xf]
    %v4198 = vld [vmem:[%s13 + $0x18] sm:$0xf]
    %v4199 = vld [vmem:[%s13 + $0x1c] sm:$0xf]
    %v4200 = vld [vmem:[%s13 + $0x20] sm:$0xf]
    %v4201 = vld [vmem:[%s13 + $0x24] sm:$0xf]
    %v4202 = vld [vmem:[%s13 + $0x28] sm:$0x3]
    %v4203 = vld [vmem:[%s14] sm:$0x1]
    %v4205 = vlaneseq
    %v4206 = vshrl.u32 %v4205, 7
    %v4207 = vsub.s32 0, %v4206
    %v4208 = vrot.slane %v4203, %v4207
    %v4221 = vunpack.c.l.b16 %v4192
    %v4222 = vunpack.c.l.b16 %v4193
    %v4223 = vunpack.c.l.b16 %v4194
    %v4224 = vunpack.c.l.b16 %v4195
    %v4225 = vunpack.c.l.b16 %v4196
    %v4226 = vunpack.c.l.b16 %v4197
    %v4227 = vunpack.c.l.b16 %v4198
    %v4228 = vunpack.c.l.b16 %v4199
    %v4229 = vunpack.c.l.b16 %v4200
    %v4230 = vunpack.c.l.b16 %v4201
    %v4231 = vunpack.c.l.b16 %v4202
    %v4232 = vpack.c.b16 %v4222, %v4221
    %v4233 = vpack.c.b16 %v4224, %v4223
    %v4234 = vpack.c.b16 %v4226, %v4225
    %v4235 = vpack.c.b16 %v4228, %v4227
    %v4236 = vpack.c.b16 %v4230, %v4229
    %v4237 = vpack.c.b16 %v4231, %v4231
    %v4244 = vsel %vm1034, %v4191, 0
    %v4247 = vsel %vm1381, %v4237, 0
    %4249 = vmatprep.subr.bf16.mxu0 0
    %4250 = vmatpush1.bf16.msra.mxu0 %v4232
    %4251 = vmatprep.subr.bf16.mxu0 0
    %4252 = vmatpush1.bf16.msra.mxu0 %v4233
    %4253 = vmatprep.subr.bf16.mxu0 0
    %4254 = vmatpush1.bf16.msra.mxu0 %v4234
    %4255 = vmatprep.subr.bf16.mxu0 0
    %4256 = vmatpush1.bf16.msra.mxu0 %v4235
    %4257 = vmatprep.subr.bf16.mxu0 0
    %4258 = vmatpush1.bf16.msra.mxu0 %v4236
    %4259 = vmatprep.subr.bf16.mxu0 0
    %4260 = vmatpush1.bf16.msra.mxu0 %v4247
    %4261 = vmatprep.subr.bf16.mxu0 0
    %4262 = vmatpush1.bf16.msra.mxu0 0
    %4263 = vmatprep.subr.bf16.mxu0 0
    %4264 = vmatpush1.bf16.msra.mxu0 0
    %4265 = vmatprep.subr.bf16.mxu0 0
    %4266 = vmatpush1.bf16.msra.mxu0 0
    %4267 = vmatprep.subr.bf16.mxu0 0
    %4268 = vmatpush1.bf16.msra.mxu0 0
    %4269 = vmatprep.subr.bf16.mxu0 0
    %4270 = vmatpush1.bf16.msra.mxu0 0
    %4271 = vmatprep.subr.bf16.mxu0 0
    %4272 = vmatpush1.bf16.msra.mxu0 0
    %4273 = vmatprep.subr.bf16.mxu0 0
    %4274 = vmatpush1.bf16.msra.mxu0 0
    %4275 = vmatprep.subr.bf16.mxu0 0
    %4276 = vmatpush1.bf16.msra.mxu0 0
    %4277 = vmatprep.subr.bf16.mxu0 0
    %4278 = vmatpush1.bf16.msra.mxu0 0
    %4279 = vmatprep.subr.bf16.mxu0 0
    %4280 = vmatpush1.bf16.msra.mxu0 0
    %4281 = vmatprep.mubr.bf16.mxu0 0
    %4282 = vmatmul.mubr.bf16.gmra.mrb[0].mxu0 %v4244
    %v4283 = vpop.f32.mrb[0].mxu0
    %v4284 = vadd.f32 %v4208, %v4283
    %v4285 = vpop.f32.mrb[0].mxu0
    %v4286 = vpop.f32.mrb[0].mxu0
    %v4287 = vpop.f32.mrb[0].mxu0
    %4288 = vdwg.mxu0
    %4289 = vst [vmem:[#allocation3] sm:$0x3] %v4284
    // Predicated region
    $region62: #{net_forward.1} parent=1 // pred_check
      _
    $region63: #{net_forward.1} parent=1 // pred_check_branch
      %4291 = sbr.rel (0) target = $region65
    $region64: #{net_forward.1} parent=1 // pred_region
      %s4293 = ssub.s32 32, 32
      %4294 = vsyncadd [#allocation4], %s4293
      %s4296 = sshll.u32 [#allocation3], 4
      %s4297 = int_to_ptr.vmem [resolvable:$true] %s4296
      %4299 = dma.vmem_to_hbm [thread:$0]  %s4297, 32, %s15, [#allocation4]
    $region65: #{net_forward.1} parent=1 // pred_fallthru
      _
    // Predicated region
    $region66: #{net_forward.1} parent=1 // pred_check
      _
    $region67: #{net_forward.1} parent=1 // pred_check_branch
      %4301 = sbr.rel (0) target = $region69
    $region68: #{net_forward.1} parent=1 // pred_region
      %4302 = dma.done [#allocation4], 32
    $region69: #{net_forward.1} parent=1 // pred_fallthru
      _
    %4303 = vsyncpa [#allocation4], 1

</llo_original>
